<compile_context>
chip_gen: v6e
topology: v6e:2x2x1
jax: 0.10.0
libtpu: 0.0.40
codegen_flags: <defaults>
</compile_context>

<pallas_src>
import functools

import jax
import jax.numpy as jnp
from jax import lax
from jax.experimental import pallas as pl
from jax.experimental.pallas import tpu as pltpu


# ------------------------------- main kernel ----------------------------------
def multire_kernel(seg_ref,        # [B, 4]  int32  (en_s, en_e, zh_s, zh_e) concat coords
                   emb_ref,        # [NumRe, D] f32 relation embedding rows
                   inp_ref,        # [T, D]  f32    concat(inp_en, inp_zh)
                   rvec_ref,       # [B, NumRe, D] f32
                   w_ref,          # [D, dimR] f32
                   b_ref,          # [1, dimR] f32
                   sel_ref,        # [B, NumRe, 1] int32
                   out_ref):       # [B, NumRe] f32
    B = seg_ref.shape[0]
    NumRe, D = emb_ref.shape
    T = inp_ref.shape[0]
    dimR = w_ref.shape[1]

    inp_bf = inp_ref[...].astype(jnp.bfloat16)          # reused by both MXU dots
    emb_bf = emb_ref[...].astype(jnp.bfloat16)

    # fused relation scores (MXU):  attn[r, t] = emb[r] . inp[t]
    attn = lax.dot_general(emb_bf, inp_bf,
                           dimension_numbers=(((1,), (1,)), ((), ())),
                           preferred_element_type=jnp.float32)      # (NumRe, T)

    # per-instance segment mask over the concatenated (en ++ zh) token axis
    seg = seg_ref[...]
    t = lax.broadcasted_iota(jnp.int32, (B, T), 1)
    m = (((t >= seg[:, 0:1]) & (t < seg[:, 1:2])) |
         ((t >= seg[:, 2:3]) & (t < seg[:, 3:4])))                   # (B, T)

    neg = jnp.float32(-1e30)
    s = jnp.where(m[:, None, :], attn[None, :, :], neg)              # (B, NumRe, T)
    s = s.reshape(B * NumRe, T)

    # masked softmax over the concatenated segment (f32 math)
    mmax = jnp.max(s, axis=-1, keepdims=True)                        # (B*NumRe, 1)
    p = jnp.exp(s - mmax)                       # masked lanes underflow to exactly 0
    denom = jnp.sum(p, axis=-1, keepdims=True)
    # guard: a fully-empty instance has mmax == -1e30; zero its attention output
    # instead of silently averaging every token (undefined in the torch module).
    inv_denom = jnp.where(
        mmax > jnp.float32(-1e29),
        pl.reciprocal(jnp.maximum(denom, jnp.float32(1e-30)), approx=True),
        jnp.float32(0.0))                                            # (B*NumRe, 1)

    # S = softmax(scores) @ concat(inp_en_seg, inp_zh_seg)   (bf16 MXU, f32 acc)
    S = jnp.dot(p.astype(jnp.bfloat16), inp_bf,
                preferred_element_type=jnp.float32)                  # (B*NumRe, D)
    S = S * inv_denom

    rvec = rvec_ref[...].reshape(B * NumRe, D)

    # logits = M(S) + sum(R_vec * S, -1, keepdims)            (bf16 MXU, f32 acc)
    logits = (jnp.dot(S.astype(jnp.bfloat16), w_ref[...].astype(jnp.bfloat16),
                      preferred_element_type=jnp.float32)
              + b_ref[...]
              + jnp.sum(rvec * S, axis=-1, keepdims=True))           # (B*NumRe, dimR)

    # log_softmax over the class axis (f32)
    lmax = jnp.max(logits, axis=-1, keepdims=True)
    lse = jnp.log(jnp.sum(jnp.exp(logits - lmax), axis=-1, keepdims=True))
    logp = (logits - lmax - lse).reshape(B, NumRe, dimR)

    # p_n[re_mask]: pick class sel[b, r] per (instance, relation)
    k = lax.broadcasted_iota(jnp.int32, (B, NumRe, dimR), 2)
    picked = jnp.where(k == sel_ref[...], logp, jnp.float32(0.0))
    out_ref[...] = jnp.sum(picked, axis=-1)                          # (B, NumRe)


# ------------------------------- wrappers --------------------------------------
def _vmem_limit_bytes():
    """Per-generation scoped-VMEM limit (leave headroom on 64 MiB v7x parts)."""
    try:
        kind = jax.devices()[0].device_kind.lower()
    except Exception:
        return None
    if "v7" in kind:
        return 48 * 1024 * 1024
    if "v5" in kind or "v6" in kind:
        return 96 * 1024 * 1024
    return None


def multire_blocks(seg, emb_rows, inp_cat, R_vec, W, b2, sel_idx, *,
                   block_b, single_buffer_invariants):
    NumIn, NumRe, D = R_vec.shape
    T = inp_cat.shape[0]
    dimR = W.shape[1]
    B = block_b
    assert NumIn % B == 0 and B % 8 == 0

    def inv_spec(shape):
        # grid-invariant operand: constant index_map; optionally single-buffered.
        imap = lambda i: (0,) * len(shape)
        if single_buffer_invariants:
            return pl.BlockSpec(shape, imap, pipeline_mode=pl.Buffered(1))
        return pl.BlockSpec(shape, imap)

    return pl.pallas_call(
        multire_kernel,
        out_shape=jax.ShapeDtypeStruct((NumIn, NumRe), jnp.float32),
        grid=(NumIn // B,),
        in_specs=[
            pl.BlockSpec((B, 4), lambda i: (i, 0)),          # segment bounds
            inv_spec((NumRe, D)),                            # relation emb rows
            inv_spec((T, D)),                                # concat tokens
            pl.BlockSpec((B, NumRe, D), lambda i: (i, 0, 0)),  # R_vec
            inv_spec((D, dimR)),                             # M.weight.T
            inv_spec((1, dimR)),                             # M.bias
            pl.BlockSpec((B, NumRe, 1), lambda i: (i, 0, 0)),  # selected class ids
        ],
        out_specs=pl.BlockSpec((B, NumRe), lambda i: (i, 0)),
        compiler_params=pltpu.CompilerParams(
            dimension_semantics=("parallel",),
            vmem_limit_bytes=_vmem_limit_bytes()),
    )(seg, emb_rows, inp_cat, R_vec, W, b2, sel_idx)


@functools.partial(jax.jit, static_argnames=("block_b", "single_buffer_invariants"))
def multire_apply(emb_rows, inp_en, inp_zh, seg, R_vec, W, b, sel_idx, *,
                  block_b, single_buffer_invariants):
    inp_cat = jnp.concatenate([inp_en, inp_zh], axis=0)      # layout plumbing only
    return multire_blocks(seg, emb_rows, inp_cat, R_vec, W, b.reshape(1, -1),
                          sel_idx, block_b=block_b,
                          single_buffer_invariants=single_buffer_invariants)


# ----------------------------- pure-JAX reference ------------------------------
def reference(inp_en, rel_en, l_en, inp_zh, rel_zh, l_zh, W, b, mask_onehot):
    attn_en = jnp.sum(rel_en * inp_en[None], -1)
    attn_zh = jnp.sum(rel_zh * inp_zh[None], -1)
    S_list, R_list = [], []
    Le = Lz = 0
    for i in range(len(l_en)):
        Re_, Rz = Le + int(l_en[i]), Lz + int(l_zh[i])
        if Re_ > Le and Rz > Lz:
            att = jax.nn.softmax(
                jnp.concatenate([attn_en[:, Le:Re_], attn_zh[:, Lz:Rz]], 1), 1)
            S_i = att @ jnp.concatenate([inp_en[Le:Re_], inp_zh[Lz:Rz]], 0)
            R_i = rel_en[:, Le, :]
        elif Re_ > Le:
            att = jax.nn.softmax(attn_en[:, Le:Re_], 1)
            S_i = att @ inp_en[Le:Re_]
            R_i = rel_en[:, Le, :]
        else:
            att = jax.nn.softmax(attn_zh[:, Lz:Rz], 1)
            S_i = att @ inp_zh[Lz:Rz]
            R_i = rel_zh[:, Lz, :]
        S_list.append(S_i)
        R_list.append(R_i)
        Le, Lz = Re_, Rz
    S = jnp.stack(S_list)
    Rv = jnp.stack(R_list)
    logits = S @ W + b + jnp.sum(Rv * S, -1, keepdims=True)
    logp = jax.nn.log_softmax(logits, -1)
    return jnp.sum(logp * mask_onehot, -1)


# ----------------------------------- main ---------------------------------------
if __name__ == "__main__":
    dimR = 8               # number of relation classes
    Encodered_dim = 32     # hidden dim D
    NumRe = dimR           # relations scored per instance
    NumIn = 64             # instances
    BLOCK_B = 16           # B*NumRe = 128 rows into the attention matmul; grid = 4

    # per-instance token counts (covers mixed / en-only / zh-only; never both 0)
    l_en = [i % 5 for i in range(NumIn)]
    l_zh = [(i * 3 + 2) % 4 for i in range(NumIn)]
    l_zh = [1 if (a == 0 and z == 0) else z for a, z in zip(l_en, l_zh)]
    T_en, T_zh = sum(l_en), sum(l_zh)

    key = jax.random.PRNGKey(0)
    k_emb, k_en, k_zh, k_w, k_b = jax.random.split(key, 5)

    # parameters (deterministic init)
    emb_table = jax.random.normal(k_emb, (dimR, Encodered_dim), jnp.float32) * 0.1
    W = jax.random.normal(k_w, (Encodered_dim, dimR), jnp.float32) * 0.1  # M.weight.T
    b = jax.random.normal(k_b, (dimR,), jnp.float32) * 0.1                # M.bias

    # inputs
    inp_en = jax.random.normal(k_en, (T_en, Encodered_dim), jnp.float32)
    inp_zh = jax.random.normal(k_zh, (T_zh, Encodered_dim), jnp.float32)
    r_en = jnp.tile(jnp.arange(NumRe, dtype=jnp.int32)[:, None], (1, T_en))
    r_zh = jnp.tile(jnp.arange(NumRe, dtype=jnp.int32)[:, None], (1, T_zh))

    # embedding lookups (JAX glue; reference + R_vec only)
    relation_en = emb_table[r_en]          # [NumRe, T_en, D]
    relation_zh = emb_table[r_zh]          # [NumRe, T_zh, D]
    # relation indices are constant along T, so the kernel only needs the rows.
    emb_rows = emb_table[r_en[:, 0]]       # [NumRe, D]

    # per-instance segment bounds [start, end) in concat (en ++ zh) coordinates
    l_en_arr = jnp.array(l_en, jnp.int32)
    l_zh_arr = jnp.array(l_zh, jnp.int32)
    off_en = jnp.concatenate([jnp.zeros((1,), jnp.int32), jnp.cumsum(l_en_arr)])
    off_zh = jnp.concatenate([jnp.zeros((1,), jnp.int32), jnp.cumsum(l_zh_arr)])
    seg = jnp.stack([off_en[:-1], off_en[1:],
                     T_en + off_zh[:-1], T_en + off_zh[1:]], axis=1).astype(jnp.int32)

    # R_vec[i] = relation_en[:, L_en, :] if l_en[i] > 0 else relation_zh[:, L_zh, :]
    idx_en = jnp.minimum(off_en[:-1], T_en - 1)
    idx_zh = jnp.minimum(off_zh[:-1], T_zh - 1)
    rvec_en = jnp.transpose(relation_en[:, idx_en, :], (1, 0, 2))   # [NumIn, NumRe, D]
    rvec_zh = jnp.transpose(relation_zh[:, idx_zh, :], (1, 0, 2))
    R_vec = jnp.where((l_en_arr > 0)[:, None, None], rvec_en, rvec_zh)

    # re_mask: exactly one selected class per (instance, relation)
    sel_mat = (jnp.arange(NumIn)[:, None] + jnp.arange(NumRe)[None, :]) % dimR
    sel_idx = sel_mat.astype(jnp.int32)[:, :, None]                  # [NumIn, NumRe, 1]
    mask_onehot = jax.nn.one_hot(sel_mat, dimR, dtype=jnp.float32)   # reference only

    try:
        out = jax.block_until_ready(
            multire_apply(emb_rows, inp_en, inp_zh, seg, R_vec, W, b, sel_idx,
                          block_b=BLOCK_B, single_buffer_invariants=True))
    except Exception:
        # pipeline_mode=pl.Buffered(1) unsupported on this build; plain double-buffer.
        out = jax.block_until_ready(
            multire_apply(emb_rows, inp_en, inp_zh, seg, R_vec, W, b, sel_idx,
                          block_b=BLOCK_B, single_buffer_invariants=False))

    ref = reference(inp_en, relation_en, l_en, inp_zh, relation_zh, l_zh,
                    W, b, mask_onehot)
    assert out.shape == (NumIn, NumRe)
    # bf16 MXU operands (per perf review) leave ~1e-2-level error on the log-probs.
    assert jnp.allclose(out, ref, atol=5e-2, rtol=5e-2), \
        float(jnp.max(jnp.abs(out - ref)))

    print("KERNEL_OK")
</pallas_src>

<mosaic_0001>
module attributes {stable_mosaic.version = 11 : i64} {
  func.func @multire_kernel(%arg0: i32, %arg1: memref<16x4xi32, #tpu.memory_space<vmem>>, %arg2: memref<8x32xf32, #tpu.memory_space<vmem>>, %arg3: memref<225x32xf32, #tpu.memory_space<vmem>>, %arg4: memref<16x8x32xf32, #tpu.memory_space<vmem>>, %arg5: memref<32x8xf32, #tpu.memory_space<vmem>>, %arg6: memref<1x8xf32, #tpu.memory_space<vmem>>, %arg7: memref<16x8x1xi32, #tpu.memory_space<vmem>>, %arg8: memref<16x8xf32, #tpu.memory_space<vmem>>) attributes {dimension_semantics = [#tpu.dimension_semantics<parallel>], iteration_bounds = array<i64: 4>, scalar_prefetch = 0 : i64, scratch_operands = 0 : i64, tpu.core_type = #tpu.core_type<tc>, window_params = [{transform_indices = @transform_0, window_bounds = array<i64: 16, 4>}, {pipeline_mode = #tpu.pipeline_mode<synchronous>, transform_indices = @transform_1, window_bounds = array<i64: 8, 32>}, {pipeline_mode = #tpu.pipeline_mode<synchronous>, transform_indices = @transform_2, window_bounds = array<i64: 225, 32>}, {transform_indices = @transform_3, window_bounds = array<i64: 16, 8, 32>}, {pipeline_mode = #tpu.pipeline_mode<synchronous>, transform_indices = @transform_4, window_bounds = array<i64: 32, 8>}, {pipeline_mode = #tpu.pipeline_mode<synchronous>, transform_indices = @transform_5, window_bounds = array<i64: 1, 8>}, {transform_indices = @transform_6, window_bounds = array<i64: 16, 8, 1>}, {transform_indices = @transform_7, window_bounds = array<i64: 16, 8>}]} {
    %c0 = arith.constant 0 : index
    %c0_0 = arith.constant 0 : index
    %0 = vector.load %arg3[%c0, %c0_0] : memref<225x32xf32, #tpu.memory_space<vmem>>, vector<225x32xf32>
    %1 = arith.truncf %0 : vector<225x32xf32> to vector<225x32xbf16>
    %c0_1 = arith.constant 0 : index
    %c0_2 = arith.constant 0 : index
    %2 = vector.load %arg2[%c0_1, %c0_2] : memref<8x32xf32, #tpu.memory_space<vmem>>, vector<8x32xf32>
    %3 = arith.truncf %2 : vector<8x32xf32> to vector<8x32xbf16>
    %cst = arith.constant dense<0.000000e+00> : vector<8x225xf32>
    %4 = tpu.matmul %3, %1, %cst {dimension_numbers = #tpu.dot_dimension_numbers<[1], [1], [0], [0], [0, 0, 1, 0], [], []>} : vector<8x32xbf16>, vector<225x32xbf16>, vector<8x225xf32> -> vector<8x225xf32>
    %c0_3 = arith.constant 0 : index
    %c0_4 = arith.constant 0 : index
    %5 = vector.load %arg1[%c0_3, %c0_4] : memref<16x4xi32, #tpu.memory_space<vmem>>, vector<16x4xi32>
    %6 = tpu.iota {dimensions = array<i32: 1>} : vector<16x225xi32>
    %7 = vector.extract_strided_slice %5 {offsets = [0, 0], sizes = [16, 1], strides = [1, 1]} : vector<16x4xi32> to vector<16x1xi32>
    %8 = vector.broadcast %7 : vector<16x1xi32> to vector<16x225xi32>
    %9 = arith.cmpi sge, %6, %8 : vector<16x225xi32>
    %10 = vector.extract_strided_slice %5 {offsets = [0, 1], sizes = [16, 1], strides = [1, 1]} : vector<16x4xi32> to vector<16x1xi32>
    %11 = vector.broadcast %10 : vector<16x1xi32> to vector<16x225xi32>
    %12 = arith.cmpi slt, %6, %11 : vector<16x225xi32>
    %13 = arith.andi %9, %12 : vector<16x225xi1>
    %14 = vector.extract_strided_slice %5 {offsets = [0, 2], sizes = [16, 1], strides = [1, 1]} : vector<16x4xi32> to vector<16x1xi32>
    %15 = vector.broadcast %14 : vector<16x1xi32> to vector<16x225xi32>
    %16 = arith.cmpi sge, %6, %15 : vector<16x225xi32>
    %17 = vector.extract_strided_slice %5 {offsets = [0, 3], sizes = [16, 1], strides = [1, 1]} : vector<16x4xi32> to vector<16x1xi32>
    %18 = vector.broadcast %17 : vector<16x1xi32> to vector<16x225xi32>
    %19 = arith.cmpi slt, %6, %18 : vector<16x225xi32>
    %20 = arith.andi %16, %19 : vector<16x225xi1>
    %21 = arith.ori %13, %20 : vector<16x225xi1>
    %22 = vector.shape_cast %21 : vector<16x225xi1> to vector<16x1x225xi1>
    %23 = vector.shape_cast %4 : vector<8x225xf32> to vector<1x8x225xf32>
    %cst_5 = arith.constant -1.000000e+30 : f32
    %24 = vector.shape_cast %22 : vector<16x1x225xi1> to vector<16x1x225xi1>
    %25 = vector.broadcast %24 : vector<16x1x225xi1> to vector<16x8x225xi1>
    %26 = vector.shape_cast %23 : vector<1x8x225xf32> to vector<1x8x225xf32>
    %27 = vector.broadcast %26 : vector<1x8x225xf32> to vector<16x8x225xf32>
    %28 = vector.broadcast %cst_5 : f32 to vector<16x8x225xf32>
    %29 = arith.select %25, %27, %28 : vector<16x8x225xi1>, vector<16x8x225xf32>
    %30 = vector.shape_cast %29 : vector<16x8x225xf32> to vector<128x225xf32>
    %cst_6 = arith.constant dense<0xFF800000> : vector<128xf32>
    %31 = vector.multi_reduction <maximumf>, %30, %cst_6 [1] : vector<128x225xf32> to vector<128xf32>
    %32 = vector.shape_cast %31 : vector<128xf32> to vector<128x1xf32>
    %33 = vector.broadcast %32 : vector<128x1xf32> to vector<128x225xf32>
    %34 = arith.subf %30, %33 : vector<128x225xf32>
    %35 = math.exp %34 : vector<128x225xf32>
    %cst_7 = arith.constant dense<0.000000e+00> : vector<128xf32>
    %36 = vector.multi_reduction <add>, %35, %cst_7 [1] : vector<128x225xf32> to vector<128xf32>
    %37 = vector.shape_cast %36 : vector<128xf32> to vector<128x1xf32>
    %cst_8 = arith.constant -1.000000e+29 : f32
    %38 = vector.broadcast %cst_8 : f32 to vector<128x1xf32>
    %39 = arith.cmpf ogt, %32, %38 : vector<128x1xf32>
    %cst_9 = arith.constant 1.000000e-30 : f32
    %40 = vector.broadcast %cst_9 : f32 to vector<128x1xf32>
    %41 = arith.maximumf %37, %40 : vector<128x1xf32>
    %42 = tpu.reciprocal %41 {approx = true} : vector<128x1xf32> -> vector<128x1xf32>
    %cst_10 = arith.constant 0.000000e+00 : f32
    %43 = vector.broadcast %cst_10 : f32 to vector<128x1xf32>
    %44 = arith.select %39, %42, %43 : vector<128x1xi1>, vector<128x1xf32>
    %45 = arith.truncf %35 : vector<128x225xf32> to vector<128x225xbf16>
    %cst_11 = arith.constant dense<0.000000e+00> : vector<128x32xf32>
    %46 = tpu.matmul %45, %1, %cst_11 {dimension_numbers = #tpu.dot_dimension_numbers<[1], [0], [0], [1], [0, 0, 1, 1], [], []>} : vector<128x225xbf16>, vector<225x32xbf16>, vector<128x32xf32> -> vector<128x32xf32>
    %47 = vector.broadcast %44 : vector<128x1xf32> to vector<128x32xf32>
    %48 = arith.mulf %46, %47 : vector<128x32xf32>
    %c0_12 = arith.constant 0 : index
    %c0_13 = arith.constant 0 : index
    %c0_14 = arith.constant 0 : index
    %49 = vector.load %arg4[%c0_12, %c0_13, %c0_14] : memref<16x8x32xf32, #tpu.memory_space<vmem>>, vector<16x8x32xf32>
    %50 = vector.shape_cast %49 : vector<16x8x32xf32> to vector<128x32xf32>
    %51 = arith.truncf %48 : vector<128x32xf32> to vector<128x32xbf16>
    %c0_15 = arith.constant 0 : index
    %c0_16 = arith.constant 0 : index
    %52 = vector.load %arg5[%c0_15, %c0_16] : memref<32x8xf32, #tpu.memory_space<vmem>>, vector<32x8xf32>
    %53 = arith.truncf %52 : vector<32x8xf32> to vector<32x8xbf16>
    %cst_17 = arith.constant dense<0.000000e+00> : vector<128x8xf32>
    %54 = tpu.matmul %51, %53, %cst_17 {dimension_numbers = #tpu.dot_dimension_numbers<[1], [0], [0], [1], [0, 0, 1, 1], [], []>} : vector<128x32xbf16>, vector<32x8xbf16>, vector<128x8xf32> -> vector<128x8xf32>
    %c0_18 = arith.constant 0 : index
    %c0_19 = arith.constant 0 : index
    %55 = vector.load %arg6[%c0_18, %c0_19] : memref<1x8xf32, #tpu.memory_space<vmem>>, vector<1x8xf32>
    %56 = vector.broadcast %55 : vector<1x8xf32> to vector<128x8xf32>
    %57 = arith.addf %54, %56 : vector<128x8xf32>
    %58 = arith.mulf %50, %48 : vector<128x32xf32>
    %cst_20 = arith.constant dense<0.000000e+00> : vector<128xf32>
    %59 = vector.multi_reduction <add>, %58, %cst_20 [1] : vector<128x32xf32> to vector<128xf32>
    %60 = vector.shape_cast %59 : vector<128xf32> to vector<128x1xf32>
    %61 = vector.broadcast %60 : vector<128x1xf32> to vector<128x8xf32>
    %62 = arith.addf %57, %61 : vector<128x8xf32>
    %cst_21 = arith.constant dense<0xFF800000> : vector<128xf32>
    %63 = vector.multi_reduction <maximumf>, %62, %cst_21 [1] : vector<128x8xf32> to vector<128xf32>
    %64 = vector.shape_cast %63 : vector<128xf32> to vector<128x1xf32>
    %65 = vector.broadcast %64 : vector<128x1xf32> to vector<128x8xf32>
    %66 = arith.subf %62, %65 : vector<128x8xf32>
    %67 = math.exp %66 : vector<128x8xf32>
    %cst_22 = arith.constant dense<0.000000e+00> : vector<128xf32>
    %68 = vector.multi_reduction <add>, %67, %cst_22 [1] : vector<128x8xf32> to vector<128xf32>
    %69 = vector.shape_cast %68 : vector<128xf32> to vector<128x1xf32>
    %70 = math.log %69 : vector<128x1xf32>
    %71 = vector.broadcast %64 : vector<128x1xf32> to vector<128x8xf32>
    %72 = arith.subf %62, %71 : vector<128x8xf32>
    %73 = vector.broadcast %70 : vector<128x1xf32> to vector<128x8xf32>
    %74 = arith.subf %72, %73 : vector<128x8xf32>
    %75 = vector.shape_cast %74 : vector<128x8xf32> to vector<16x8x8xf32>
    %76 = tpu.iota {dimensions = array<i32: 2>} : vector<16x8x8xi32>
    %c0_23 = arith.constant 0 : index
    %c0_24 = arith.constant 0 : index
    %c0_25 = arith.constant 0 : index
    %77 = vector.load %arg7[%c0_23, %c0_24, %c0_25] : memref<16x8x1xi32, #tpu.memory_space<vmem>>, vector<16x8x1xi32>
    %78 = vector.broadcast %77 : vector<16x8x1xi32> to vector<16x8x8xi32>
    %79 = arith.cmpi eq, %76, %78 : vector<16x8x8xi32>
    %cst_26 = arith.constant 0.000000e+00 : f32
    %80 = vector.broadcast %cst_26 : f32 to vector<16x8x8xf32>
    %81 = arith.select %79, %75, %80 : vector<16x8x8xi1>, vector<16x8x8xf32>
    %cst_27 = arith.constant dense<0.000000e+00> : vector<16x8xf32>
    %82 = vector.multi_reduction <add>, %81, %cst_27 [2] : vector<16x8x8xf32> to vector<16x8xf32>
    %c0_28 = arith.constant 0 : index
    %c0_29 = arith.constant 0 : index
    %83 = vector.load %arg8[%c0_28, %c0_29] : memref<16x8xf32, #tpu.memory_space<vmem>>, vector<16x8xf32>
    tpu.vector_store %arg8[%c0_28, %c0_29], %82 {strides = array<i32>} : memref<16x8xf32, #tpu.memory_space<vmem>>, vector<16x8xf32>,
    return
  }
  func.func @transform_0(%arg0: i32) -> (i32, i32) {
    %c0_i32 = arith.constant 0 : i32
    %c0_i32_0 = arith.constant 0 : i32
    return %arg0, %c0_i32 : i32, i32
  }
  func.func @transform_1(%arg0: i32) -> (i32, i32) {
    %c0_i32 = arith.constant 0 : i32
    %c0_i32_0 = arith.constant 0 : i32
    %c0_i32_1 = arith.constant 0 : i32
    return %c0_i32, %c0_i32_0 : i32, i32
  }
  func.func @transform_2(%arg0: i32) -> (i32, i32) {
    %c0_i32 = arith.constant 0 : i32
    %c0_i32_0 = arith.constant 0 : i32
    %c0_i32_1 = arith.constant 0 : i32
    return %c0_i32, %c0_i32_0 : i32, i32
  }
  func.func @transform_3(%arg0: i32) -> (i32, i32, i32) {
    %c0_i32 = arith.constant 0 : i32
    %c0_i32_0 = arith.constant 0 : i32
    %c0_i32_1 = arith.constant 0 : i32
    return %arg0, %c0_i32, %c0_i32_0 : i32, i32, i32
  }
  func.func @transform_4(%arg0: i32) -> (i32, i32) {
    %c0_i32 = arith.constant 0 : i32
    %c0_i32_0 = arith.constant 0 : i32
    %c0_i32_1 = arith.constant 0 : i32
    return %c0_i32, %c0_i32_0 : i32, i32
  }
  func.func @transform_5(%arg0: i32) -> (i32, i32) {
    %c0_i32 = arith.constant 0 : i32
    %c0_i32_0 = arith.constant 0 : i32
    %c0_i32_1 = arith.constant 0 : i32
    return %c0_i32, %c0_i32_0 : i32, i32
  }
  func.func @transform_6(%arg0: i32) -> (i32, i32, i32) {
    %c0_i32 = arith.constant 0 : i32
    %c0_i32_0 = arith.constant 0 : i32
    %c0_i32_1 = arith.constant 0 : i32
    return %arg0, %c0_i32, %c0_i32_0 : i32, i32, i32
  }
  func.func @transform_7(%arg0: i32) -> (i32, i32) {
    %c0_i32 = arith.constant 0 : i32
    %c0_i32_0 = arith.constant 0 : i32
    return %arg0, %c0_i32 : i32, i32
  }
}

module attributes {stable_mosaic.version = 11 : i64} {
  func.func @multire_kernel(%arg0: i32, %arg1: memref<16x4xi32, #tpu.memory_space<vmem>>, %arg2: memref<8x32xf32, #tpu.memory_space<vmem>>, %arg3: memref<225x32xf32, #tpu.memory_space<vmem>>, %arg4: memref<16x8x32xf32, #tpu.memory_space<vmem>>, %arg5: memref<32x8xf32, #tpu.memory_space<vmem>>, %arg6: memref<1x8xf32, #tpu.memory_space<vmem>>, %arg7: memref<16x8x1xi32, #tpu.memory_space<vmem>>, %arg8: memref<16x8xf32, #tpu.memory_space<vmem>>) attributes {dimension_semantics = [#tpu.dimension_semantics<parallel>], iteration_bounds = array<i64: 4>, scalar_prefetch = 0 : i64, scratch_operands = 0 : i64, tpu.core_type = #tpu.core_type<tc>, window_params = [{transform_indices = @transform_0, window_bounds = array<i64: 16, 4>}, {pipeline_mode = #tpu.pipeline_mode<synchronous>, transform_indices = @transform_1, window_bounds = array<i64: 8, 32>}, {pipeline_mode = #tpu.pipeline_mode<synchronous>, transform_indices = @transform_2, window_bounds = array<i64: 225, 32>}, {transform_indices = @transform_3, window_bounds = array<i64: 16, 8, 32>}, {pipeline_mode = #tpu.pipeline_mode<synchronous>, transform_indices = @transform_4, window_bounds = array<i64: 32, 8>}, {pipeline_mode = #tpu.pipeline_mode<synchronous>, transform_indices = @transform_5, window_bounds = array<i64: 1, 8>}, {transform_indices = @transform_6, window_bounds = array<i64: 16, 8, 1>}, {transform_indices = @transform_7, window_bounds = array<i64: 16, 8>}]} {
    %c0 = arith.constant 0 : index
    %c0_0 = arith.constant 0 : index
    %0 = vector.load %arg3[%c0, %c0_0] : memref<225x32xf32, #tpu.memory_space<vmem>>, vector<225x32xf32>
    %1 = arith.truncf %0 : vector<225x32xf32> to vector<225x32xbf16>
    %c0_1 = arith.constant 0 : index
    %c0_2 = arith.constant 0 : index
    %2 = vector.load %arg2[%c0_1, %c0_2] : memref<8x32xf32, #tpu.memory_space<vmem>>, vector<8x32xf32>
    %3 = arith.truncf %2 : vector<8x32xf32> to vector<8x32xbf16>
    %cst = arith.constant dense<0.000000e+00> : vector<8x225xf32>
    %4 = tpu.matmul %3, %1, %cst {dimension_numbers = #tpu.dot_dimension_numbers<[1], [1], [0], [0], [0, 0, 1, 0], [], []>} : vector<8x32xbf16>, vector<225x32xbf16>, vector<8x225xf32> -> vector<8x225xf32>
    %c0_3 = arith.constant 0 : index
    %c0_4 = arith.constant 0 : index
    %5 = vector.load %arg1[%c0_3, %c0_4] : memref<16x4xi32, #tpu.memory_space<vmem>>, vector<16x4xi32>
    %6 = tpu.iota {dimensions = array<i32: 1>} : vector<16x225xi32>
    %7 = vector.extract_strided_slice %5 {offsets = [0, 0], sizes = [16, 1], strides = [1, 1]} : vector<16x4xi32> to vector<16x1xi32>
    %8 = vector.broadcast %7 : vector<16x1xi32> to vector<16x225xi32>
    %9 = arith.cmpi sge, %6, %8 : vector<16x225xi32>
    %10 = vector.extract_strided_slice %5 {offsets = [0, 1], sizes = [16, 1], strides = [1, 1]} : vector<16x4xi32> to vector<16x1xi32>
    %11 = vector.broadcast %10 : vector<16x1xi32> to vector<16x225xi32>
    %12 = arith.cmpi slt, %6, %11 : vector<16x225xi32>
    %13 = arith.andi %9, %12 : vector<16x225xi1>
    %14 = vector.extract_strided_slice %5 {offsets = [0, 2], sizes = [16, 1], strides = [1, 1]} : vector<16x4xi32> to vector<16x1xi32>
    %15 = vector.broadcast %14 : vector<16x1xi32> to vector<16x225xi32>
    %16 = arith.cmpi sge, %6, %15 : vector<16x225xi32>
    %17 = vector.extract_strided_slice %5 {offsets = [0, 3], sizes = [16, 1], strides = [1, 1]} : vector<16x4xi32> to vector<16x1xi32>
    %18 = vector.broadcast %17 : vector<16x1xi32> to vector<16x225xi32>
    %19 = arith.cmpi slt, %6, %18 : vector<16x225xi32>
    %20 = arith.andi %16, %19 : vector<16x225xi1>
    %21 = arith.ori %13, %20 : vector<16x225xi1>
    %22 = vector.shape_cast %21 : vector<16x225xi1> to vector<16x1x225xi1>
    %23 = vector.shape_cast %4 : vector<8x225xf32> to vector<1x8x225xf32>
    %cst_5 = arith.constant -1.000000e+30 : f32
    %24 = vector.shape_cast %22 : vector<16x1x225xi1> to vector<16x1x225xi1>
    %25 = vector.broadcast %24 : vector<16x1x225xi1> to vector<16x8x225xi1>
    %26 = vector.shape_cast %23 : vector<1x8x225xf32> to vector<1x8x225xf32>
    %27 = vector.broadcast %26 : vector<1x8x225xf32> to vector<16x8x225xf32>
    %28 = vector.broadcast %cst_5 : f32 to vector<16x8x225xf32>
    %29 = arith.select %25, %27, %28 : vector<16x8x225xi1>, vector<16x8x225xf32>
    %30 = vector.shape_cast %29 : vector<16x8x225xf32> to vector<128x225xf32>
    %cst_6 = arith.constant dense<0xFF800000> : vector<128xf32>
    %31 = vector.multi_reduction <maximumf>, %30, %cst_6 [1] : vector<128x225xf32> to vector<128xf32>
    %32 = vector.shape_cast %31 : vector<128xf32> to vector<128x1xf32>
    %33 = vector.broadcast %32 : vector<128x1xf32> to vector<128x225xf32>
    %34 = arith.subf %30, %33 : vector<128x225xf32>
    %35 = math.exp %34 : vector<128x225xf32>
    %cst_7 = arith.constant dense<0.000000e+00> : vector<128xf32>
    %36 = vector.multi_reduction <add>, %35, %cst_7 [1] : vector<128x225xf32> to vector<128xf32>
    %37 = vector.shape_cast %36 : vector<128xf32> to vector<128x1xf32>
    %cst_8 = arith.constant -1.000000e+29 : f32
    %38 = vector.broadcast %cst_8 : f32 to vector<128x1xf32>
    %39 = arith.cmpf ogt, %32, %38 : vector<128x1xf32>
    %cst_9 = arith.constant 1.000000e-30 : f32
    %40 = vector.broadcast %cst_9 : f32 to vector<128x1xf32>
    %41 = arith.maximumf %37, %40 : vector<128x1xf32>
    %42 = tpu.reciprocal %41 {approx = true} : vector<128x1xf32> -> vector<128x1xf32>
    %cst_10 = arith.constant 0.000000e+00 : f32
    %43 = vector.broadcast %cst_10 : f32 to vector<128x1xf32>
    %44 = arith.select %39, %42, %43 : vector<128x1xi1>, vector<128x1xf32>
    %45 = arith.truncf %35 : vector<128x225xf32> to vector<128x225xbf16>
    %cst_11 = arith.constant dense<0.000000e+00> : vector<128x32xf32>
    %46 = tpu.matmul %45, %1, %cst_11 {dimension_numbers = #tpu.dot_dimension_numbers<[1], [0], [0], [1], [0, 0, 1, 1], [], []>} : vector<128x225xbf16>, vector<225x32xbf16>, vector<128x32xf32> -> vector<128x32xf32>
    %47 = vector.broadcast %44 : vector<128x1xf32> to vector<128x32xf32>
    %48 = arith.mulf %46, %47 : vector<128x32xf32>
    %c0_12 = arith.constant 0 : index
    %c0_13 = arith.constant 0 : index
    %c0_14 = arith.constant 0 : index
    %49 = vector.load %arg4[%c0_12, %c0_13, %c0_14] : memref<16x8x32xf32, #tpu.memory_space<vmem>>, vector<16x8x32xf32>
    %50 = vector.shape_cast %49 : vector<16x8x32xf32> to vector<128x32xf32>
    %51 = arith.truncf %48 : vector<128x32xf32> to vector<128x32xbf16>
    %c0_15 = arith.constant 0 : index
    %c0_16 = arith.constant 0 : index
    %52 = vector.load %arg5[%c0_15, %c0_16] : memref<32x8xf32, #tpu.memory_space<vmem>>, vector<32x8xf32>
    %53 = arith.truncf %52 : vector<32x8xf32> to vector<32x8xbf16>
    %cst_17 = arith.constant dense<0.000000e+00> : vector<128x8xf32>
    %54 = tpu.matmul %51, %53, %cst_17 {dimension_numbers = #tpu.dot_dimension_numbers<[1], [0], [0], [1], [0, 0, 1, 1], [], []>} : vector<128x32xbf16>, vector<32x8xbf16>, vector<128x8xf32> -> vector<128x8xf32>
    %c0_18 = arith.constant 0 : index
    %c0_19 = arith.constant 0 : index
    %55 = vector.load %arg6[%c0_18, %c0_19] : memref<1x8xf32, #tpu.memory_space<vmem>>, vector<1x8xf32>
    %56 = vector.broadcast %55 : vector<1x8xf32> to vector<128x8xf32>
    %57 = arith.addf %54, %56 : vector<128x8xf32>
    %58 = arith.mulf %50, %48 : vector<128x32xf32>
    %cst_20 = arith.constant dense<0.000000e+00> : vector<128xf32>
    %59 = vector.multi_reduction <add>, %58, %cst_20 [1] : vector<128x32xf32> to vector<128xf32>
    %60 = vector.shape_cast %59 : vector<128xf32> to vector<128x1xf32>
    %61 = vector.broadcast %60 : vector<128x1xf32> to vector<128x8xf32>
    %62 = arith.addf %57, %61 : vector<128x8xf32>
    %cst_21 = arith.constant dense<0xFF800000> : vector<128xf32>
    %63 = vector.multi_reduction <maximumf>, %62, %cst_21 [1] : vector<128x8xf32> to vector<128xf32>
    %64 = vector.shape_cast %63 : vector<128xf32> to vector<128x1xf32>
    %65 = vector.broadcast %64 : vector<128x1xf32> to vector<128x8xf32>
    %66 = arith.subf %62, %65 : vector<128x8xf32>
    %67 = math.exp %66 : vector<128x8xf32>
    %cst_22 = arith.constant dense<0.000000e+00> : vector<128xf32>
    %68 = vector.multi_reduction <add>, %67, %cst_22 [1] : vector<128x8xf32> to vector<128xf32>
    %69 = vector.shape_cast %68 : vector<128xf32> to vector<128x1xf32>
    %70 = math.log %69 : vector<128x1xf32>
    %71 = vector.broadcast %64 : vector<128x1xf32> to vector<128x8xf32>
    %72 = arith.subf %62, %71 : vector<128x8xf32>
    %73 = vector.broadcast %70 : vector<128x1xf32> to vector<128x8xf32>
    %74 = arith.subf %72, %73 : vector<128x8xf32>
    %75 = vector.shape_cast %74 : vector<128x8xf32> to vector<16x8x8xf32>
    %76 = tpu.iota {dimensions = array<i32: 2>} : vector<16x8x8xi32>
    %c0_23 = arith.constant 0 : index
    %c0_24 = arith.constant 0 : index
    %c0_25 = arith.constant 0 : index
    %77 = vector.load %arg7[%c0_23, %c0_24, %c0_25] : memref<16x8x1xi32, #tpu.memory_space<vmem>>, vector<16x8x1xi32>
    %78 = vector.broadcast %77 : vector<16x8x1xi32> to vector<16x8x8xi32>
    %79 = arith.cmpi eq, %76, %78 : vector<16x8x8xi32>
    %cst_26 = arith.constant 0.000000e+00 : f32
    %80 = vector.broadcast %cst_26 : f32 to vector<16x8x8xf32>
    %81 = arith.select %79, %75, %80 : vector<16x8x8xi1>, vector<16x8x8xf32>
    %cst_27 = arith.constant dense<0.000000e+00> : vector<16x8xf32>
    %82 = vector.multi_reduction <add>, %81, %cst_27 [2] : vector<16x8x8xf32> to vector<16x8xf32>
    %c0_28 = arith.constant 0 : index
    %c0_29 = arith.constant 0 : index
    %83 = vector.load %arg8[%c0_28, %c0_29] : memref<16x8xf32, #tpu.memory_space<vmem>>, vector<16x8xf32>
    tpu.vector_store %arg8[%c0_28, %c0_29], %82 {strides = array<i32>} : memref<16x8xf32, #tpu.memory_space<vmem>>, vector<16x8xf32>,
    return
  }
  func.func @transform_0(%arg0: i32) -> (i32, i32) {
    %c0_i32 = arith.constant 0 : i32
    %c0_i32_0 = arith.constant 0 : i32
    return %arg0, %c0_i32 : i32, i32
  }
  func.func @transform_1(%arg0: i32) -> (i32, i32) {
    %c0_i32 = arith.constant 0 : i32
    %c0_i32_0 = arith.constant 0 : i32
    %c0_i32_1 = arith.constant 0 : i32
    return %c0_i32, %c0_i32_0 : i32, i32
  }
  func.func @transform_2(%arg0: i32) -> (i32, i32) {
    %c0_i32 = arith.constant 0 : i32
    %c0_i32_0 = arith.constant 0 : i32
    %c0_i32_1 = arith.constant 0 : i32
    return %c0_i32, %c0_i32_0 : i32, i32
  }
  func.func @transform_3(%arg0: i32) -> (i32, i32, i32) {
    %c0_i32 = arith.constant 0 : i32
    %c0_i32_0 = arith.constant 0 : i32
    %c0_i32_1 = arith.constant 0 : i32
    return %arg0, %c0_i32, %c0_i32_0 : i32, i32, i32
  }
  func.func @transform_4(%arg0: i32) -> (i32, i32) {
    %c0_i32 = arith.constant 0 : i32
    %c0_i32_0 = arith.constant 0 : i32
    %c0_i32_1 = arith.constant 0 : i32
    return %c0_i32, %c0_i32_0 : i32, i32
  }
  func.func @transform_5(%arg0: i32) -> (i32, i32) {
    %c0_i32 = arith.constant 0 : i32
    %c0_i32_0 = arith.constant 0 : i32
    %c0_i32_1 = arith.constant 0 : i32
    return %c0_i32, %c0_i32_0 : i32, i32
  }
  func.func @transform_6(%arg0: i32) -> (i32, i32, i32) {
    %c0_i32 = arith.constant 0 : i32
    %c0_i32_0 = arith.constant 0 : i32
    %c0_i32_1 = arith.constant 0 : i32
    return %arg0, %c0_i32, %c0_i32_0 : i32, i32, i32
  }
  func.func @transform_7(%arg0: i32) -> (i32, i32) {
    %c0_i32 = arith.constant 0 : i32
    %c0_i32_0 = arith.constant 0 : i32
    return %arg0, %c0_i32 : i32, i32
  }
}

</mosaic_0001>

<llo_original>
// kernel: multire_apply.1
$region0: #{multire_apply.1}
  #allocation0 [shape = 'u32[]', space=smem, size = 0x4, offset = 0x4, fixed_abs, tag = 'smem constant byte address 0x4 - core index']
  #allocation1 [shape = 'u32[144,128]{1,0:T(1,128)}', space=vmem, size = 0x12000, scoped, tag = 'internal scratch']
  %s0 = inlined_call_operand.vmem [shape: s32[64,4], index: 0, kind: input, shape index: {}]
  %s1 = inlined_call_operand.vmem [shape: f32[8,32], index: 1, kind: input, shape index: {}]
  %s2 = inlined_call_operand.vmem [shape: f32[225,32], index: 2, kind: input, shape index: {}]
  %s3 = inlined_call_operand.vmem [shape: f32[64,8,32], index: 3, kind: input, shape index: {}]
  %s4 = inlined_call_operand.vmem [shape: f32[32,8], index: 4, kind: input, shape index: {}]
  %s5 = inlined_call_operand.vmem [shape: f32[1,8], index: 5, kind: input, shape index: {}]
  %s6 = inlined_call_operand.vmem [shape: s32[64,8,1], index: 6, kind: input, shape index: {}]
  %s7 = inlined_call_operand.vmem [shape: f32[64,8], index: 7, kind: output, shape index: {}]
  %s8 = sld [smem:[#allocation0]]
  $region61: #{multire_apply.1} parent=0
    _
  %s10 = ssub.s32 1, %s8
  %s11 = scalar_select 0, %s10, %s8
  loop: start=0, step=1, limit=6
  $region2: #{multire_apply.1} parent=0 // loop_pre_header
    _
  $region3: #{multire_apply.1} parent=0 // loop_header
    %s13 = sphi 0, %s17
    %p14 = scmp.ge.s32.totalorder %s13, 6
    %s23 = sphi 0, %s25
    %s26 = sphi 0, %s23
    %s27 = sphi 0, %s26
    %s43 = sphi 0, %s27
    %s47 = sphi 0, %s47
    %s49 = sphi 0, %s47
    %s50 = sphi 0, %s49
    %s64 = sphi 0, %s50
    %s68 = sphi 0, %s68
    %s70 = sphi 0, %s68
    %s71 = sphi 0, %s70
    %s85 = sphi 0, %s71
    %s91 = sphi 0, %s93
    %s94 = sphi 0, %s91
    %s95 = sphi 0, %s94
    %s111 = sphi 0, %s95
    %s115 = sphi 0, %s115
    %s117 = sphi 0, %s115
    %s118 = sphi 0, %s117
    %s132 = sphi 0, %s118
    %s136 = sphi 0, %s136
    %s138 = sphi 0, %s136
    %s139 = sphi 0, %s138
    %s153 = sphi 0, %s139
    %s159 = sphi 0, %s161
    %s162 = sphi 0, %s159
    %s163 = sphi 0, %s162
    %s179 = sphi 0, %s163
    %s185 = sphi 0, %s187
    %s188 = sphi 0, %s185
    %s189 = sphi 0, %s188
    %s205 = sphi 0, %s189
  $region4: #{multire_apply.1} parent=0 // loop_header_branch
    %16 = sbr.rel (%p14) target = $region8
  $region5: #{multire_apply.1} parent=0 // loop_body
    %s18 = ssub.s32 %s13, 1
    %s19 = ssub.s32 %s13, 2
    %s20 = sadd.s32 %s13, 1
    %s21 = ssub.s32 %s13, %s20
    %p22 = scmp.eq.s32.totalorder %s21, 0
    %s24 = sadd.s32 %s23, 1
    %s25 = scalar_select %p22, %s23, %s24
    %p28 = pneg %p22
    %p29 = scmp.eq.s32.totalorder %s13, 3
    %p30 = por %p28, %p29
    %p31 = scmp.ne.s32.totalorder %s23, %s26
    %p32 = scmp.eq.s32.totalorder %s13, 0
    %p33 = por %p31, %p32
    %p34 = scmp.ne.s32.totalorder %s23, %s26
    %p35 = scmp.eq.s32.totalorder %s18, 3
    %p36 = por %p34, %p35
    %p37 = scmp.ne.s32.totalorder %s26, %s27
    %p38 = scmp.eq.s32.totalorder %s18, 0
    %p39 = por %p37, %p38
    %p40 = scmp.ne.s32.totalorder %s26, %s27
    %p41 = scmp.eq.s32.totalorder %s19, 3
    %p42 = por %p40, %p41
    %p44 = scmp.ne.s32.totalorder %s27, %s43
    %p45 = scmp.eq.s32.totalorder %s19, 0
    %p46 = por %p44, %p45
    %s48 = sadd.s32 %s47, 1
    %p51 = scmp.eq.s32.totalorder %s13, 3
    %p52 = scmp.ne.s32.totalorder %s47, %s49
    %p53 = scmp.eq.s32.totalorder %s13, 0
    %p54 = por %p52, %p53
    %p55 = scmp.ne.s32.totalorder %s47, %s49
    %p56 = scmp.eq.s32.totalorder %s18, 3
    %p57 = por %p55, %p56
    %p58 = scmp.ne.s32.totalorder %s49, %s50
    %p59 = scmp.eq.s32.totalorder %s18, 0
    %p60 = por %p58, %p59
    %p61 = scmp.ne.s32.totalorder %s49, %s50
    %p62 = scmp.eq.s32.totalorder %s19, 3
    %p63 = por %p61, %p62
    %p65 = scmp.ne.s32.totalorder %s50, %s64
    %p66 = scmp.eq.s32.totalorder %s19, 0
    %p67 = por %p65, %p66
    %s69 = sadd.s32 %s68, 1
    %p72 = scmp.eq.s32.totalorder %s13, 3
    %p73 = scmp.ne.s32.totalorder %s68, %s70
    %p74 = scmp.eq.s32.totalorder %s13, 0
    %p75 = por %p73, %p74
    %p76 = scmp.ne.s32.totalorder %s68, %s70
    %p77 = scmp.eq.s32.totalorder %s18, 3
    %p78 = por %p76, %p77
    %p79 = scmp.ne.s32.totalorder %s70, %s71
    %p80 = scmp.eq.s32.totalorder %s18, 0
    %p81 = por %p79, %p80
    %p82 = scmp.ne.s32.totalorder %s70, %s71
    %p83 = scmp.eq.s32.totalorder %s19, 3
    %p84 = por %p82, %p83
    %p86 = scmp.ne.s32.totalorder %s71, %s85
    %p87 = scmp.eq.s32.totalorder %s19, 0
    %p88 = por %p86, %p87
    %s89 = ssub.s32 %s13, %s20
    %p90 = scmp.eq.s32.totalorder %s89, 0
    %s92 = sadd.s32 %s91, 1
    %s93 = scalar_select %p90, %s91, %s92
    %p96 = pneg %p90
    %p97 = scmp.eq.s32.totalorder %s13, 3
    %p98 = por %p96, %p97
    %p99 = scmp.ne.s32.totalorder %s91, %s94
    %p100 = scmp.eq.s32.totalorder %s13, 0
    %p101 = por %p99, %p100
    %p102 = scmp.ne.s32.totalorder %s91, %s94
    %p103 = scmp.eq.s32.totalorder %s18, 3
    %p104 = por %p102, %p103
    %p105 = scmp.ne.s32.totalorder %s94, %s95
    %p106 = scmp.eq.s32.totalorder %s18, 0
    %p107 = por %p105, %p106
    %p108 = scmp.ne.s32.totalorder %s94, %s95
    %p109 = scmp.eq.s32.totalorder %s19, 3
    %p110 = por %p108, %p109
    %p112 = scmp.ne.s32.totalorder %s95, %s111
    %p113 = scmp.eq.s32.totalorder %s19, 0
    %p114 = por %p112, %p113
    %s116 = sadd.s32 %s115, 1
    %p119 = scmp.eq.s32.totalorder %s13, 3
    %p120 = scmp.ne.s32.totalorder %s115, %s117
    %p121 = scmp.eq.s32.totalorder %s13, 0
    %p122 = por %p120, %p121
    %p123 = scmp.ne.s32.totalorder %s115, %s117
    %p124 = scmp.eq.s32.totalorder %s18, 3
    %p125 = por %p123, %p124
    %p126 = scmp.ne.s32.totalorder %s117, %s118
    %p127 = scmp.eq.s32.totalorder %s18, 0
    %p128 = por %p126, %p127
    %p129 = scmp.ne.s32.totalorder %s117, %s118
    %p130 = scmp.eq.s32.totalorder %s19, 3
    %p131 = por %p129, %p130
    %p133 = scmp.ne.s32.totalorder %s118, %s132
    %p134 = scmp.eq.s32.totalorder %s19, 0
    %p135 = por %p133, %p134
    %s137 = sadd.s32 %s136, 1
    %p140 = scmp.eq.s32.totalorder %s13, 3
    %p141 = scmp.ne.s32.totalorder %s136, %s138
    %p142 = scmp.eq.s32.totalorder %s13, 0
    %p143 = por %p141, %p142
    %p144 = scmp.ne.s32.totalorder %s136, %s138
    %p145 = scmp.eq.s32.totalorder %s18, 3
    %p146 = por %p144, %p145
    %p147 = scmp.ne.s32.totalorder %s138, %s139
    %p148 = scmp.eq.s32.totalorder %s18, 0
    %p149 = por %p147, %p148
    %p150 = scmp.ne.s32.totalorder %s138, %s139
    %p151 = scmp.eq.s32.totalorder %s19, 3
    %p152 = por %p150, %p151
    %p154 = scmp.ne.s32.totalorder %s139, %s153
    %p155 = scmp.eq.s32.totalorder %s19, 0
    %p156 = por %p154, %p155
    %s157 = ssub.s32 %s13, %s20
    %p158 = scmp.eq.s32.totalorder %s157, 0
    %s160 = sadd.s32 %s159, 1
    %s161 = scalar_select %p158, %s159, %s160
    %p164 = pneg %p158
    %p165 = scmp.eq.s32.totalorder %s13, 3
    %p166 = por %p164, %p165
    %p167 = scmp.ne.s32.totalorder %s159, %s162
    %p168 = scmp.eq.s32.totalorder %s13, 0
    %p169 = por %p167, %p168
    %p170 = scmp.ne.s32.totalorder %s159, %s162
    %p171 = scmp.eq.s32.totalorder %s18, 3
    %p172 = por %p170, %p171
    %p173 = scmp.ne.s32.totalorder %s162, %s163
    %p174 = scmp.eq.s32.totalorder %s18, 0
    %p175 = por %p173, %p174
    %p176 = scmp.ne.s32.totalorder %s162, %s163
    %p177 = scmp.eq.s32.totalorder %s19, 3
    %p178 = por %p176, %p177
    %p180 = scmp.ne.s32.totalorder %s163, %s179
    %p181 = scmp.eq.s32.totalorder %s19, 0
    %p182 = por %p180, %p181
    %s183 = ssub.s32 %s13, %s20
    %p184 = scmp.eq.s32.totalorder %s183, 0
    %s186 = sadd.s32 %s185, 1
    %s187 = scalar_select %p184, %s185, %s186
    %p190 = pneg %p184
    %p191 = scmp.eq.s32.totalorder %s13, 3
    %p192 = por %p190, %p191
    %p193 = scmp.ne.s32.totalorder %s185, %s188
    %p194 = scmp.eq.s32.totalorder %s13, 0
    %p195 = por %p193, %p194
    %p196 = scmp.ne.s32.totalorder %s185, %s188
    %p197 = scmp.eq.s32.totalorder %s18, 3
    %p198 = por %p196, %p197
    %p199 = scmp.ne.s32.totalorder %s188, %s189
    %p200 = scmp.eq.s32.totalorder %s18, 0
    %p201 = por %p199, %p200
    %p202 = scmp.ne.s32.totalorder %s188, %s189
    %p203 = scmp.eq.s32.totalorder %s19, 3
    %p204 = por %p202, %p203
    %p206 = scmp.ne.s32.totalorder %s189, %s205
    %p207 = scmp.eq.s32.totalorder %s19, 0
    %p208 = por %p206, %p207
    %p209 = scmp.le.s32.totalorder 1, %s13
    %p210 = scmp.lt.s32.totalorder %s13, 5
    %p211 = pnand %p209, %p210
    %p212 = pneg %p211
    // Predicated region
    $region9: #{multire_apply.1} parent=5 // pred_check
      _
    $region10: #{multire_apply.1} parent=5 // pred_check_branch
      %214 = sbr.rel (%p211) target = $region12
    $region11: #{multire_apply.1} parent=5 // pred_region
      %s215 = ssub.s32 %s13, 1
      // Predicated region
      $region13: #{multire_apply.1} parent=11 // pred_check
        %p216 = pneg %p60
      $region14: #{multire_apply.1} parent=11 // pred_check_branch
        %218 = sbr.rel (%p216) target = $region16
      $region15: #{multire_apply.1} parent=11 // pred_region
        _
      $region16: #{multire_apply.1} parent=11 // pred_fallthru
        _
      // Predicated region
      $region17: #{multire_apply.1} parent=11 // pred_check
        %p219 = pneg %p81
      $region18: #{multire_apply.1} parent=11 // pred_check_branch
        %221 = sbr.rel (%p219) target = $region20
      $region19: #{multire_apply.1} parent=11 // pred_region
        _
      $region20: #{multire_apply.1} parent=11 // pred_fallthru
        _
      // Predicated region
      $region21: #{multire_apply.1} parent=11 // pred_check
        %p222 = pneg %p128
      $region22: #{multire_apply.1} parent=11 // pred_check_branch
        %224 = sbr.rel (%p222) target = $region24
      $region23: #{multire_apply.1} parent=11 // pred_region
        _
      $region24: #{multire_apply.1} parent=11 // pred_fallthru
        _
      // Predicated region
      $region25: #{multire_apply.1} parent=11 // pred_check
        %p225 = pneg %p149
      $region26: #{multire_apply.1} parent=11 // pred_check_branch
        %227 = sbr.rel (%p225) target = $region28
      $region27: #{multire_apply.1} parent=11 // pred_region
        _
      $region28: #{multire_apply.1} parent=11 // pred_fallthru
        _
    $region12: #{multire_apply.1} parent=5 // pred_fallthru
      _
    %p228 = scmp.lt.s32.totalorder %s13, 4
    // Predicated region
    $region29: #{multire_apply.1} parent=5 // pred_check
      %p229 = pneg %p228
    $region30: #{multire_apply.1} parent=5 // pred_check_branch
      %231 = sbr.rel (%p229) target = $region32
    $region31: #{multire_apply.1} parent=5 // pred_region
      // Predicated region
      $region33: #{multire_apply.1} parent=31 // pred_check
        %p232 = pneg %p33
      $region34: #{multire_apply.1} parent=31 // pred_check_branch
        %234 = sbr.rel (%p232) target = $region36
      $region35: #{multire_apply.1} parent=31 // pred_region
        %s235 = smul.u32 2, %s13
        %p236 = scmp.lt.s32.totalorder %s235, 7
        %s237 = scalar_select %p236, %s235, 7
        %s238 = smul.addr %s237, 8
        %s239 = scalar_lea.vmem %s0, %s238
        %s240 = smul.u32 2, %s13
      $region36: #{multire_apply.1} parent=31 // pred_fallthru
        _
      // Predicated region
      $region37: #{multire_apply.1} parent=31 // pred_check
        %p241 = pneg %p101
      $region38: #{multire_apply.1} parent=31 // pred_check_branch
        %243 = sbr.rel (%p241) target = $region40
      $region39: #{multire_apply.1} parent=31 // pred_region
        %s244 = smul.u32 16, %s13
        %p245 = scmp.lt.s32.totalorder %s244, 63
        %s246 = scalar_select %p245, %s244, 63
        %s247 = smul.addr %s246, 8
        %s248 = scalar_lea.vmem %s3, %s247
        %s249 = smul.u32 16, %s13
      $region40: #{multire_apply.1} parent=31 // pred_fallthru
        _
      // Predicated region
      $region41: #{multire_apply.1} parent=31 // pred_check
        %p250 = pneg %p169
      $region42: #{multire_apply.1} parent=31 // pred_check_branch
        %252 = sbr.rel (%p250) target = $region44
      $region43: #{multire_apply.1} parent=31 // pred_region
        %s253 = smul.u32 16, %s13
        %p254 = scmp.lt.s32.totalorder %s253, 63
        %s255 = scalar_select %p254, %s253, 63
        %s256 = smul.addr %s255, 8
        %s257 = scalar_lea.vmem %s6, %s256
        %s258 = smul.u32 16, %s13
      $region44: #{multire_apply.1} parent=31 // pred_fallthru
        _
    $region32: #{multire_apply.1} parent=5 // pred_fallthru
      _
    %p259 = scmp.le.s32.totalorder 1, %s13
    %p260 = scmp.lt.s32.totalorder %s13, 5
    %p261 = pnand %p259, %p260
    %p262 = pneg %p261
    // Predicated region
    $region45: #{multire_apply.1} parent=5 // pred_check
      _
    $region46: #{multire_apply.1} parent=5 // pred_check_branch
      %264 = sbr.rel (%p261) target = $region48
    $region47: #{multire_apply.1} parent=5 // pred_region
      %s265 = ssub.s32 %s13, 1
      %s266 = smul.u32 2, %s18
      %p267 = scmp.lt.s32.totalorder %s266, 7
      %s268 = scalar_select %p267, %s266, 7
      %s269 = smul.addr %s268, 8
      %s270 = scalar_lea.vmem %s0, %s269
      %p271 = pneg %p39
      %p272 = pneg %p36
      %p273 = pneg %p60
      %p274 = pneg %p57
      %p275 = pneg %p81
      %p276 = pneg %p78
      %s277 = smul.u32 16, %s18
      %p278 = scmp.lt.s32.totalorder %s277, 63
      %s279 = scalar_select %p278, %s277, 63
      %s280 = smul.addr %s279, 8
      %s281 = scalar_lea.vmem %s3, %s280
      %p282 = pneg %p107
      %p283 = pneg %p104
      %p284 = pneg %p128
      %p285 = pneg %p125
      %p286 = pneg %p149
      %p287 = pneg %p146
      %s288 = smul.u32 16, %s18
      %p289 = scmp.lt.s32.totalorder %s288, 63
      %s290 = scalar_select %p289, %s288, 63
      %s291 = smul.addr %s290, 8
      %s292 = scalar_lea.vmem %s6, %s291
      %p293 = pneg %p175
      %p294 = pneg %p172
      %p295 = pneg %p201
      %p296 = pneg %p198
      %s297 = smul.u32 2, %s18
      %p298 = scmp.lt.s32.totalorder %s297, 7
      %s299 = scalar_select %p298, %s297, 7
      %s300 = smul.addr %s299, 8
      %s301 = scalar_lea.vmem %s7, %s300
      %s302 = smul.u32 2, %s18
      %p303 = scmp.lt.s32.totalorder %s302, 7
      %s304 = scalar_select %p303, %s302, 7
      %s305 = smul.addr %s304, 8
      %s306 = scalar_lea.vmem %s0, %s305
      %s307 = smul.u32 2, %s18
      %s308 = smul.u32 16, %s18
      %p309 = scmp.lt.s32.totalorder %s308, 63
      %s310 = scalar_select %p309, %s308, 63
      %s311 = smul.addr %s310, 8
      %s312 = scalar_lea.vmem %s3, %s311
      %s313 = smul.u32 16, %s18
      %s314 = smul.u32 16, %s18
      %p315 = scmp.lt.s32.totalorder %s314, 63
      %s316 = scalar_select %p315, %s314, 63
      %s317 = smul.addr %s316, 8
      %s318 = scalar_lea.vmem %s6, %s317
      %s319 = smul.u32 16, %s18
      %s320 = smul.u32 2, %s18
      %p321 = scmp.lt.s32.totalorder %s320, 7
      %s322 = scalar_select %p321, %s320, 7
      %s323 = smul.addr %s322, 8
      %s324 = scalar_lea.vmem %s7, %s323
      %s325 = smul.u32 2, %s18
      %v327 = vld [vmem:[%s2] sm:$0xff]
      %v328 = vld [vmem:[%s2 + $0x8] sm:$0xff]
      %v329 = vld [vmem:[%s2 + $0x10] sm:$0xff]
      %v330 = vld [vmem:[%s2 + $0x18] sm:$0xff]
      %v331 = vld [vmem:[%s2 + $0x20] sm:$0xff]
      %v332 = vld [vmem:[%s2 + $0x28] sm:$0xff]
      %v333 = vld [vmem:[%s2 + $0x30] sm:$0xff]
      %v334 = vld [vmem:[%s2 + $0x38] sm:$0xff]
      %v335 = vld [vmem:[%s2 + $0x40] sm:$0xff]
      %v336 = vld [vmem:[%s2 + $0x48] sm:$0xff]
      %v337 = vld [vmem:[%s2 + $0x50] sm:$0xff]
      %v338 = vld [vmem:[%s2 + $0x58] sm:$0xff]
      %v339 = vld [vmem:[%s2 + $0x60] sm:$0xff]
      %v340 = vld [vmem:[%s2 + $0x68] sm:$0xff]
      %v341 = vld [vmem:[%s2 + $0x70] sm:$0xff]
      %v342 = vld [vmem:[%s2 + $0x78] sm:$0xff]
      %v343 = vld [vmem:[%s2 + $0x80] sm:$0xff]
      %v344 = vld [vmem:[%s2 + $0x88] sm:$0xff]
      %v345 = vld [vmem:[%s2 + $0x90] sm:$0xff]
      %v346 = vld [vmem:[%s2 + $0x98] sm:$0xff]
      %v347 = vld [vmem:[%s2 + $0xa0] sm:$0xff]
      %v348 = vld [vmem:[%s2 + $0xa8] sm:$0xff]
      %v349 = vld [vmem:[%s2 + $0xb0] sm:$0xff]
      %v350 = vld [vmem:[%s2 + $0xb8] sm:$0xff]
      %v351 = vld [vmem:[%s2 + $0xc0] sm:$0xff]
      %v352 = vld [vmem:[%s2 + $0xc8] sm:$0xff]
      %v353 = vld [vmem:[%s2 + $0xd0] sm:$0xff]
      %v354 = vld [vmem:[%s2 + $0xd8] sm:$0xff]
      %v355 = vld [vmem:[%s2 + $0xe0] sm:$0x1]
      %v356 = vpack.c.bf16 %v328, %v327
      %v357 = vpack.c.bf16 %v330, %v329
      %v358 = vpack.c.bf16 %v332, %v331
      %v359 = vpack.c.bf16 %v334, %v333
      %v360 = vpack.c.bf16 %v336, %v335
      %v361 = vpack.c.bf16 %v338, %v337
      %v362 = vpack.c.bf16 %v340, %v339
      %v363 = vpack.c.bf16 %v342, %v341
      %v364 = vpack.c.bf16 %v344, %v343
      %v365 = vpack.c.bf16 %v346, %v345
      %v366 = vpack.c.bf16 %v348, %v347
      %v367 = vpack.c.bf16 %v350, %v349
      %v368 = vpack.c.bf16 %v352, %v351
      %v369 = vpack.c.bf16 %v354, %v353
      %v370 = vpack.c.bf16 %v355, %v355
      %v371 = vld [vmem:[%s1] sm:$0xff]
      %v372 = vpack.c.bf16 %v371, %v371
      %vm373 = vcmask 261120
      %v375 = vsel %vm373, %v372, 0
      %v378 = vsel %vm373, %v356, 0
      %v381 = vsel %vm373, %v357, 0
      %v384 = vsel %vm373, %v358, 0
      %v387 = vsel %vm373, %v359, 0
      %v390 = vsel %vm373, %v360, 0
      %v393 = vsel %vm373, %v361, 0
      %v396 = vsel %vm373, %v362, 0
      %v399 = vsel %vm373, %v363, 0
      %v402 = vsel %vm373, %v364, 0
      %v405 = vsel %vm373, %v365, 0
      %v408 = vsel %vm373, %v366, 0
      %v411 = vsel %vm373, %v367, 0
      %v414 = vsel %vm373, %v368, 0
      %v417 = vsel %vm373, %v369, 0
      %v420 = vsel %vm373, %v370, 0
      %422 = vmatprep.subr.bf16.mxu0 0
      %423 = vmatpush1.bf16.xpose.msra.mxu0 %v399
      %424 = vmatprep.subr.bf16.mxu0 0
      %425 = vmatpush1.bf16.xpose.msra.mxu0 %v396
      %426 = vmatprep.subr.bf16.mxu0 0
      %427 = vmatpush1.bf16.xpose.msra.mxu0 %v393
      %428 = vmatprep.subr.bf16.mxu0 0
      %429 = vmatpush1.bf16.xpose.msra.mxu0 %v390
      %430 = vmatprep.subr.bf16.mxu0 0
      %431 = vmatpush1.bf16.xpose.msra.mxu0 %v387
      %432 = vmatprep.subr.bf16.mxu0 0
      %433 = vmatpush1.bf16.xpose.msra.mxu0 %v384
      %434 = vmatprep.subr.bf16.mxu0 0
      %435 = vmatpush1.bf16.xpose.msra.mxu0 %v381
      %436 = vmatprep.subr.bf16.mxu0 0
      %437 = vmatpush1.bf16.xpose.msra.mxu0 %v378
      %438 = vmatprep.subr.bf16.mxu0 0
      %439 = vmatpush2.bf16.xpose.msra.mxu0 0
      %440 = vmatprep.subr.bf16.mxu0 0
      %441 = vmatpush2.bf16.xpose.msra.mxu0 %v420
      %442 = vmatprep.subr.bf16.mxu0 0
      %443 = vmatpush2.bf16.xpose.msra.mxu0 %v417
      %444 = vmatprep.subr.bf16.mxu0 0
      %445 = vmatpush2.bf16.xpose.msra.mxu0 %v414
      %446 = vmatprep.subr.bf16.mxu0 0
      %447 = vmatpush2.bf16.xpose.msra.mxu0 %v411
      %448 = vmatprep.subr.bf16.mxu0 0
      %449 = vmatpush2.bf16.xpose.msra.mxu0 %v408
      %450 = vmatprep.subr.bf16.mxu0 0
      %451 = vmatpush2.bf16.xpose.msra.mxu0 %v405
      %452 = vmatprep.subr.bf16.mxu0 0
      %453 = vmatpush2.bf16.xpose.msra.mxu0 %v402
      %454 = vmatprep.mubr.bf16.mxu0 0
      %455 = vmatmul.mubr.bf16.gmra.mxu0 %v375
      %v456 = vpop.f32.mrf.mxu0
      %v457 = vadd.f32 0.0, %v456
      %v458 = vpop.f32.mrf.mxu0
      %v459 = vadd.f32 0.0, %v458
      %v460 = vpop.f32.mrf.mxu0
      %v461 = vpop.f32.mrf.mxu0
      %462 = vdwg.mxu0
      %v463 = vld [vmem:[%s306] sm:$0xff]
      %v464 = vld [vmem:[%s306 + $0x8] sm:$0xff]
      %v465 = vlaneseq
      %v466 = vand.u32 %v465, 127
      %v467 = vadd.s32 %v466, 128
      %468 = vset.pattern.permute.xlu0 0
      %469 = vperm.xlu0 %468, %v463
      %v470 = vpop.permute.xlu0 %469
      %471 = vset.pattern.permute.xlu0 0
      %472 = vperm.xlu0 %471, %v464
      %v473 = vpop.permute.xlu0 %472
      %vm474 = vcmp.ge.s32.totalorder %v466, %v470
      %vm475 = vcmp.ge.s32.totalorder %v467, %v470
      %vm476 = vcmp.ge.s32.totalorder %v466, %v473
      %vm477 = vcmp.ge.s32.totalorder %v467, %v473
      %478 = vset.pattern.permute.xlu0 1
      %479 = vperm.xlu0 %478, %v463
      %v480 = vpop.permute.xlu0 %479
      %481 = vset.pattern.permute.xlu0 1
      %482 = vperm.xlu0 %481, %v464
      %v483 = vpop.permute.xlu0 %482
      %vm484 = vcmp.lt.s32.totalorder %v466, %v480
      %vm485 = vcmp.lt.s32.totalorder %v467, %v480
      %vm486 = vcmp.lt.s32.totalorder %v466, %v483
      %vm487 = vcmp.lt.s32.totalorder %v467, %v483
      %vm488 = vmand %vm474, %vm484
      %vm489 = vmand %vm475, %vm485
      %vm490 = vmand %vm476, %vm486
      %vm491 = vmand %vm477, %vm487
      %492 = vset.pattern.permute.xlu0 2
      %493 = vperm.xlu0 %492, %v463
      %v494 = vpop.permute.xlu0 %493
      %495 = vset.pattern.permute.xlu0 2
      %496 = vperm.xlu0 %495, %v464
      %v497 = vpop.permute.xlu0 %496
      %vm498 = vcmp.ge.s32.totalorder %v466, %v494
      %vm499 = vcmp.ge.s32.totalorder %v467, %v494
      %vm500 = vcmp.ge.s32.totalorder %v466, %v497
      %vm501 = vcmp.ge.s32.totalorder %v467, %v497
      %502 = vset.pattern.permute.xlu0 3
      %503 = vperm.xlu0 %502, %v463
      %v504 = vpop.permute.xlu0 %503
      %505 = vset.pattern.permute.xlu0 3
      %506 = vperm.xlu0 %505, %v464
      %v507 = vpop.permute.xlu0 %506
      %vm508 = vcmp.lt.s32.totalorder %v466, %v504
      %vm509 = vcmp.lt.s32.totalorder %v467, %v504
      %vm510 = vcmp.lt.s32.totalorder %v466, %v507
      %vm511 = vcmp.lt.s32.totalorder %v467, %v507
      %vm512 = vmand %vm498, %vm508
      %vm513 = vmand %vm499, %vm509
      %vm514 = vmand %vm500, %vm510
      %vm515 = vmand %vm501, %vm511
      %vm516 = vmor %vm488, %vm512
      %vm517 = vmor %vm489, %vm513
      %vm518 = vmor %vm490, %vm514
      %vm519 = vmor %vm491, %vm515
      %v520 = vsel %vm516, 1, 0
      %v521 = vsel %vm517, 1, 0
      %v522 = vsel %vm518, 1, 0
      %v523 = vsel %vm519, 1, 0
      %v524 = vcombine.low %v520, %v521
      %v525 = vcombine.high %v520, %v521
      %v527 = vunpack.c.l.s4 1966171168
      %v528 = vunpack.c.0.s8 %v527
      %v529 = vlaneseq
      %v530 = vshrl.u32 %v529, 7
      %v531 = vsub.s32 %v528, %v530
      %v532 = vrot.slane %v524, %v531
      %v534 = vunpack.c.l.s4 1966171168
      %v535 = vunpack.c.0.s8 %v534
      %v536 = vlaneseq
      %v537 = vshrl.u32 %v536, 7
      %v538 = vsub.s32 %v535, %v537
      %v539 = vrot.slane %v525, %v538
      %v540 = vcombine.high %v532, %v532
      %v541 = vcombine.high %v539, %v539
      %v543 = vunpack.c.l.s4 1966171168
      %v544 = vunpack.c.0.s8 %v543
      %v545 = vlaneseq
      %v546 = vshrl.u32 %v545, 7
      %v547 = vsub.s32 %v544, %v546
      %v548 = vrot.slane %v532, %v547
      %v550 = vunpack.c.l.s4 1966171168
      %v551 = vunpack.c.0.s8 %v550
      %v552 = vlaneseq
      %v553 = vshrl.u32 %v552, 7
      %v554 = vsub.s32 %v551, %v553
      %v555 = vrot.slane %v539, %v554
      %v557 = vunpack.c.l.s4 1966171168
      %v558 = vunpack.c.0.s8 %v557
      %v559 = vlaneseq
      %v560 = vshrl.u32 %v559, 7
      %v561 = vsub.s32 %v558, %v560
      %v562 = vrot.slane %v540, %v561
      %v564 = vunpack.c.l.s4 1966171168
      %v565 = vunpack.c.0.s8 %v564
      %v566 = vlaneseq
      %v567 = vshrl.u32 %v566, 7
      %v568 = vsub.s32 %v565, %v567
      %v569 = vrot.slane %v541, %v568
      %v570 = vcombine.high %v548, %v548
      %v571 = vcombine.high %v555, %v555
      %v572 = vcombine.high %v562, %v562
      %v573 = vcombine.high %v569, %v569
      %v574 = vcombine.low %v522, %v523
      %v575 = vcombine.high %v522, %v523
      %v577 = vunpack.c.l.s4 1966171168
      %v578 = vunpack.c.0.s8 %v577
      %v579 = vlaneseq
      %v580 = vshrl.u32 %v579, 7
      %v581 = vsub.s32 %v578, %v580
      %v582 = vrot.slane %v574, %v581
      %v584 = vunpack.c.l.s4 1966171168
      %v585 = vunpack.c.0.s8 %v584
      %v586 = vlaneseq
      %v587 = vshrl.u32 %v586, 7
      %v588 = vsub.s32 %v585, %v587
      %v589 = vrot.slane %v575, %v588
      %v590 = vcombine.high %v582, %v582
      %v591 = vcombine.high %v589, %v589
      %v593 = vunpack.c.l.s4 1966171168
      %v594 = vunpack.c.0.s8 %v593
      %v595 = vlaneseq
      %v596 = vshrl.u32 %v595, 7
      %v597 = vsub.s32 %v594, %v596
      %v598 = vrot.slane %v582, %v597
      %v600 = vunpack.c.l.s4 1966171168
      %v601 = vunpack.c.0.s8 %v600
      %v602 = vlaneseq
      %v603 = vshrl.u32 %v602, 7
      %v604 = vsub.s32 %v601, %v603
      %v605 = vrot.slane %v589, %v604
      %v607 = vunpack.c.l.s4 1966171168
      %v608 = vunpack.c.0.s8 %v607
      %v609 = vlaneseq
      %v610 = vshrl.u32 %v609, 7
      %v611 = vsub.s32 %v608, %v610
      %v612 = vrot.slane %v590, %v611
      %v614 = vunpack.c.l.s4 1966171168
      %v615 = vunpack.c.0.s8 %v614
      %v616 = vlaneseq
      %v617 = vshrl.u32 %v616, 7
      %v618 = vsub.s32 %v615, %v617
      %v619 = vrot.slane %v591, %v618
      %v620 = vcombine.high %v598, %v598
      %v621 = vcombine.high %v605, %v605
      %v622 = vcombine.high %v612, %v612
      %v623 = vcombine.high %v619, %v619
      %vm624 = vcmp.ne.s32.totalorder %v548, 0
      %vm625 = vcmp.ne.s32.totalorder %v562, 0
      %vm626 = vcmp.ne.s32.totalorder %v570, 0
      %vm627 = vcmp.ne.s32.totalorder %v572, 0
      %vm628 = vcmp.ne.s32.totalorder %v555, 0
      %vm629 = vcmp.ne.s32.totalorder %v569, 0
      %vm630 = vcmp.ne.s32.totalorder %v571, 0
      %vm631 = vcmp.ne.s32.totalorder %v573, 0
      %vm632 = vcmp.ne.s32.totalorder %v598, 0
      %vm633 = vcmp.ne.s32.totalorder %v612, 0
      %vm634 = vcmp.ne.s32.totalorder %v620, 0
      %vm635 = vcmp.ne.s32.totalorder %v622, 0
      %vm636 = vcmp.ne.s32.totalorder %v605, 0
      %vm637 = vcmp.ne.s32.totalorder %v619, 0
      %vm638 = vcmp.ne.s32.totalorder %v621, 0
      %vm639 = vcmp.ne.s32.totalorder %v623, 0
      %v640 = vsel %vm624, 1, 0
      %v641 = vsel %vm625, 1, 0
      %v642 = vsel %vm626, 1, 0
      %v643 = vsel %vm627, 1, 0
      %v644 = vsel %vm628, 1, 0
      %v645 = vsel %vm629, 1, 0
      %v646 = vsel %vm630, 1, 0
      %v647 = vsel %vm631, 1, 0
      %v648 = vsel %vm632, 1, 0
      %v649 = vsel %vm633, 1, 0
      %v650 = vsel %vm634, 1, 0
      %v651 = vsel %vm635, 1, 0
      %v652 = vsel %vm636, 1, 0
      %v653 = vsel %vm637, 1, 0
      %v654 = vsel %vm638, 1, 0
      %v655 = vsel %vm639, 1, 0
      %v656 = vlaneseq
      %v657 = vshrl.u32 %v656, 7
      %v658 = vsub.s32 0, %v657
      %v659 = vrot.slane %v640, %v658
      %v660 = vlaneseq
      %v661 = vshrl.u32 %v660, 7
      %v662 = vsub.s32 1, %v661
      %v663 = vrot.slane %v640, %v662
      %v664 = vlaneseq
      %v665 = vshrl.u32 %v664, 7
      %v666 = vsub.s32 0, %v665
      %v667 = vrot.slane %v641, %v666
      %v668 = vlaneseq
      %v669 = vshrl.u32 %v668, 7
      %v670 = vsub.s32 1, %v669
      %v671 = vrot.slane %v641, %v670
      %v672 = vlaneseq
      %v673 = vshrl.u32 %v672, 7
      %v674 = vsub.s32 0, %v673
      %v675 = vrot.slane %v642, %v674
      %v676 = vlaneseq
      %v677 = vshrl.u32 %v676, 7
      %v678 = vsub.s32 1, %v677
      %v679 = vrot.slane %v642, %v678
      %v680 = vlaneseq
      %v681 = vshrl.u32 %v680, 7
      %v682 = vsub.s32 0, %v681
      %v683 = vrot.slane %v643, %v682
      %v684 = vlaneseq
      %v685 = vshrl.u32 %v684, 7
      %v686 = vsub.s32 1, %v685
      %v687 = vrot.slane %v643, %v686
      %v688 = vlaneseq
      %v689 = vshrl.u32 %v688, 7
      %v690 = vsub.s32 0, %v689
      %v691 = vrot.slane %v644, %v690
      %v692 = vlaneseq
      %v693 = vshrl.u32 %v692, 7
      %v694 = vsub.s32 1, %v693
      %v695 = vrot.slane %v644, %v694
      %v696 = vlaneseq
      %v697 = vshrl.u32 %v696, 7
      %v698 = vsub.s32 0, %v697
      %v699 = vrot.slane %v645, %v698
      %v700 = vlaneseq
      %v701 = vshrl.u32 %v700, 7
      %v702 = vsub.s32 1, %v701
      %v703 = vrot.slane %v645, %v702
      %v704 = vlaneseq
      %v705 = vshrl.u32 %v704, 7
      %v706 = vsub.s32 0, %v705
      %v707 = vrot.slane %v646, %v706
      %v708 = vlaneseq
      %v709 = vshrl.u32 %v708, 7
      %v710 = vsub.s32 1, %v709
      %v711 = vrot.slane %v646, %v710
      %v712 = vlaneseq
      %v713 = vshrl.u32 %v712, 7
      %v714 = vsub.s32 0, %v713
      %v715 = vrot.slane %v647, %v714
      %v716 = vlaneseq
      %v717 = vshrl.u32 %v716, 7
      %v718 = vsub.s32 1, %v717
      %v719 = vrot.slane %v647, %v718
      %v720 = vlaneseq
      %v721 = vshrl.u32 %v720, 7
      %v722 = vsub.s32 0, %v721
      %v723 = vrot.slane %v648, %v722
      %v724 = vlaneseq
      %v725 = vshrl.u32 %v724, 7
      %v726 = vsub.s32 1, %v725
      %v727 = vrot.slane %v648, %v726
      %v728 = vlaneseq
      %v729 = vshrl.u32 %v728, 7
      %v730 = vsub.s32 0, %v729
      %v731 = vrot.slane %v649, %v730
      %v732 = vlaneseq
      %v733 = vshrl.u32 %v732, 7
      %v734 = vsub.s32 1, %v733
      %v735 = vrot.slane %v649, %v734
      %v736 = vlaneseq
      %v737 = vshrl.u32 %v736, 7
      %v738 = vsub.s32 0, %v737
      %v739 = vrot.slane %v650, %v738
      %v740 = vlaneseq
      %v741 = vshrl.u32 %v740, 7
      %v742 = vsub.s32 1, %v741
      %v743 = vrot.slane %v650, %v742
      %v744 = vlaneseq
      %v745 = vshrl.u32 %v744, 7
      %v746 = vsub.s32 0, %v745
      %v747 = vrot.slane %v651, %v746
      %v748 = vlaneseq
      %v749 = vshrl.u32 %v748, 7
      %v750 = vsub.s32 1, %v749
      %v751 = vrot.slane %v651, %v750
      %v752 = vlaneseq
      %v753 = vshrl.u32 %v752, 7
      %v754 = vsub.s32 0, %v753
      %v755 = vrot.slane %v652, %v754
      %v756 = vlaneseq
      %v757 = vshrl.u32 %v756, 7
      %v758 = vsub.s32 1, %v757
      %v759 = vrot.slane %v652, %v758
      %v760 = vlaneseq
      %v761 = vshrl.u32 %v760, 7
      %v762 = vsub.s32 0, %v761
      %v763 = vrot.slane %v653, %v762
      %v764 = vlaneseq
      %v765 = vshrl.u32 %v764, 7
      %v766 = vsub.s32 1, %v765
      %v767 = vrot.slane %v653, %v766
      %v768 = vlaneseq
      %v769 = vshrl.u32 %v768, 7
      %v770 = vsub.s32 0, %v769
      %v771 = vrot.slane %v654, %v770
      %v772 = vlaneseq
      %v773 = vshrl.u32 %v772, 7
      %v774 = vsub.s32 1, %v773
      %v775 = vrot.slane %v654, %v774
      %v776 = vlaneseq
      %v777 = vshrl.u32 %v776, 7
      %v778 = vsub.s32 0, %v777
      %v779 = vrot.slane %v655, %v778
      %v780 = vlaneseq
      %v781 = vshrl.u32 %v780, 7
      %v782 = vsub.s32 1, %v781
      %v783 = vrot.slane %v655, %v782
      %vm784 = vcmp.eq.s32.totalorder %v659, 1
      %vm785 = vcmp.eq.s32.totalorder %v663, 1
      %vm786 = vcmp.eq.s32.totalorder %v667, 1
      %vm787 = vcmp.eq.s32.totalorder %v671, 1
      %vm788 = vcmp.eq.s32.totalorder %v675, 1
      %vm789 = vcmp.eq.s32.totalorder %v679, 1
      %vm790 = vcmp.eq.s32.totalorder %v683, 1
      %vm791 = vcmp.eq.s32.totalorder %v687, 1
      %vm792 = vcmp.eq.s32.totalorder %v691, 1
      %vm793 = vcmp.eq.s32.totalorder %v695, 1
      %vm794 = vcmp.eq.s32.totalorder %v699, 1
      %vm795 = vcmp.eq.s32.totalorder %v703, 1
      %vm796 = vcmp.eq.s32.totalorder %v707, 1
      %vm797 = vcmp.eq.s32.totalorder %v711, 1
      %vm798 = vcmp.eq.s32.totalorder %v715, 1
      %vm799 = vcmp.eq.s32.totalorder %v719, 1
      %vm800 = vcmp.eq.s32.totalorder %v723, 1
      %vm801 = vcmp.eq.s32.totalorder %v727, 1
      %vm802 = vcmp.eq.s32.totalorder %v731, 1
      %vm803 = vcmp.eq.s32.totalorder %v735, 1
      %vm804 = vcmp.eq.s32.totalorder %v739, 1
      %vm805 = vcmp.eq.s32.totalorder %v743, 1
      %vm806 = vcmp.eq.s32.totalorder %v747, 1
      %vm807 = vcmp.eq.s32.totalorder %v751, 1
      %vm808 = vcmp.eq.s32.totalorder %v755, 1
      %vm809 = vcmp.eq.s32.totalorder %v759, 1
      %vm810 = vcmp.eq.s32.totalorder %v763, 1
      %vm811 = vcmp.eq.s32.totalorder %v767, 1
      %vm812 = vcmp.eq.s32.totalorder %v771, 1
      %vm813 = vcmp.eq.s32.totalorder %v775, 1
      %vm814 = vcmp.eq.s32.totalorder %v779, 1
      %vm815 = vcmp.eq.s32.totalorder %v783, 1
      %v816 = vsel %vm784, %v457, -1e+30
      %v817 = vsel %vm785, %v459, -1e+30
      %v818 = vsel %vm786, %v457, -1e+30
      %v819 = vsel %vm787, %v459, -1e+30
      %v820 = vsel %vm788, %v457, -1e+30
      %v821 = vsel %vm789, %v459, -1e+30
      %v822 = vsel %vm790, %v457, -1e+30
      %v823 = vsel %vm791, %v459, -1e+30
      %v824 = vsel %vm792, %v457, -1e+30
      %v825 = vsel %vm793, %v459, -1e+30
      %v826 = vsel %vm794, %v457, -1e+30
      %v827 = vsel %vm795, %v459, -1e+30
      %v828 = vsel %vm796, %v457, -1e+30
      %v829 = vsel %vm797, %v459, -1e+30
      %v830 = vsel %vm798, %v457, -1e+30
      %v831 = vsel %vm799, %v459, -1e+30
      %v832 = vsel %vm800, %v457, -1e+30
      %v833 = vsel %vm801, %v459, -1e+30
      %v834 = vsel %vm802, %v457, -1e+30
      %v835 = vsel %vm803, %v459, -1e+30
      %v836 = vsel %vm804, %v457, -1e+30
      %v837 = vsel %vm805, %v459, -1e+30
      %v838 = vsel %vm806, %v457, -1e+30
      %v839 = vsel %vm807, %v459, -1e+30
      %v840 = vsel %vm808, %v457, -1e+30
      %v841 = vsel %vm809, %v459, -1e+30
      %v842 = vsel %vm810, %v457, -1e+30
      %v843 = vsel %vm811, %v459, -1e+30
      %v844 = vsel %vm812, %v457, -1e+30
      %v845 = vsel %vm813, %v459, -1e+30
      %v846 = vsel %vm814, %v457, -1e+30
      %v847 = vsel %vm815, %v459, -1e+30
      %vm848 = vcmask 793600
      %v849 = vsel %vm848, %v817, -inf
      %v850 = vmax.f32 %v816, %v849
      %851 = vmax.xlane.f32.xlu0 %v850
      %v852 = vpop.xlane.xlu0 %851
      %v853 = vsel %vm848, %v819, -inf
      %v854 = vmax.f32 %v818, %v853
      %855 = vmax.xlane.f32.xlu0 %v854
      %v856 = vpop.xlane.xlu0 %855
      %v857 = vsel %vm848, %v821, -inf
      %v858 = vmax.f32 %v820, %v857
      %859 = vmax.xlane.f32.xlu0 %v858
      %v860 = vpop.xlane.xlu0 %859
      %v861 = vsel %vm848, %v823, -inf
      %v862 = vmax.f32 %v822, %v861
      %863 = vmax.xlane.f32.xlu0 %v862
      %v864 = vpop.xlane.xlu0 %863
      %v865 = vsel %vm848, %v825, -inf
      %v866 = vmax.f32 %v824, %v865
      %867 = vmax.xlane.f32.xlu0 %v866
      %v868 = vpop.xlane.xlu0 %867
      %v869 = vsel %vm848, %v827, -inf
      %v870 = vmax.f32 %v826, %v869
      %871 = vmax.xlane.f32.xlu0 %v870
      %v872 = vpop.xlane.xlu0 %871
      %v873 = vsel %vm848, %v829, -inf
      %v874 = vmax.f32 %v828, %v873
      %875 = vmax.xlane.f32.xlu0 %v874
      %v876 = vpop.xlane.xlu0 %875
      %v877 = vsel %vm848, %v831, -inf
      %v878 = vmax.f32 %v830, %v877
      %879 = vmax.xlane.f32.xlu0 %v878
      %v880 = vpop.xlane.xlu0 %879
      %v881 = vsel %vm848, %v833, -inf
      %v882 = vmax.f32 %v832, %v881
      %883 = vmax.xlane.f32.xlu0 %v882
      %v884 = vpop.xlane.xlu0 %883
      %v885 = vsel %vm848, %v835, -inf
      %v886 = vmax.f32 %v834, %v885
      %887 = vmax.xlane.f32.xlu0 %v886
      %v888 = vpop.xlane.xlu0 %887
      %v889 = vsel %vm848, %v837, -inf
      %v890 = vmax.f32 %v836, %v889
      %891 = vmax.xlane.f32.xlu0 %v890
      %v892 = vpop.xlane.xlu0 %891
      %v893 = vsel %vm848, %v839, -inf
      %v894 = vmax.f32 %v838, %v893
      %895 = vmax.xlane.f32.xlu0 %v894
      %v896 = vpop.xlane.xlu0 %895
      %v897 = vsel %vm848, %v841, -inf
      %v898 = vmax.f32 %v840, %v897
      %899 = vmax.xlane.f32.xlu0 %v898
      %v900 = vpop.xlane.xlu0 %899
      %v901 = vsel %vm848, %v843, -inf
      %v902 = vmax.f32 %v842, %v901
      %903 = vmax.xlane.f32.xlu0 %v902
      %v904 = vpop.xlane.xlu0 %903
      %v905 = vsel %vm848, %v845, -inf
      %v906 = vmax.f32 %v844, %v905
      %907 = vmax.xlane.f32.xlu0 %v906
      %v908 = vpop.xlane.xlu0 %907
      %v909 = vsel %vm848, %v847, -inf
      %v910 = vmax.f32 %v846, %v909
      %911 = vmax.xlane.f32.xlu0 %v910
      %v912 = vpop.xlane.xlu0 %911
      %v913 = vsub.f32 %v816, %v852
      %v914 = vsub.f32 %v817, %v852
      %v915 = vsub.f32 %v818, %v856
      %v916 = vsub.f32 %v819, %v856
      %v917 = vsub.f32 %v820, %v860
      %v918 = vsub.f32 %v821, %v860
      %v919 = vsub.f32 %v822, %v864
      %v920 = vsub.f32 %v823, %v864
      %v921 = vsub.f32 %v824, %v868
      %v922 = vsub.f32 %v825, %v868
      %v923 = vsub.f32 %v826, %v872
      %v924 = vsub.f32 %v827, %v872
      %v925 = vsub.f32 %v828, %v876
      %v926 = vsub.f32 %v829, %v876
      %v927 = vsub.f32 %v830, %v880
      %v928 = vsub.f32 %v831, %v880
      %v929 = vsub.f32 %v832, %v884
      %v930 = vsub.f32 %v833, %v884
      %v931 = vsub.f32 %v834, %v888
      %v932 = vsub.f32 %v835, %v888
      %v933 = vsub.f32 %v836, %v892
      %v934 = vsub.f32 %v837, %v892
      %v935 = vsub.f32 %v838, %v896
      %v936 = vsub.f32 %v839, %v896
      %v937 = vsub.f32 %v840, %v900
      %v938 = vsub.f32 %v841, %v900
      %v939 = vsub.f32 %v842, %v904
      %v940 = vsub.f32 %v843, %v904
      %v941 = vsub.f32 %v844, %v908
      %v942 = vsub.f32 %v845, %v908
      %v943 = vsub.f32 %v846, %v912
      %v944 = vsub.f32 %v847, %v912
      %v945 = vmul.f32 %v913, 1.442695
      %v946 = vpow.pop %v945
      %v947 = vmul.f32 %v914, 1.442695
      %v948 = vpow.pop %v947
      %v949 = vmul.f32 %v915, 1.442695
      %v950 = vpow.pop %v949
      %v951 = vmul.f32 %v916, 1.442695
      %v952 = vpow.pop %v951
      %v953 = vmul.f32 %v917, 1.442695
      %v954 = vpow.pop %v953
      %v955 = vmul.f32 %v918, 1.442695
      %v956 = vpow.pop %v955
      %v957 = vmul.f32 %v919, 1.442695
      %v958 = vpow.pop %v957
      %v959 = vmul.f32 %v920, 1.442695
      %v960 = vpow.pop %v959
      %v961 = vmul.f32 %v921, 1.442695
      %v962 = vpow.pop %v961
      %v963 = vmul.f32 %v922, 1.442695
      %v964 = vpow.pop %v963
      %v965 = vmul.f32 %v923, 1.442695
      %v966 = vpow.pop %v965
      %v967 = vmul.f32 %v924, 1.442695
      %v968 = vpow.pop %v967
      %v969 = vmul.f32 %v925, 1.442695
      %v970 = vpow.pop %v969
      %v971 = vmul.f32 %v926, 1.442695
      %v972 = vpow.pop %v971
      %v973 = vmul.f32 %v927, 1.442695
      %v974 = vpow.pop %v973
      %v975 = vmul.f32 %v928, 1.442695
      %v976 = vpow.pop %v975
      %v977 = vmul.f32 %v929, 1.442695
      %v978 = vpow.pop %v977
      %v979 = vmul.f32 %v930, 1.442695
      %v980 = vpow.pop %v979
      %v981 = vmul.f32 %v931, 1.442695
      %v982 = vpow.pop %v981
      %v983 = vmul.f32 %v932, 1.442695
      %v984 = vpow.pop %v983
      %v985 = vmul.f32 %v933, 1.442695
      %v986 = vpow.pop %v985
      %v987 = vmul.f32 %v934, 1.442695
      %v988 = vpow.pop %v987
      %v989 = vmul.f32 %v935, 1.442695
      %v990 = vpow.pop %v989
      %v991 = vmul.f32 %v936, 1.442695
      %v992 = vpow.pop %v991
      %v993 = vmul.f32 %v937, 1.442695
      %v994 = vpow.pop %v993
      %v995 = vmul.f32 %v938, 1.442695
      %v996 = vpow.pop %v995
      %v997 = vmul.f32 %v939, 1.442695
      %v998 = vpow.pop %v997
      %v999 = vmul.f32 %v940, 1.442695
      %v1000 = vpow.pop %v999
      %v1001 = vmul.f32 %v941, 1.442695
      %v1002 = vpow.pop %v1001
      %v1003 = vmul.f32 %v942, 1.442695
      %v1004 = vpow.pop %v1003
      %v1005 = vmul.f32 %v943, 1.442695
      %v1006 = vpow.pop %v1005
      %v1007 = vmul.f32 %v944, 1.442695
      %v1008 = vpow.pop %v1007
      %v1009 = vsel %vm848, %v948, 0.0
      %v1010 = vadd.f32 %v946, %v1009
      %1011 = vadd.xlane.f32.xlu0 %v1010
      %v1012 = vpop.xlane.xlu0 %1011
      %v1013 = vsel %vm848, %v952, 0.0
      %v1014 = vadd.f32 %v950, %v1013
      %1015 = vadd.xlane.f32.xlu0 %v1014
      %v1016 = vpop.xlane.xlu0 %1015
      %v1017 = vsel %vm848, %v956, 0.0
      %v1018 = vadd.f32 %v954, %v1017
      %1019 = vadd.xlane.f32.xlu0 %v1018
      %v1020 = vpop.xlane.xlu0 %1019
      %v1021 = vsel %vm848, %v960, 0.0
      %v1022 = vadd.f32 %v958, %v1021
      %1023 = vadd.xlane.f32.xlu0 %v1022
      %v1024 = vpop.xlane.xlu0 %1023
      %v1025 = vsel %vm848, %v964, 0.0
      %v1026 = vadd.f32 %v962, %v1025
      %1027 = vadd.xlane.f32.xlu0 %v1026
      %v1028 = vpop.xlane.xlu0 %1027
      %v1029 = vsel %vm848, %v968, 0.0
      %v1030 = vadd.f32 %v966, %v1029
      %1031 = vadd.xlane.f32.xlu0 %v1030
      %v1032 = vpop.xlane.xlu0 %1031
      %v1033 = vsel %vm848, %v972, 0.0
      %v1034 = vadd.f32 %v970, %v1033
      %1035 = vadd.xlane.f32.xlu0 %v1034
      %v1036 = vpop.xlane.xlu0 %1035
      %v1037 = vsel %vm848, %v976, 0.0
      %v1038 = vadd.f32 %v974, %v1037
      %1039 = vadd.xlane.f32.xlu0 %v1038
      %v1040 = vpop.xlane.xlu0 %1039
      %v1041 = vsel %vm848, %v980, 0.0
      %v1042 = vadd.f32 %v978, %v1041
      %1043 = vadd.xlane.f32.xlu0 %v1042
      %v1044 = vpop.xlane.xlu0 %1043
      %v1045 = vsel %vm848, %v984, 0.0
      %v1046 = vadd.f32 %v982, %v1045
      %1047 = vadd.xlane.f32.xlu0 %v1046
      %v1048 = vpop.xlane.xlu0 %1047
      %v1049 = vsel %vm848, %v988, 0.0
      %v1050 = vadd.f32 %v986, %v1049
      %1051 = vadd.xlane.f32.xlu0 %v1050
      %v1052 = vpop.xlane.xlu0 %1051
      %v1053 = vsel %vm848, %v992, 0.0
      %v1054 = vadd.f32 %v990, %v1053
      %1055 = vadd.xlane.f32.xlu0 %v1054
      %v1056 = vpop.xlane.xlu0 %1055
      %v1057 = vsel %vm848, %v996, 0.0
      %v1058 = vadd.f32 %v994, %v1057
      %1059 = vadd.xlane.f32.xlu0 %v1058
      %v1060 = vpop.xlane.xlu0 %1059
      %v1061 = vsel %vm848, %v1000, 0.0
      %v1062 = vadd.f32 %v998, %v1061
      %1063 = vadd.xlane.f32.xlu0 %v1062
      %v1064 = vpop.xlane.xlu0 %1063
      %v1065 = vsel %vm848, %v1004, 0.0
      %v1066 = vadd.f32 %v1002, %v1065
      %1067 = vadd.xlane.f32.xlu0 %v1066
      %v1068 = vpop.xlane.xlu0 %1067
      %v1069 = vsel %vm848, %v1008, 0.0
      %v1070 = vadd.f32 %v1006, %v1069
      %1071 = vadd.xlane.f32.xlu0 %v1070
      %v1072 = vpop.xlane.xlu0 %1071
      %vm1073 = vcmp.gt.f32.partialorder %v852, -1e+29
      %vm1074 = vcmp.gt.f32.partialorder %v856, -1e+29
      %vm1075 = vcmp.gt.f32.partialorder %v860, -1e+29
      %vm1076 = vcmp.gt.f32.partialorder %v864, -1e+29
      %vm1077 = vcmp.gt.f32.partialorder %v868, -1e+29
      %vm1078 = vcmp.gt.f32.partialorder %v872, -1e+29
      %vm1079 = vcmp.gt.f32.partialorder %v876, -1e+29
      %vm1080 = vcmp.gt.f32.partialorder %v880, -1e+29
      %vm1081 = vcmp.gt.f32.partialorder %v884, -1e+29
      %vm1082 = vcmp.gt.f32.partialorder %v888, -1e+29
      %vm1083 = vcmp.gt.f32.partialorder %v892, -1e+29
      %vm1084 = vcmp.gt.f32.partialorder %v896, -1e+29
      %vm1085 = vcmp.gt.f32.partialorder %v900, -1e+29
      %vm1086 = vcmp.gt.f32.partialorder %v904, -1e+29
      %vm1087 = vcmp.gt.f32.partialorder %v908, -1e+29
      %vm1088 = vcmp.gt.f32.partialorder %v912, -1e+29
      %v1089 = vmax.f32 %v1012, 1e-30
      %v1090 = vmax.f32 %v1016, 1e-30
      %v1091 = vmax.f32 %v1020, 1e-30
      %v1092 = vmax.f32 %v1024, 1e-30
      %v1093 = vmax.f32 %v1028, 1e-30
      %v1094 = vmax.f32 %v1032, 1e-30
      %v1095 = vmax.f32 %v1036, 1e-30
      %v1096 = vmax.f32 %v1040, 1e-30
      %v1097 = vmax.f32 %v1044, 1e-30
      %v1098 = vmax.f32 %v1048, 1e-30
      %v1099 = vmax.f32 %v1052, 1e-30
      %v1100 = vmax.f32 %v1056, 1e-30
      %v1101 = vmax.f32 %v1060, 1e-30
      %v1102 = vmax.f32 %v1064, 1e-30
      %v1103 = vmax.f32 %v1068, 1e-30
      %v1104 = vmax.f32 %v1072, 1e-30
      %v1105 = vrcp.pop %v1089
      %v1106 = vrcp.pop %v1090
      %v1107 = vrcp.pop %v1091
      %v1108 = vrcp.pop %v1092
      %v1109 = vrcp.pop %v1093
      %v1110 = vrcp.pop %v1094
      %v1111 = vrcp.pop %v1095
      %v1112 = vrcp.pop %v1096
      %v1113 = vrcp.pop %v1097
      %v1114 = vrcp.pop %v1098
      %v1115 = vrcp.pop %v1099
      %v1116 = vrcp.pop %v1100
      %v1117 = vrcp.pop %v1101
      %v1118 = vrcp.pop %v1102
      %v1119 = vrcp.pop %v1103
      %v1120 = vrcp.pop %v1104
      %v1121 = vsel %vm1073, %v1105, 0.0
      %v1122 = vsel %vm1074, %v1106, 0.0
      %v1123 = vsel %vm1075, %v1107, 0.0
      %v1124 = vsel %vm1076, %v1108, 0.0
      %v1125 = vsel %vm1077, %v1109, 0.0
      %v1126 = vsel %vm1078, %v1110, 0.0
      %v1127 = vsel %vm1079, %v1111, 0.0
      %v1128 = vsel %vm1080, %v1112, 0.0
      %v1129 = vsel %vm1081, %v1113, 0.0
      %v1130 = vsel %vm1082, %v1114, 0.0
      %v1131 = vsel %vm1083, %v1115, 0.0
      %v1132 = vsel %vm1084, %v1116, 0.0
      %v1133 = vsel %vm1085, %v1117, 0.0
      %v1134 = vsel %vm1086, %v1118, 0.0
      %v1135 = vsel %vm1087, %v1119, 0.0
      %v1136 = vsel %vm1088, %v1120, 0.0
      %v1137 = vpack.c.bf16 %v950, %v946
      %v1138 = vpack.c.bf16 %v952, %v948
      %v1139 = vpack.c.bf16 %v958, %v954
      %v1140 = vpack.c.bf16 %v960, %v956
      %v1141 = vpack.c.bf16 %v966, %v962
      %v1142 = vpack.c.bf16 %v968, %v964
      %v1143 = vpack.c.bf16 %v974, %v970
      %v1144 = vpack.c.bf16 %v976, %v972
      %v1145 = vpack.c.bf16 %v982, %v978
      %v1146 = vpack.c.bf16 %v984, %v980
      %v1147 = vpack.c.bf16 %v990, %v986
      %v1148 = vpack.c.bf16 %v992, %v988
      %v1149 = vpack.c.bf16 %v998, %v994
      %v1150 = vpack.c.bf16 %v1000, %v996
      %v1151 = vpack.c.bf16 %v1006, %v1002
      %v1152 = vpack.c.bf16 %v1008, %v1004
      %v1154 = vsel %vm848, %v1138, 0
      %v1157 = vsel %vm848, %v1140, 0
      %v1160 = vsel %vm848, %v1142, 0
      %v1163 = vsel %vm848, %v1144, 0
      %v1166 = vsel %vm848, %v1146, 0
      %v1169 = vsel %vm848, %v1148, 0
      %v1172 = vsel %vm848, %v1150, 0
      %v1175 = vsel %vm848, %v1152, 0
      %vm1177 = vcmask 1040384
      %v1178 = vsel 0, 4294967295, 65535
      %v1179 = vsel %vm1177, %v1178, 0
      %v1180 = vand.u32 %v370, %v1179
      %1182 = vmatprep.subr.bf16.mxu0 0
      %1183 = vmatpush1.bf16.msra.mxu0 %v363
      %1184 = vmatprep.subr.bf16.mxu0 0
      %1185 = vmatpush1.bf16.msra.mxu0 %v362
      %1186 = vmatprep.subr.bf16.mxu0 0
      %1187 = vmatpush1.bf16.msra.mxu0 %v361
      %1188 = vmatprep.subr.bf16.mxu0 0
      %1189 = vmatpush1.bf16.msra.mxu0 %v360
      %1190 = vmatprep.subr.bf16.mxu0 0
      %1191 = vmatpush1.bf16.msra.mxu0 %v359
      %1192 = vmatprep.subr.bf16.mxu0 0
      %1193 = vmatpush1.bf16.msra.mxu0 %v358
      %1194 = vmatprep.subr.bf16.mxu0 0
      %1195 = vmatpush1.bf16.msra.mxu0 %v357
      %1196 = vmatprep.subr.bf16.mxu0 0
      %1197 = vmatpush1.bf16.msra.mxu0 %v356
      %1198 = vmatprep.subr.bf16.mxu0 0
      %1199 = vmatpush2.bf16.msra.mxu0 0
      %1200 = vmatprep.subr.bf16.mxu0 0
      %1201 = vmatpush2.bf16.msra.mxu0 %v1180
      %1202 = vmatprep.subr.bf16.mxu0 0
      %1203 = vmatpush2.bf16.msra.mxu0 %v369
      %1204 = vmatprep.subr.bf16.mxu0 0
      %1205 = vmatpush2.bf16.msra.mxu0 %v368
      %1206 = vmatprep.subr.bf16.mxu0 0
      %1207 = vmatpush2.bf16.msra.mxu0 %v367
      %1208 = vmatprep.subr.bf16.mxu0 0
      %1209 = vmatpush2.bf16.msra.mxu0 %v366
      %1210 = vmatprep.subr.bf16.mxu0 0
      %1211 = vmatpush2.bf16.msra.mxu0 %v365
      %1212 = vmatprep.subr.bf16.mxu0 0
      %1213 = vmatpush2.bf16.msra.mxu0 %v364
      %1214 = vmatprep.mubr.bf16.mxu0 %v1154
      %1215 = vmatmul.mubr.bf16.gmra.mxu0 %v1137
      %v1216 = vpop.f32.mrf.mxu0
      %v1217 = vadd.f32 0.0, %v1216
      %v1218 = vpop.f32.mrf.mxu0
      %v1219 = vpop.f32.mrf.mxu0
      %v1220 = vadd.f32 0.0, %v1219
      %v1221 = vpop.f32.mrf.mxu0
      %1222 = vmatprep.mubr.bf16.mxu0 %v1157
      %1223 = vmatmul.mubr.bf16.gmra.mxu0 %v1139
      %v1224 = vpop.f32.mrf.mxu0
      %v1225 = vadd.f32 0.0, %v1224
      %v1226 = vpop.f32.mrf.mxu0
      %v1227 = vpop.f32.mrf.mxu0
      %v1228 = vadd.f32 0.0, %v1227
      %v1229 = vpop.f32.mrf.mxu0
      %1230 = vmatprep.mubr.bf16.mxu0 %v1160
      %1231 = vmatmul.mubr.bf16.gmra.mxu0 %v1141
      %v1232 = vpop.f32.mrf.mxu0
      %v1233 = vadd.f32 0.0, %v1232
      %v1234 = vpop.f32.mrf.mxu0
      %v1235 = vpop.f32.mrf.mxu0
      %v1236 = vadd.f32 0.0, %v1235
      %v1237 = vpop.f32.mrf.mxu0
      %1238 = vmatprep.mubr.bf16.mxu0 %v1163
      %1239 = vmatmul.mubr.bf16.gmra.mxu0 %v1143
      %v1240 = vpop.f32.mrf.mxu0
      %v1241 = vadd.f32 0.0, %v1240
      %v1242 = vpop.f32.mrf.mxu0
      %v1243 = vpop.f32.mrf.mxu0
      %v1244 = vadd.f32 0.0, %v1243
      %v1245 = vpop.f32.mrf.mxu0
      %1246 = vmatprep.mubr.bf16.mxu0 %v1166
      %1247 = vmatmul.mubr.bf16.gmra.mxu0 %v1145
      %v1248 = vpop.f32.mrf.mxu0
      %v1249 = vadd.f32 0.0, %v1248
      %v1250 = vpop.f32.mrf.mxu0
      %v1251 = vpop.f32.mrf.mxu0
      %v1252 = vadd.f32 0.0, %v1251
      %v1253 = vpop.f32.mrf.mxu0
      %1254 = vmatprep.mubr.bf16.mxu0 %v1169
      %1255 = vmatmul.mubr.bf16.gmra.mxu0 %v1147
      %v1256 = vpop.f32.mrf.mxu0
      %v1257 = vadd.f32 0.0, %v1256
      %v1258 = vpop.f32.mrf.mxu0
      %v1259 = vpop.f32.mrf.mxu0
      %v1260 = vadd.f32 0.0, %v1259
      %v1261 = vpop.f32.mrf.mxu0
      %1262 = vmatprep.mubr.bf16.mxu0 %v1172
      %1263 = vmatmul.mubr.bf16.gmra.mxu0 %v1149
      %v1264 = vpop.f32.mrf.mxu0
      %v1265 = vadd.f32 0.0, %v1264
      %v1266 = vpop.f32.mrf.mxu0
      %v1267 = vpop.f32.mrf.mxu0
      %v1268 = vadd.f32 0.0, %v1267
      %v1269 = vpop.f32.mrf.mxu0
      %1270 = vmatprep.mubr.bf16.mxu0 %v1175
      %1271 = vmatmul.mubr.bf16.gmra.mxu0 %v1151
      %v1272 = vpop.f32.mrf.mxu0
      %v1273 = vadd.f32 0.0, %v1272
      %v1274 = vpop.f32.mrf.mxu0
      %v1275 = vpop.f32.mrf.mxu0
      %v1276 = vadd.f32 0.0, %v1275
      %v1277 = vpop.f32.mrf.mxu0
      %1278 = vdwg.mxu0
      %v1279 = vmul.f32 %v1217, %v1121
      %v1280 = vmul.f32 %v1220, %v1122
      %v1281 = vmul.f32 %v1225, %v1123
      %v1282 = vmul.f32 %v1228, %v1124
      %v1283 = vmul.f32 %v1233, %v1125
      %v1284 = vmul.f32 %v1236, %v1126
      %v1285 = vmul.f32 %v1241, %v1127
      %v1286 = vmul.f32 %v1244, %v1128
      %v1287 = vmul.f32 %v1249, %v1129
      %v1288 = vmul.f32 %v1252, %v1130
      %v1289 = vmul.f32 %v1257, %v1131
      %v1290 = vmul.f32 %v1260, %v1132
      %v1291 = vmul.f32 %v1265, %v1133
      %v1292 = vmul.f32 %v1268, %v1134
      %v1293 = vmul.f32 %v1273, %v1135
      %v1294 = vmul.f32 %v1276, %v1136
      %v1295 = vld [vmem:[%s312] sm:$0xff]
      %v1296 = vld [vmem:[%s312 + $0x8] sm:$0xff]
      %v1297 = vld [vmem:[%s312 + $0x10] sm:$0xff]
      %v1298 = vld [vmem:[%s312 + $0x18] sm:$0xff]
      %v1299 = vld [vmem:[%s312 + $0x20] sm:$0xff]
      %v1300 = vld [vmem:[%s312 + $0x28] sm:$0xff]
      %v1301 = vld [vmem:[%s312 + $0x30] sm:$0xff]
      %v1302 = vld [vmem:[%s312 + $0x38] sm:$0xff]
      %v1303 = vld [vmem:[%s312 + $0x40] sm:$0xff]
      %v1304 = vld [vmem:[%s312 + $0x48] sm:$0xff]
      %v1305 = vld [vmem:[%s312 + $0x50] sm:$0xff]
      %v1306 = vld [vmem:[%s312 + $0x58] sm:$0xff]
      %v1307 = vld [vmem:[%s312 + $0x60] sm:$0xff]
      %v1308 = vld [vmem:[%s312 + $0x68] sm:$0xff]
      %v1309 = vld [vmem:[%s312 + $0x70] sm:$0xff]
      %v1310 = vld [vmem:[%s312 + $0x78] sm:$0xff]
      %v1311 = vpack.c.bf16 %v1280, %v1279
      %v1312 = vpack.c.bf16 %v1282, %v1281
      %v1313 = vpack.c.bf16 %v1284, %v1283
      %v1314 = vpack.c.bf16 %v1286, %v1285
      %v1315 = vpack.c.bf16 %v1288, %v1287
      %v1316 = vpack.c.bf16 %v1290, %v1289
      %v1317 = vpack.c.bf16 %v1292, %v1291
      %v1318 = vpack.c.bf16 %v1294, %v1293
      %v1319 = vld [vmem:[%s4] sm:$0xff]
      %v1320 = vld [vmem:[%s4 + $0x8] sm:$0xff]
      %v1321 = vld [vmem:[%s4 + $0x10] sm:$0xff]
      %v1322 = vld [vmem:[%s4 + $0x18] sm:$0xff]
      %v1323 = vpack.c.bf16 %v1320, %v1319
      %v1324 = vpack.c.bf16 %v1322, %v1321
      %v1325 = vld [vmem:[%s5] sm:$0x1]
      %v1327 = vlaneseq
      %v1328 = vshrl.u32 %v1327, 7
      %v1329 = vsub.s32 0, %v1328
      %v1330 = vrot.slane %v1325, %v1329
      %v1333 = vsel %vm373, %v1311, 0
      %v1336 = vsel %vm373, %v1312, 0
      %v1339 = vsel %vm373, %v1313, 0
      %v1342 = vsel %vm373, %v1314, 0
      %v1345 = vsel %vm373, %v1315, 0
      %v1348 = vsel %vm373, %v1316, 0
      %v1351 = vsel %vm373, %v1317, 0
      %v1354 = vsel %vm373, %v1318, 0
      %1356 = vmatprep.subr.bf16.mxu0 0
      %1357 = vmatpush1.bf16.msra.mxu0 0
      %1358 = vmatprep.subr.bf16.mxu0 0
      %1359 = vmatpush1.bf16.msra.mxu0 0
      %1360 = vmatprep.subr.bf16.mxu0 0
      %1361 = vmatpush1.bf16.msra.mxu0 0
      %1362 = vmatprep.subr.bf16.mxu0 0
      %1363 = vmatpush1.bf16.msra.mxu0 0
      %1364 = vmatprep.subr.bf16.mxu0 0
      %1365 = vmatpush1.bf16.msra.mxu0 0
      %1366 = vmatprep.subr.bf16.mxu0 0
      %1367 = vmatpush1.bf16.msra.mxu0 0
      %1368 = vmatprep.subr.bf16.mxu0 0
      %1369 = vmatpush1.bf16.msra.mxu0 %v1324
      %1370 = vmatprep.subr.bf16.mxu0 0
      %1371 = vmatpush1.bf16.msra.mxu0 %v1323
      %1372 = vmatprep.subr.bf16.mxu0 0
      %1373 = vmatpush2.bf16.msra.mxu0 0
      %1374 = vmatprep.subr.bf16.mxu0 0
      %1375 = vmatpush2.bf16.msra.mxu0 0
      %1376 = vmatprep.subr.bf16.mxu0 0
      %1377 = vmatpush2.bf16.msra.mxu0 0
      %1378 = vmatprep.subr.bf16.mxu0 0
      %1379 = vmatpush2.bf16.msra.mxu0 0
      %1380 = vmatprep.subr.bf16.mxu0 0
      %1381 = vmatpush2.bf16.msra.mxu0 0
      %1382 = vmatprep.subr.bf16.mxu0 0
      %1383 = vmatpush2.bf16.msra.mxu0 0
      %1384 = vmatprep.subr.bf16.mxu0 0
      %1385 = vmatpush2.bf16.msra.mxu0 0
      %1386 = vmatprep.subr.bf16.mxu0 0
      %1387 = vmatpush2.bf16.msra.mxu0 0
      %1388 = vmatprep.mubr.bf16.mxu0 0
      %1389 = vmatmul.mubr.bf16.gmra.mxu0 %v1333
      %v1390 = vpop.f32.mrf.mxu0
      %v1391 = vadd.f32 %v1330, %v1390
      %v1392 = vpop.f32.mrf.mxu0
      %v1393 = vpop.f32.mrf.mxu0
      %v1394 = vadd.f32 %v1330, %v1393
      %v1395 = vpop.f32.mrf.mxu0
      %1396 = vmatprep.mubr.bf16.mxu0 0
      %1397 = vmatmul.mubr.bf16.gmra.mxu0 %v1336
      %v1398 = vpop.f32.mrf.mxu0
      %v1399 = vadd.f32 %v1330, %v1398
      %v1400 = vpop.f32.mrf.mxu0
      %v1401 = vpop.f32.mrf.mxu0
      %v1402 = vadd.f32 %v1330, %v1401
      %v1403 = vpop.f32.mrf.mxu0
      %1404 = vmatprep.mubr.bf16.mxu0 0
      %1405 = vmatmul.mubr.bf16.gmra.mxu0 %v1339
      %v1406 = vpop.f32.mrf.mxu0
      %v1407 = vadd.f32 %v1330, %v1406
      %v1408 = vpop.f32.mrf.mxu0
      %v1409 = vpop.f32.mrf.mxu0
      %v1410 = vadd.f32 %v1330, %v1409
      %v1411 = vpop.f32.mrf.mxu0
      %1412 = vmatprep.mubr.bf16.mxu0 0
      %1413 = vmatmul.mubr.bf16.gmra.mxu0 %v1342
      %v1414 = vpop.f32.mrf.mxu0
      %v1415 = vadd.f32 %v1330, %v1414
      %v1416 = vpop.f32.mrf.mxu0
      %v1417 = vpop.f32.mrf.mxu0
      %v1418 = vadd.f32 %v1330, %v1417
      %v1419 = vpop.f32.mrf.mxu0
      %1420 = vmatprep.mubr.bf16.mxu0 0
      %1421 = vmatmul.mubr.bf16.gmra.mxu0 %v1345
      %v1422 = vpop.f32.mrf.mxu0
      %v1423 = vadd.f32 %v1330, %v1422
      %v1424 = vpop.f32.mrf.mxu0
      %v1425 = vpop.f32.mrf.mxu0
      %v1426 = vadd.f32 %v1330, %v1425
      %v1427 = vpop.f32.mrf.mxu0
      %1428 = vmatprep.mubr.bf16.mxu0 0
      %1429 = vmatmul.mubr.bf16.gmra.mxu0 %v1348
      %v1430 = vpop.f32.mrf.mxu0
      %v1431 = vadd.f32 %v1330, %v1430
      %v1432 = vpop.f32.mrf.mxu0
      %v1433 = vpop.f32.mrf.mxu0
      %v1434 = vadd.f32 %v1330, %v1433
      %v1435 = vpop.f32.mrf.mxu0
      %1436 = vmatprep.mubr.bf16.mxu0 0
      %1437 = vmatmul.mubr.bf16.gmra.mxu0 %v1351
      %v1438 = vpop.f32.mrf.mxu0
      %v1439 = vadd.f32 %v1330, %v1438
      %v1440 = vpop.f32.mrf.mxu0
      %v1441 = vpop.f32.mrf.mxu0
      %v1442 = vadd.f32 %v1330, %v1441
      %v1443 = vpop.f32.mrf.mxu0
      %1444 = vmatprep.mubr.bf16.mxu0 0
      %1445 = vmatmul.mubr.bf16.gmra.mxu0 %v1354
      %v1446 = vpop.f32.mrf.mxu0
      %v1447 = vadd.f32 %v1330, %v1446
      %v1448 = vpop.f32.mrf.mxu0
      %v1449 = vpop.f32.mrf.mxu0
      %v1450 = vadd.f32 %v1330, %v1449
      %v1451 = vpop.f32.mrf.mxu0
      %1452 = vdwg.mxu0
      %v1453 = vmul.f32 %v1295, %v1279
      %v1454 = vmul.f32 %v1296, %v1280
      %v1455 = vmul.f32 %v1297, %v1281
      %v1456 = vmul.f32 %v1298, %v1282
      %v1457 = vmul.f32 %v1299, %v1283
      %v1458 = vmul.f32 %v1300, %v1284
      %v1459 = vmul.f32 %v1301, %v1285
      %v1460 = vmul.f32 %v1302, %v1286
      %v1461 = vmul.f32 %v1303, %v1287
      %v1462 = vmul.f32 %v1304, %v1288
      %v1463 = vmul.f32 %v1305, %v1289
      %v1464 = vmul.f32 %v1306, %v1290
      %v1465 = vmul.f32 %v1307, %v1291
      %v1466 = vmul.f32 %v1308, %v1292
      %v1467 = vmul.f32 %v1309, %v1293
      %v1468 = vmul.f32 %v1310, %v1294
      %v1469 = vsel %vm373, %v1453, 0.0
      %1470 = vadd.xlane.f32.xlu0 %v1469
      %v1471 = vpop.xlane.xlu0 %1470
      %v1472 = vsel %vm373, %v1454, 0.0
      %1473 = vadd.xlane.f32.xlu0 %v1472
      %v1474 = vpop.xlane.xlu0 %1473
      %v1475 = vsel %vm373, %v1455, 0.0
      %1476 = vadd.xlane.f32.xlu0 %v1475
      %v1477 = vpop.xlane.xlu0 %1476
      %v1478 = vsel %vm373, %v1456, 0.0
      %1479 = vadd.xlane.f32.xlu0 %v1478
      %v1480 = vpop.xlane.xlu0 %1479
      %v1481 = vsel %vm373, %v1457, 0.0
      %1482 = vadd.xlane.f32.xlu0 %v1481
      %v1483 = vpop.xlane.xlu0 %1482
      %v1484 = vsel %vm373, %v1458, 0.0
      %1485 = vadd.xlane.f32.xlu0 %v1484
      %v1486 = vpop.xlane.xlu0 %1485
      %v1487 = vsel %vm373, %v1459, 0.0
      %1488 = vadd.xlane.f32.xlu0 %v1487
      %v1489 = vpop.xlane.xlu0 %1488
      %v1490 = vsel %vm373, %v1460, 0.0
      %1491 = vadd.xlane.f32.xlu0 %v1490
      %v1492 = vpop.xlane.xlu0 %1491
      %v1493 = vsel %vm373, %v1461, 0.0
      %1494 = vadd.xlane.f32.xlu0 %v1493
      %v1495 = vpop.xlane.xlu0 %1494
      %v1496 = vsel %vm373, %v1462, 0.0
      %1497 = vadd.xlane.f32.xlu0 %v1496
      %v1498 = vpop.xlane.xlu0 %1497
      %v1499 = vsel %vm373, %v1463, 0.0
      %1500 = vadd.xlane.f32.xlu0 %v1499
      %v1501 = vpop.xlane.xlu0 %1500
      %v1502 = vsel %vm373, %v1464, 0.0
      %1503 = vadd.xlane.f32.xlu0 %v1502
      %v1504 = vpop.xlane.xlu0 %1503
      %v1505 = vsel %vm373, %v1465, 0.0
      %1506 = vadd.xlane.f32.xlu0 %v1505
      %v1507 = vpop.xlane.xlu0 %1506
      %v1508 = vsel %vm373, %v1466, 0.0
      %1509 = vadd.xlane.f32.xlu0 %v1508
      %v1510 = vpop.xlane.xlu0 %1509
      %v1511 = vsel %vm373, %v1467, 0.0
      %1512 = vadd.xlane.f32.xlu0 %v1511
      %v1513 = vpop.xlane.xlu0 %1512
      %v1514 = vsel %vm373, %v1468, 0.0
      %1515 = vadd.xlane.f32.xlu0 %v1514
      %v1516 = vpop.xlane.xlu0 %1515
      %v1517 = vadd.f32 %v1391, %v1471
      %v1518 = vadd.f32 %v1394, %v1474
      %v1519 = vadd.f32 %v1399, %v1477
      %v1520 = vadd.f32 %v1402, %v1480
      %v1521 = vadd.f32 %v1407, %v1483
      %v1522 = vadd.f32 %v1410, %v1486
      %v1523 = vadd.f32 %v1415, %v1489
      %v1524 = vadd.f32 %v1418, %v1492
      %v1525 = vadd.f32 %v1423, %v1495
      %v1526 = vadd.f32 %v1426, %v1498
      %v1527 = vadd.f32 %v1431, %v1501
      %v1528 = vadd.f32 %v1434, %v1504
      %v1529 = vadd.f32 %v1439, %v1507
      %v1530 = vadd.f32 %v1442, %v1510
      %v1531 = vadd.f32 %v1447, %v1513
      %v1532 = vadd.f32 %v1450, %v1516
      %vm1533 = vcmask 64512
      %v1534 = vsel %vm1533, %v1517, -inf
      %1535 = vmax.xlane.f32.xlu0 %v1534
      %v1536 = vpop.xlane.xlu0 %1535
      %v1537 = vsel %vm1533, %v1518, -inf
      %1538 = vmax.xlane.f32.xlu0 %v1537
      %v1539 = vpop.xlane.xlu0 %1538
      %v1540 = vsel %vm1533, %v1519, -inf
      %1541 = vmax.xlane.f32.xlu0 %v1540
      %v1542 = vpop.xlane.xlu0 %1541
      %v1543 = vsel %vm1533, %v1520, -inf
      %1544 = vmax.xlane.f32.xlu0 %v1543
      %v1545 = vpop.xlane.xlu0 %1544
      %v1546 = vsel %vm1533, %v1521, -inf
      %1547 = vmax.xlane.f32.xlu0 %v1546
      %v1548 = vpop.xlane.xlu0 %1547
      %v1549 = vsel %vm1533, %v1522, -inf
      %1550 = vmax.xlane.f32.xlu0 %v1549
      %v1551 = vpop.xlane.xlu0 %1550
      %v1552 = vsel %vm1533, %v1523, -inf
      %1553 = vmax.xlane.f32.xlu0 %v1552
      %v1554 = vpop.xlane.xlu0 %1553
      %v1555 = vsel %vm1533, %v1524, -inf
      %1556 = vmax.xlane.f32.xlu0 %v1555
      %v1557 = vpop.xlane.xlu0 %1556
      %v1558 = vsel %vm1533, %v1525, -inf
      %1559 = vmax.xlane.f32.xlu0 %v1558
      %v1560 = vpop.xlane.xlu0 %1559
      %v1561 = vsel %vm1533, %v1526, -inf
      %1562 = vmax.xlane.f32.xlu0 %v1561
      %v1563 = vpop.xlane.xlu0 %1562
      %v1564 = vsel %vm1533, %v1527, -inf
      %1565 = vmax.xlane.f32.xlu0 %v1564
      %v1566 = vpop.xlane.xlu0 %1565
      %v1567 = vsel %vm1533, %v1528, -inf
      %1568 = vmax.xlane.f32.xlu0 %v1567
      %v1569 = vpop.xlane.xlu0 %1568
      %v1570 = vsel %vm1533, %v1529, -inf
      %1571 = vmax.xlane.f32.xlu0 %v1570
      %v1572 = vpop.xlane.xlu0 %1571
      %v1573 = vsel %vm1533, %v1530, -inf
      %1574 = vmax.xlane.f32.xlu0 %v1573
      %v1575 = vpop.xlane.xlu0 %1574
      %v1576 = vsel %vm1533, %v1531, -inf
      %1577 = vmax.xlane.f32.xlu0 %v1576
      %v1578 = vpop.xlane.xlu0 %1577
      %v1579 = vsel %vm1533, %v1532, -inf
      %1580 = vmax.xlane.f32.xlu0 %v1579
      %v1581 = vpop.xlane.xlu0 %1580
      %v1582 = vsub.f32 %v1517, %v1536
      %v1583 = vsub.f32 %v1518, %v1539
      %v1584 = vsub.f32 %v1519, %v1542
      %v1585 = vsub.f32 %v1520, %v1545
      %v1586 = vsub.f32 %v1521, %v1548
      %v1587 = vsub.f32 %v1522, %v1551
      %v1588 = vsub.f32 %v1523, %v1554
      %v1589 = vsub.f32 %v1524, %v1557
      %v1590 = vsub.f32 %v1525, %v1560
      %v1591 = vsub.f32 %v1526, %v1563
      %v1592 = vsub.f32 %v1527, %v1566
      %v1593 = vsub.f32 %v1528, %v1569
      %v1594 = vsub.f32 %v1529, %v1572
      %v1595 = vsub.f32 %v1530, %v1575
      %v1596 = vsub.f32 %v1531, %v1578
      %v1597 = vsub.f32 %v1532, %v1581
      %v1598 = vmul.f32 %v1582, 1.442695
      %v1599 = vpow.pop %v1598
      %v1600 = vmul.f32 %v1583, 1.442695
      %v1601 = vpow.pop %v1600
      %v1602 = vmul.f32 %v1584, 1.442695
      %v1603 = vpow.pop %v1602
      %v1604 = vmul.f32 %v1585, 1.442695
      %v1605 = vpow.pop %v1604
      %v1606 = vmul.f32 %v1586, 1.442695
      %v1607 = vpow.pop %v1606
      %v1608 = vmul.f32 %v1587, 1.442695
      %v1609 = vpow.pop %v1608
      %v1610 = vmul.f32 %v1588, 1.442695
      %v1611 = vpow.pop %v1610
      %v1612 = vmul.f32 %v1589, 1.442695
      %v1613 = vpow.pop %v1612
      %v1614 = vmul.f32 %v1590, 1.442695
      %v1615 = vpow.pop %v1614
      %v1616 = vmul.f32 %v1591, 1.442695
      %v1617 = vpow.pop %v1616
      %v1618 = vmul.f32 %v1592, 1.442695
      %v1619 = vpow.pop %v1618
      %v1620 = vmul.f32 %v1593, 1.442695
      %v1621 = vpow.pop %v1620
      %v1622 = vmul.f32 %v1594, 1.442695
      %v1623 = vpow.pop %v1622
      %v1624 = vmul.f32 %v1595, 1.442695
      %v1625 = vpow.pop %v1624
      %v1626 = vmul.f32 %v1596, 1.442695
      %v1627 = vpow.pop %v1626
      %v1628 = vmul.f32 %v1597, 1.442695
      %v1629 = vpow.pop %v1628
      %v1630 = vsel %vm1533, %v1599, 0.0
      %1631 = vadd.xlane.f32.xlu0 %v1630
      %v1632 = vpop.xlane.xlu0 %1631
      %v1633 = vsel %vm1533, %v1601, 0.0
      %1634 = vadd.xlane.f32.xlu0 %v1633
      %v1635 = vpop.xlane.xlu0 %1634
      %v1636 = vsel %vm1533, %v1603, 0.0
      %1637 = vadd.xlane.f32.xlu0 %v1636
      %v1638 = vpop.xlane.xlu0 %1637
      %v1639 = vsel %vm1533, %v1605, 0.0
      %1640 = vadd.xlane.f32.xlu0 %v1639
      %v1641 = vpop.xlane.xlu0 %1640
      %v1642 = vsel %vm1533, %v1607, 0.0
      %1643 = vadd.xlane.f32.xlu0 %v1642
      %v1644 = vpop.xlane.xlu0 %1643
      %v1645 = vsel %vm1533, %v1609, 0.0
      %1646 = vadd.xlane.f32.xlu0 %v1645
      %v1647 = vpop.xlane.xlu0 %1646
      %v1648 = vsel %vm1533, %v1611, 0.0
      %1649 = vadd.xlane.f32.xlu0 %v1648
      %v1650 = vpop.xlane.xlu0 %1649
      %v1651 = vsel %vm1533, %v1613, 0.0
      %1652 = vadd.xlane.f32.xlu0 %v1651
      %v1653 = vpop.xlane.xlu0 %1652
      %v1654 = vsel %vm1533, %v1615, 0.0
      %1655 = vadd.xlane.f32.xlu0 %v1654
      %v1656 = vpop.xlane.xlu0 %1655
      %v1657 = vsel %vm1533, %v1617, 0.0
      %1658 = vadd.xlane.f32.xlu0 %v1657
      %v1659 = vpop.xlane.xlu0 %1658
      %v1660 = vsel %vm1533, %v1619, 0.0
      %1661 = vadd.xlane.f32.xlu0 %v1660
      %v1662 = vpop.xlane.xlu0 %1661
      %v1663 = vsel %vm1533, %v1621, 0.0
      %1664 = vadd.xlane.f32.xlu0 %v1663
      %v1665 = vpop.xlane.xlu0 %1664
      %v1666 = vsel %vm1533, %v1623, 0.0
      %1667 = vadd.xlane.f32.xlu0 %v1666
      %v1668 = vpop.xlane.xlu0 %1667
      %v1669 = vsel %vm1533, %v1625, 0.0
      %1670 = vadd.xlane.f32.xlu0 %v1669
      %v1671 = vpop.xlane.xlu0 %1670
      %v1672 = vsel %vm1533, %v1627, 0.0
      %1673 = vadd.xlane.f32.xlu0 %v1672
      %v1674 = vpop.xlane.xlu0 %1673
      %v1675 = vsel %vm1533, %v1629, 0.0
      %1676 = vadd.xlane.f32.xlu0 %v1675
      %v1677 = vpop.xlane.xlu0 %1676
      %v1678 = vlog2.pop %v1632
      %v1679 = vmul.f32 %v1678, 0.6931472
      %v1680 = vlog2.pop %v1635
      %v1681 = vmul.f32 %v1680, 0.6931472
      %v1682 = vlog2.pop %v1638
      %v1683 = vmul.f32 %v1682, 0.6931472
      %v1684 = vlog2.pop %v1641
      %v1685 = vmul.f32 %v1684, 0.6931472
      %v1686 = vlog2.pop %v1644
      %v1687 = vmul.f32 %v1686, 0.6931472
      %v1688 = vlog2.pop %v1647
      %v1689 = vmul.f32 %v1688, 0.6931472
      %v1690 = vlog2.pop %v1650
      %v1691 = vmul.f32 %v1690, 0.6931472
      %v1692 = vlog2.pop %v1653
      %v1693 = vmul.f32 %v1692, 0.6931472
      %v1694 = vlog2.pop %v1656
      %v1695 = vmul.f32 %v1694, 0.6931472
      %v1696 = vlog2.pop %v1659
      %v1697 = vmul.f32 %v1696, 0.6931472
      %v1698 = vlog2.pop %v1662
      %v1699 = vmul.f32 %v1698, 0.6931472
      %v1700 = vlog2.pop %v1665
      %v1701 = vmul.f32 %v1700, 0.6931472
      %v1702 = vlog2.pop %v1668
      %v1703 = vmul.f32 %v1702, 0.6931472
      %v1704 = vlog2.pop %v1671
      %v1705 = vmul.f32 %v1704, 0.6931472
      %v1706 = vlog2.pop %v1674
      %v1707 = vmul.f32 %v1706, 0.6931472
      %v1708 = vlog2.pop %v1677
      %v1709 = vmul.f32 %v1708, 0.6931472
      %v1710 = vsub.f32 %v1582, %v1679
      %v1711 = vsub.f32 %v1583, %v1681
      %v1712 = vsub.f32 %v1584, %v1683
      %v1713 = vsub.f32 %v1585, %v1685
      %v1714 = vsub.f32 %v1586, %v1687
      %v1715 = vsub.f32 %v1587, %v1689
      %v1716 = vsub.f32 %v1588, %v1691
      %v1717 = vsub.f32 %v1589, %v1693
      %v1718 = vsub.f32 %v1590, %v1695
      %v1719 = vsub.f32 %v1591, %v1697
      %v1720 = vsub.f32 %v1592, %v1699
      %v1721 = vsub.f32 %v1593, %v1701
      %v1722 = vsub.f32 %v1594, %v1703
      %v1723 = vsub.f32 %v1595, %v1705
      %v1724 = vsub.f32 %v1596, %v1707
      %v1725 = vsub.f32 %v1597, %v1709
      %v1726 = vld [vmem:[%s318] sm:$0xff]
      %v1727 = vld [vmem:[%s318 + $0x8] sm:$0xff]
      %v1728 = vld [vmem:[%s318 + $0x10] sm:$0xff]
      %v1729 = vld [vmem:[%s318 + $0x18] sm:$0xff]
      %v1730 = vld [vmem:[%s318 + $0x20] sm:$0xff]
      %v1731 = vld [vmem:[%s318 + $0x28] sm:$0xff]
      %v1732 = vld [vmem:[%s318 + $0x30] sm:$0xff]
      %v1733 = vld [vmem:[%s318 + $0x38] sm:$0xff]
      %v1734 = vld [vmem:[%s318 + $0x40] sm:$0xff]
      %v1735 = vld [vmem:[%s318 + $0x48] sm:$0xff]
      %v1736 = vld [vmem:[%s318 + $0x50] sm:$0xff]
      %v1737 = vld [vmem:[%s318 + $0x58] sm:$0xff]
      %v1738 = vld [vmem:[%s318 + $0x60] sm:$0xff]
      %v1739 = vld [vmem:[%s318 + $0x68] sm:$0xff]
      %v1740 = vld [vmem:[%s318 + $0x70] sm:$0xff]
      %v1741 = vld [vmem:[%s318 + $0x78] sm:$0xff]
      %1742 = vset.pattern.permute.xlu0 0
      %1743 = vperm.xlu0 %1742, %v1726
      %v1744 = vpop.permute.xlu0 %1743
      %1745 = vset.pattern.permute.xlu0 0
      %1746 = vperm.xlu0 %1745, %v1727
      %v1747 = vpop.permute.xlu0 %1746
      %1748 = vset.pattern.permute.xlu0 0
      %1749 = vperm.xlu0 %1748, %v1728
      %v1750 = vpop.permute.xlu0 %1749
      %1751 = vset.pattern.permute.xlu0 0
      %1752 = vperm.xlu0 %1751, %v1729
      %v1753 = vpop.permute.xlu0 %1752
      %1754 = vset.pattern.permute.xlu0 0
      %1755 = vperm.xlu0 %1754, %v1730
      %v1756 = vpop.permute.xlu0 %1755
      %1757 = vset.pattern.permute.xlu0 0
      %1758 = vperm.xlu0 %1757, %v1731
      %v1759 = vpop.permute.xlu0 %1758
      %1760 = vset.pattern.permute.xlu0 0
      %1761 = vperm.xlu0 %1760, %v1732
      %v1762 = vpop.permute.xlu0 %1761
      %1763 = vset.pattern.permute.xlu0 0
      %1764 = vperm.xlu0 %1763, %v1733
      %v1765 = vpop.permute.xlu0 %1764
      %1766 = vset.pattern.permute.xlu0 0
      %1767 = vperm.xlu0 %1766, %v1734
      %v1768 = vpop.permute.xlu0 %1767
      %1769 = vset.pattern.permute.xlu0 0
      %1770 = vperm.xlu0 %1769, %v1735
      %v1771 = vpop.permute.xlu0 %1770
      %1772 = vset.pattern.permute.xlu0 0
      %1773 = vperm.xlu0 %1772, %v1736
      %v1774 = vpop.permute.xlu0 %1773
      %1775 = vset.pattern.permute.xlu0 0
      %1776 = vperm.xlu0 %1775, %v1737
      %v1777 = vpop.permute.xlu0 %1776
      %1778 = vset.pattern.permute.xlu0 0
      %1779 = vperm.xlu0 %1778, %v1738
      %v1780 = vpop.permute.xlu0 %1779
      %1781 = vset.pattern.permute.xlu0 0
      %1782 = vperm.xlu0 %1781, %v1739
      %v1783 = vpop.permute.xlu0 %1782
      %1784 = vset.pattern.permute.xlu0 0
      %1785 = vperm.xlu0 %1784, %v1740
      %v1786 = vpop.permute.xlu0 %1785
      %1787 = vset.pattern.permute.xlu0 0
      %1788 = vperm.xlu0 %1787, %v1741
      %v1789 = vpop.permute.xlu0 %1788
      %vm1790 = vcmp.eq.s32.totalorder %v466, %v1744
      %vm1791 = vcmp.eq.s32.totalorder %v466, %v1747
      %vm1792 = vcmp.eq.s32.totalorder %v466, %v1750
      %vm1793 = vcmp.eq.s32.totalorder %v466, %v1753
      %vm1794 = vcmp.eq.s32.totalorder %v466, %v1756
      %vm1795 = vcmp.eq.s32.totalorder %v466, %v1759
      %vm1796 = vcmp.eq.s32.totalorder %v466, %v1762
      %vm1797 = vcmp.eq.s32.totalorder %v466, %v1765
      %vm1798 = vcmp.eq.s32.totalorder %v466, %v1768
      %vm1799 = vcmp.eq.s32.totalorder %v466, %v1771
      %vm1800 = vcmp.eq.s32.totalorder %v466, %v1774
      %vm1801 = vcmp.eq.s32.totalorder %v466, %v1777
      %vm1802 = vcmp.eq.s32.totalorder %v466, %v1780
      %vm1803 = vcmp.eq.s32.totalorder %v466, %v1783
      %vm1804 = vcmp.eq.s32.totalorder %v466, %v1786
      %vm1805 = vcmp.eq.s32.totalorder %v466, %v1789
      %v1806 = vsel %vm1790, %v1710, 0.0
      %v1807 = vsel %vm1791, %v1711, 0.0
      %v1808 = vsel %vm1792, %v1712, 0.0
      %v1809 = vsel %vm1793, %v1713, 0.0
      %v1810 = vsel %vm1794, %v1714, 0.0
      %v1811 = vsel %vm1795, %v1715, 0.0
      %v1812 = vsel %vm1796, %v1716, 0.0
      %v1813 = vsel %vm1797, %v1717, 0.0
      %v1814 = vsel %vm1798, %v1718, 0.0
      %v1815 = vsel %vm1799, %v1719, 0.0
      %v1816 = vsel %vm1800, %v1720, 0.0
      %v1817 = vsel %vm1801, %v1721, 0.0
      %v1818 = vsel %vm1802, %v1722, 0.0
      %v1819 = vsel %vm1803, %v1723, 0.0
      %v1820 = vsel %vm1804, %v1724, 0.0
      %v1821 = vsel %vm1805, %v1725, 0.0
      %v1822 = vsel %vm1533, %v1806, 0.0
      %1823 = vadd.xlane.f32.xlu0 %v1822
      %v1824 = vpop.xlane.xlu0 %1823
      %v1825 = vsel %vm1533, %v1807, 0.0
      %1826 = vadd.xlane.f32.xlu0 %v1825
      %v1827 = vpop.xlane.xlu0 %1826
      %v1828 = vsel %vm1533, %v1808, 0.0
      %1829 = vadd.xlane.f32.xlu0 %v1828
      %v1830 = vpop.xlane.xlu0 %1829
      %v1831 = vsel %vm1533, %v1809, 0.0
      %1832 = vadd.xlane.f32.xlu0 %v1831
      %v1833 = vpop.xlane.xlu0 %1832
      %v1834 = vsel %vm1533, %v1810, 0.0
      %1835 = vadd.xlane.f32.xlu0 %v1834
      %v1836 = vpop.xlane.xlu0 %1835
      %v1837 = vsel %vm1533, %v1811, 0.0
      %1838 = vadd.xlane.f32.xlu0 %v1837
      %v1839 = vpop.xlane.xlu0 %1838
      %v1840 = vsel %vm1533, %v1812, 0.0
      %1841 = vadd.xlane.f32.xlu0 %v1840
      %v1842 = vpop.xlane.xlu0 %1841
      %v1843 = vsel %vm1533, %v1813, 0.0
      %1844 = vadd.xlane.f32.xlu0 %v1843
      %v1845 = vpop.xlane.xlu0 %1844
      %v1846 = vsel %vm1533, %v1814, 0.0
      %1847 = vadd.xlane.f32.xlu0 %v1846
      %v1848 = vpop.xlane.xlu0 %1847
      %v1849 = vsel %vm1533, %v1815, 0.0
      %1850 = vadd.xlane.f32.xlu0 %v1849
      %v1851 = vpop.xlane.xlu0 %1850
      %v1852 = vsel %vm1533, %v1816, 0.0
      %1853 = vadd.xlane.f32.xlu0 %v1852
      %v1854 = vpop.xlane.xlu0 %1853
      %v1855 = vsel %vm1533, %v1817, 0.0
      %1856 = vadd.xlane.f32.xlu0 %v1855
      %v1857 = vpop.xlane.xlu0 %1856
      %v1858 = vsel %vm1533, %v1818, 0.0
      %1859 = vadd.xlane.f32.xlu0 %v1858
      %v1860 = vpop.xlane.xlu0 %1859
      %v1861 = vsel %vm1533, %v1819, 0.0
      %1862 = vadd.xlane.f32.xlu0 %v1861
      %v1863 = vpop.xlane.xlu0 %1862
      %v1864 = vsel %vm1533, %v1820, 0.0
      %1865 = vadd.xlane.f32.xlu0 %v1864
      %v1866 = vpop.xlane.xlu0 %1865
      %v1867 = vsel %vm1533, %v1821, 0.0
      %1868 = vadd.xlane.f32.xlu0 %v1867
      %v1869 = vpop.xlane.xlu0 %1868
      %v1886 = vlaneseq
      %v1887 = vshrl.u32 %v1886, 7
      %v1888 = vsub.s32 %v466, %v1887
      %v1889 = vrot.slane %v1824, %v1888
      %v1890 = vlaneseq
      %v1891 = vshrl.u32 %v1890, 7
      %v1892 = vsub.s32 %v466, %v1891
      %v1893 = vrot.slane %v1827, %v1892
      %v1894 = vlaneseq
      %v1895 = vshrl.u32 %v1894, 7
      %v1896 = vsub.s32 %v466, %v1895
      %v1897 = vrot.slane %v1830, %v1896
      %v1898 = vlaneseq
      %v1899 = vshrl.u32 %v1898, 7
      %v1900 = vsub.s32 %v466, %v1899
      %v1901 = vrot.slane %v1833, %v1900
      %v1902 = vlaneseq
      %v1903 = vshrl.u32 %v1902, 7
      %v1904 = vsub.s32 %v466, %v1903
      %v1905 = vrot.slane %v1836, %v1904
      %v1906 = vlaneseq
      %v1907 = vshrl.u32 %v1906, 7
      %v1908 = vsub.s32 %v466, %v1907
      %v1909 = vrot.slane %v1839, %v1908
      %v1910 = vlaneseq
      %v1911 = vshrl.u32 %v1910, 7
      %v1912 = vsub.s32 %v466, %v1911
      %v1913 = vrot.slane %v1842, %v1912
      %v1914 = vlaneseq
      %v1915 = vshrl.u32 %v1914, 7
      %v1916 = vsub.s32 %v466, %v1915
      %v1917 = vrot.slane %v1845, %v1916
      %v1918 = vlaneseq
      %v1919 = vshrl.u32 %v1918, 7
      %v1920 = vsub.s32 %v466, %v1919
      %v1921 = vrot.slane %v1848, %v1920
      %v1922 = vlaneseq
      %v1923 = vshrl.u32 %v1922, 7
      %v1924 = vsub.s32 %v466, %v1923
      %v1925 = vrot.slane %v1851, %v1924
      %v1926 = vlaneseq
      %v1927 = vshrl.u32 %v1926, 7
      %v1928 = vsub.s32 %v466, %v1927
      %v1929 = vrot.slane %v1854, %v1928
      %v1930 = vlaneseq
      %v1931 = vshrl.u32 %v1930, 7
      %v1932 = vsub.s32 %v466, %v1931
      %v1933 = vrot.slane %v1857, %v1932
      %v1934 = vlaneseq
      %v1935 = vshrl.u32 %v1934, 7
      %v1936 = vsub.s32 %v466, %v1935
      %v1937 = vrot.slane %v1860, %v1936
      %v1938 = vlaneseq
      %v1939 = vshrl.u32 %v1938, 7
      %v1940 = vsub.s32 %v466, %v1939
      %v1941 = vrot.slane %v1863, %v1940
      %v1942 = vlaneseq
      %v1943 = vshrl.u32 %v1942, 7
      %v1944 = vsub.s32 %v466, %v1943
      %v1945 = vrot.slane %v1866, %v1944
      %v1946 = vlaneseq
      %v1947 = vshrl.u32 %v1946, 7
      %v1948 = vsub.s32 %v466, %v1947
      %v1949 = vrot.slane %v1869, %v1948
      %vm1950 = vcmask 1041409
      %v1951 = vsel %vm1950, %v1893, %v1889
      %vm1952 = vcmask 1042434
      %v1953 = vsel %vm1952, %v1897, %v1951
      %vm1954 = vcmask 1043459
      %v1955 = vsel %vm1954, %v1901, %v1953
      %vm1956 = vcmask 1044484
      %v1957 = vsel %vm1956, %v1905, %v1955
      %vm1958 = vcmask 1045509
      %v1959 = vsel %vm1958, %v1909, %v1957
      %vm1960 = vcmask 1046534
      %v1961 = vsel %vm1960, %v1913, %v1959
      %vm1962 = vcmask 1047559
      %v1963 = vsel %vm1962, %v1917, %v1961
      %v1964 = vsel %vm1950, %v1925, %v1921
      %v1965 = vsel %vm1952, %v1929, %v1964
      %v1966 = vsel %vm1954, %v1933, %v1965
      %v1967 = vsel %vm1956, %v1937, %v1966
      %v1968 = vsel %vm1958, %v1941, %v1967
      %v1969 = vsel %vm1960, %v1945, %v1968
      %v1970 = vsel %vm1962, %v1949, %v1969
      %1973 = vst.msk [vmem:[%s324] sm:$0xff] %vm1533, %v1963
      %1974 = vst.msk [vmem:[%s324 + $0x8] sm:$0xff] %vm1533, %v1970
      %s1975 = smul.u32 2, %s18
      %p1976 = scmp.lt.s32.totalorder %s1975, 7
      %s1977 = scalar_select %p1976, %s1975, 7
      %s1978 = smul.addr %s1977, 8
      %s1979 = scalar_lea.vmem %s7, %s1978
      // Predicated region
      $region49: #{multire_apply.1} parent=47 // pred_check
        %p1980 = pneg %p198
      $region50: #{multire_apply.1} parent=47 // pred_check_branch
        %1982 = sbr.rel (%p1980) target = $region52
      $region51: #{multire_apply.1} parent=47 // pred_region
        %s1983 = smul.u32 2, %s18
      $region52: #{multire_apply.1} parent=47 // pred_fallthru
        _
    $region48: #{multire_apply.1} parent=5 // pred_fallthru
      _
    %p1984 = scmp.le.s32.totalorder 2, %s13
    // Predicated region
    $region53: #{multire_apply.1} parent=5 // pred_check
      %p1985 = pneg %p1984
    $region54: #{multire_apply.1} parent=5 // pred_check_branch
      %1987 = sbr.rel (%p1985) target = $region56
    $region55: #{multire_apply.1} parent=5 // pred_region
      %s1988 = ssub.s32 %s13, 2
      // Predicated region
      $region57: #{multire_apply.1} parent=55 // pred_check
        %p1989 = pneg %p204
      $region58: #{multire_apply.1} parent=55 // pred_check_branch
        %1991 = sbr.rel (%p1989) target = $region60
      $region59: #{multire_apply.1} parent=55 // pred_region
        %s1992 = smul.u32 2, %s19
        %p1993 = scmp.lt.s32.totalorder %s1992, 7
        %s1994 = scalar_select %p1993, %s1992, 7
        %s1995 = smul.addr %s1994, 8
        %s1996 = scalar_lea.vmem %s7, %s1995
      $region60: #{multire_apply.1} parent=55 // pred_fallthru
        _
    $region56: #{multire_apply.1} parent=5 // pred_fallthru
      _
  $region6: #{multire_apply.1} parent=0 // loop_footer
    %s17 = sadd.s32 1, %s13
  $region7: #{multire_apply.1} parent=0 // loop_footer_branch
    %12 = sbr.rel target = $region3
  $region8: #{multire_apply.1} parent=0 // loop_exit
    _

// kernel: multire_apply.1
$region0: #{multire_apply.1}
  #allocation0 [shape = 'u32[]', space=smem, size = 0x4, offset = 0x4, fixed_abs, tag = 'smem constant byte address 0x4 - core index']
  #allocation1 [shape = 'u32[144,128]{1,0:T(1,128)}', space=vmem, size = 0x12000, scoped, tag = 'internal scratch']
  %s0 = inlined_call_operand.vmem [shape: s32[64,4], index: 0, kind: input, shape index: {}]
  %s1 = inlined_call_operand.vmem [shape: f32[8,32], index: 1, kind: input, shape index: {}]
  %s2 = inlined_call_operand.vmem [shape: f32[225,32], index: 2, kind: input, shape index: {}]
  %s3 = inlined_call_operand.vmem [shape: f32[64,8,32], index: 3, kind: input, shape index: {}]
  %s4 = inlined_call_operand.vmem [shape: f32[32,8], index: 4, kind: input, shape index: {}]
  %s5 = inlined_call_operand.vmem [shape: f32[1,8], index: 5, kind: input, shape index: {}]
  %s6 = inlined_call_operand.vmem [shape: s32[64,8,1], index: 6, kind: input, shape index: {}]
  %s7 = inlined_call_operand.vmem [shape: f32[64,8], index: 7, kind: output, shape index: {}]
  %s8 = sld [smem:[#allocation0]]
  $region61: #{multire_apply.1} parent=0
    _
  %s10 = ssub.s32 1, %s8
  %s11 = scalar_select 0, %s10, %s8
  loop: start=0, step=1, limit=6
  $region2: #{multire_apply.1} parent=0 // loop_pre_header
    _
  $region3: #{multire_apply.1} parent=0 // loop_header
    %s13 = sphi 0, %s17
    %p14 = scmp.ge.s32.totalorder %s13, 6
    %s23 = sphi 0, %s25
    %s26 = sphi 0, %s23
    %s27 = sphi 0, %s26
    %s43 = sphi 0, %s27
    %s47 = sphi 0, %s47
    %s49 = sphi 0, %s47
    %s50 = sphi 0, %s49
    %s64 = sphi 0, %s50
    %s68 = sphi 0, %s68
    %s70 = sphi 0, %s68
    %s71 = sphi 0, %s70
    %s85 = sphi 0, %s71
    %s91 = sphi 0, %s93
    %s94 = sphi 0, %s91
    %s95 = sphi 0, %s94
    %s111 = sphi 0, %s95
    %s115 = sphi 0, %s115
    %s117 = sphi 0, %s115
    %s118 = sphi 0, %s117
    %s132 = sphi 0, %s118
    %s136 = sphi 0, %s136
    %s138 = sphi 0, %s136
    %s139 = sphi 0, %s138
    %s153 = sphi 0, %s139
    %s159 = sphi 0, %s161
    %s162 = sphi 0, %s159
    %s163 = sphi 0, %s162
    %s179 = sphi 0, %s163
    %s185 = sphi 0, %s187
    %s188 = sphi 0, %s185
    %s189 = sphi 0, %s188
    %s205 = sphi 0, %s189
  $region4: #{multire_apply.1} parent=0 // loop_header_branch
    %16 = sbr.rel (%p14) target = $region8
  $region5: #{multire_apply.1} parent=0 // loop_body
    %s18 = ssub.s32 %s13, 1
    %s19 = ssub.s32 %s13, 2
    %s20 = sadd.s32 %s13, 1
    %s21 = ssub.s32 %s13, %s20
    %p22 = scmp.eq.s32.totalorder %s21, 0
    %s24 = sadd.s32 %s23, 1
    %s25 = scalar_select %p22, %s23, %s24
    %p28 = pneg %p22
    %p29 = scmp.eq.s32.totalorder %s13, 3
    %p30 = por %p28, %p29
    %p31 = scmp.ne.s32.totalorder %s23, %s26
    %p32 = scmp.eq.s32.totalorder %s13, 0
    %p33 = por %p31, %p32
    %p34 = scmp.ne.s32.totalorder %s23, %s26
    %p35 = scmp.eq.s32.totalorder %s18, 3
    %p36 = por %p34, %p35
    %p37 = scmp.ne.s32.totalorder %s26, %s27
    %p38 = scmp.eq.s32.totalorder %s18, 0
    %p39 = por %p37, %p38
    %p40 = scmp.ne.s32.totalorder %s26, %s27
    %p41 = scmp.eq.s32.totalorder %s19, 3
    %p42 = por %p40, %p41
    %p44 = scmp.ne.s32.totalorder %s27, %s43
    %p45 = scmp.eq.s32.totalorder %s19, 0
    %p46 = por %p44, %p45
    %s48 = sadd.s32 %s47, 1
    %p51 = scmp.eq.s32.totalorder %s13, 3
    %p52 = scmp.ne.s32.totalorder %s47, %s49
    %p53 = scmp.eq.s32.totalorder %s13, 0
    %p54 = por %p52, %p53
    %p55 = scmp.ne.s32.totalorder %s47, %s49
    %p56 = scmp.eq.s32.totalorder %s18, 3
    %p57 = por %p55, %p56
    %p58 = scmp.ne.s32.totalorder %s49, %s50
    %p59 = scmp.eq.s32.totalorder %s18, 0
    %p60 = por %p58, %p59
    %p61 = scmp.ne.s32.totalorder %s49, %s50
    %p62 = scmp.eq.s32.totalorder %s19, 3
    %p63 = por %p61, %p62
    %p65 = scmp.ne.s32.totalorder %s50, %s64
    %p66 = scmp.eq.s32.totalorder %s19, 0
    %p67 = por %p65, %p66
    %s69 = sadd.s32 %s68, 1
    %p72 = scmp.eq.s32.totalorder %s13, 3
    %p73 = scmp.ne.s32.totalorder %s68, %s70
    %p74 = scmp.eq.s32.totalorder %s13, 0
    %p75 = por %p73, %p74
    %p76 = scmp.ne.s32.totalorder %s68, %s70
    %p77 = scmp.eq.s32.totalorder %s18, 3
    %p78 = por %p76, %p77
    %p79 = scmp.ne.s32.totalorder %s70, %s71
    %p80 = scmp.eq.s32.totalorder %s18, 0
    %p81 = por %p79, %p80
    %p82 = scmp.ne.s32.totalorder %s70, %s71
    %p83 = scmp.eq.s32.totalorder %s19, 3
    %p84 = por %p82, %p83
    %p86 = scmp.ne.s32.totalorder %s71, %s85
    %p87 = scmp.eq.s32.totalorder %s19, 0
    %p88 = por %p86, %p87
    %s89 = ssub.s32 %s13, %s20
    %p90 = scmp.eq.s32.totalorder %s89, 0
    %s92 = sadd.s32 %s91, 1
    %s93 = scalar_select %p90, %s91, %s92
    %p96 = pneg %p90
    %p97 = scmp.eq.s32.totalorder %s13, 3
    %p98 = por %p96, %p97
    %p99 = scmp.ne.s32.totalorder %s91, %s94
    %p100 = scmp.eq.s32.totalorder %s13, 0
    %p101 = por %p99, %p100
    %p102 = scmp.ne.s32.totalorder %s91, %s94
    %p103 = scmp.eq.s32.totalorder %s18, 3
    %p104 = por %p102, %p103
    %p105 = scmp.ne.s32.totalorder %s94, %s95
    %p106 = scmp.eq.s32.totalorder %s18, 0
    %p107 = por %p105, %p106
    %p108 = scmp.ne.s32.totalorder %s94, %s95
    %p109 = scmp.eq.s32.totalorder %s19, 3
    %p110 = por %p108, %p109
    %p112 = scmp.ne.s32.totalorder %s95, %s111
    %p113 = scmp.eq.s32.totalorder %s19, 0
    %p114 = por %p112, %p113
    %s116 = sadd.s32 %s115, 1
    %p119 = scmp.eq.s32.totalorder %s13, 3
    %p120 = scmp.ne.s32.totalorder %s115, %s117
    %p121 = scmp.eq.s32.totalorder %s13, 0
    %p122 = por %p120, %p121
    %p123 = scmp.ne.s32.totalorder %s115, %s117
    %p124 = scmp.eq.s32.totalorder %s18, 3
    %p125 = por %p123, %p124
    %p126 = scmp.ne.s32.totalorder %s117, %s118
    %p127 = scmp.eq.s32.totalorder %s18, 0
    %p128 = por %p126, %p127
    %p129 = scmp.ne.s32.totalorder %s117, %s118
    %p130 = scmp.eq.s32.totalorder %s19, 3
    %p131 = por %p129, %p130
    %p133 = scmp.ne.s32.totalorder %s118, %s132
    %p134 = scmp.eq.s32.totalorder %s19, 0
    %p135 = por %p133, %p134
    %s137 = sadd.s32 %s136, 1
    %p140 = scmp.eq.s32.totalorder %s13, 3
    %p141 = scmp.ne.s32.totalorder %s136, %s138
    %p142 = scmp.eq.s32.totalorder %s13, 0
    %p143 = por %p141, %p142
    %p144 = scmp.ne.s32.totalorder %s136, %s138
    %p145 = scmp.eq.s32.totalorder %s18, 3
    %p146 = por %p144, %p145
    %p147 = scmp.ne.s32.totalorder %s138, %s139
    %p148 = scmp.eq.s32.totalorder %s18, 0
    %p149 = por %p147, %p148
    %p150 = scmp.ne.s32.totalorder %s138, %s139
    %p151 = scmp.eq.s32.totalorder %s19, 3
    %p152 = por %p150, %p151
    %p154 = scmp.ne.s32.totalorder %s139, %s153
    %p155 = scmp.eq.s32.totalorder %s19, 0
    %p156 = por %p154, %p155
    %s157 = ssub.s32 %s13, %s20
    %p158 = scmp.eq.s32.totalorder %s157, 0
    %s160 = sadd.s32 %s159, 1
    %s161 = scalar_select %p158, %s159, %s160
    %p164 = pneg %p158
    %p165 = scmp.eq.s32.totalorder %s13, 3
    %p166 = por %p164, %p165
    %p167 = scmp.ne.s32.totalorder %s159, %s162
    %p168 = scmp.eq.s32.totalorder %s13, 0
    %p169 = por %p167, %p168
    %p170 = scmp.ne.s32.totalorder %s159, %s162
    %p171 = scmp.eq.s32.totalorder %s18, 3
    %p172 = por %p170, %p171
    %p173 = scmp.ne.s32.totalorder %s162, %s163
    %p174 = scmp.eq.s32.totalorder %s18, 0
    %p175 = por %p173, %p174
    %p176 = scmp.ne.s32.totalorder %s162, %s163
    %p177 = scmp.eq.s32.totalorder %s19, 3
    %p178 = por %p176, %p177
    %p180 = scmp.ne.s32.totalorder %s163, %s179
    %p181 = scmp.eq.s32.totalorder %s19, 0
    %p182 = por %p180, %p181
    %s183 = ssub.s32 %s13, %s20
    %p184 = scmp.eq.s32.totalorder %s183, 0
    %s186 = sadd.s32 %s185, 1
    %s187 = scalar_select %p184, %s185, %s186
    %p190 = pneg %p184
    %p191 = scmp.eq.s32.totalorder %s13, 3
    %p192 = por %p190, %p191
    %p193 = scmp.ne.s32.totalorder %s185, %s188
    %p194 = scmp.eq.s32.totalorder %s13, 0
    %p195 = por %p193, %p194
    %p196 = scmp.ne.s32.totalorder %s185, %s188
    %p197 = scmp.eq.s32.totalorder %s18, 3
    %p198 = por %p196, %p197
    %p199 = scmp.ne.s32.totalorder %s188, %s189
    %p200 = scmp.eq.s32.totalorder %s18, 0
    %p201 = por %p199, %p200
    %p202 = scmp.ne.s32.totalorder %s188, %s189
    %p203 = scmp.eq.s32.totalorder %s19, 3
    %p204 = por %p202, %p203
    %p206 = scmp.ne.s32.totalorder %s189, %s205
    %p207 = scmp.eq.s32.totalorder %s19, 0
    %p208 = por %p206, %p207
    %p209 = scmp.le.s32.totalorder 1, %s13
    %p210 = scmp.lt.s32.totalorder %s13, 5
    %p211 = pnand %p209, %p210
    %p212 = pneg %p211
    // Predicated region
    $region9: #{multire_apply.1} parent=5 // pred_check
      _
    $region10: #{multire_apply.1} parent=5 // pred_check_branch
      %214 = sbr.rel (%p211) target = $region12
    $region11: #{multire_apply.1} parent=5 // pred_region
      %s215 = ssub.s32 %s13, 1
      // Predicated region
      $region13: #{multire_apply.1} parent=11 // pred_check
        %p216 = pneg %p60
      $region14: #{multire_apply.1} parent=11 // pred_check_branch
        %218 = sbr.rel (%p216) target = $region16
      $region15: #{multire_apply.1} parent=11 // pred_region
        _
      $region16: #{multire_apply.1} parent=11 // pred_fallthru
        _
      // Predicated region
      $region17: #{multire_apply.1} parent=11 // pred_check
        %p219 = pneg %p81
      $region18: #{multire_apply.1} parent=11 // pred_check_branch
        %221 = sbr.rel (%p219) target = $region20
      $region19: #{multire_apply.1} parent=11 // pred_region
        _
      $region20: #{multire_apply.1} parent=11 // pred_fallthru
        _
      // Predicated region
      $region21: #{multire_apply.1} parent=11 // pred_check
        %p222 = pneg %p128
      $region22: #{multire_apply.1} parent=11 // pred_check_branch
        %224 = sbr.rel (%p222) target = $region24
      $region23: #{multire_apply.1} parent=11 // pred_region
        _
      $region24: #{multire_apply.1} parent=11 // pred_fallthru
        _
      // Predicated region
      $region25: #{multire_apply.1} parent=11 // pred_check
        %p225 = pneg %p149
      $region26: #{multire_apply.1} parent=11 // pred_check_branch
        %227 = sbr.rel (%p225) target = $region28
      $region27: #{multire_apply.1} parent=11 // pred_region
        _
      $region28: #{multire_apply.1} parent=11 // pred_fallthru
        _
    $region12: #{multire_apply.1} parent=5 // pred_fallthru
      _
    %p228 = scmp.lt.s32.totalorder %s13, 4
    // Predicated region
    $region29: #{multire_apply.1} parent=5 // pred_check
      %p229 = pneg %p228
    $region30: #{multire_apply.1} parent=5 // pred_check_branch
      %231 = sbr.rel (%p229) target = $region32
    $region31: #{multire_apply.1} parent=5 // pred_region
      // Predicated region
      $region33: #{multire_apply.1} parent=31 // pred_check
        %p232 = pneg %p33
      $region34: #{multire_apply.1} parent=31 // pred_check_branch
        %234 = sbr.rel (%p232) target = $region36
      $region35: #{multire_apply.1} parent=31 // pred_region
        %s235 = smul.u32 2, %s13
        %p236 = scmp.lt.s32.totalorder %s235, 7
        %s237 = scalar_select %p236, %s235, 7
        %s238 = smul.addr %s237, 8
        %s239 = scalar_lea.vmem %s0, %s238
        %s240 = smul.u32 2, %s13
      $region36: #{multire_apply.1} parent=31 // pred_fallthru
        _
      // Predicated region
      $region37: #{multire_apply.1} parent=31 // pred_check
        %p241 = pneg %p101
      $region38: #{multire_apply.1} parent=31 // pred_check_branch
        %243 = sbr.rel (%p241) target = $region40
      $region39: #{multire_apply.1} parent=31 // pred_region
        %s244 = smul.u32 16, %s13
        %p245 = scmp.lt.s32.totalorder %s244, 63
        %s246 = scalar_select %p245, %s244, 63
        %s247 = smul.addr %s246, 8
        %s248 = scalar_lea.vmem %s3, %s247
        %s249 = smul.u32 16, %s13
      $region40: #{multire_apply.1} parent=31 // pred_fallthru
        _
      // Predicated region
      $region41: #{multire_apply.1} parent=31 // pred_check
        %p250 = pneg %p169
      $region42: #{multire_apply.1} parent=31 // pred_check_branch
        %252 = sbr.rel (%p250) target = $region44
      $region43: #{multire_apply.1} parent=31 // pred_region
        %s253 = smul.u32 16, %s13
        %p254 = scmp.lt.s32.totalorder %s253, 63
        %s255 = scalar_select %p254, %s253, 63
        %s256 = smul.addr %s255, 8
        %s257 = scalar_lea.vmem %s6, %s256
        %s258 = smul.u32 16, %s13
      $region44: #{multire_apply.1} parent=31 // pred_fallthru
        _
    $region32: #{multire_apply.1} parent=5 // pred_fallthru
      _
    %p259 = scmp.le.s32.totalorder 1, %s13
    %p260 = scmp.lt.s32.totalorder %s13, 5
    %p261 = pnand %p259, %p260
    %p262 = pneg %p261
    // Predicated region
    $region45: #{multire_apply.1} parent=5 // pred_check
      _
    $region46: #{multire_apply.1} parent=5 // pred_check_branch
      %264 = sbr.rel (%p261) target = $region48
    $region47: #{multire_apply.1} parent=5 // pred_region
      %s265 = ssub.s32 %s13, 1
      %s266 = smul.u32 2, %s18
      %p267 = scmp.lt.s32.totalorder %s266, 7
      %s268 = scalar_select %p267, %s266, 7
      %s269 = smul.addr %s268, 8
      %s270 = scalar_lea.vmem %s0, %s269
      %p271 = pneg %p39
      %p272 = pneg %p36
      %p273 = pneg %p60
      %p274 = pneg %p57
      %p275 = pneg %p81
      %p276 = pneg %p78
      %s277 = smul.u32 16, %s18
      %p278 = scmp.lt.s32.totalorder %s277, 63
      %s279 = scalar_select %p278, %s277, 63
      %s280 = smul.addr %s279, 8
      %s281 = scalar_lea.vmem %s3, %s280
      %p282 = pneg %p107
      %p283 = pneg %p104
      %p284 = pneg %p128
      %p285 = pneg %p125
      %p286 = pneg %p149
      %p287 = pneg %p146
      %s288 = smul.u32 16, %s18
      %p289 = scmp.lt.s32.totalorder %s288, 63
      %s290 = scalar_select %p289, %s288, 63
      %s291 = smul.addr %s290, 8
      %s292 = scalar_lea.vmem %s6, %s291
      %p293 = pneg %p175
      %p294 = pneg %p172
      %p295 = pneg %p201
      %p296 = pneg %p198
      %s297 = smul.u32 2, %s18
      %p298 = scmp.lt.s32.totalorder %s297, 7
      %s299 = scalar_select %p298, %s297, 7
      %s300 = smul.addr %s299, 8
      %s301 = scalar_lea.vmem %s7, %s300
      %s302 = smul.u32 2, %s18
      %p303 = scmp.lt.s32.totalorder %s302, 7
      %s304 = scalar_select %p303, %s302, 7
      %s305 = smul.addr %s304, 8
      %s306 = scalar_lea.vmem %s0, %s305
      %s307 = smul.u32 2, %s18
      %s308 = smul.u32 16, %s18
      %p309 = scmp.lt.s32.totalorder %s308, 63
      %s310 = scalar_select %p309, %s308, 63
      %s311 = smul.addr %s310, 8
      %s312 = scalar_lea.vmem %s3, %s311
      %s313 = smul.u32 16, %s18
      %s314 = smul.u32 16, %s18
      %p315 = scmp.lt.s32.totalorder %s314, 63
      %s316 = scalar_select %p315, %s314, 63
      %s317 = smul.addr %s316, 8
      %s318 = scalar_lea.vmem %s6, %s317
      %s319 = smul.u32 16, %s18
      %s320 = smul.u32 2, %s18
      %p321 = scmp.lt.s32.totalorder %s320, 7
      %s322 = scalar_select %p321, %s320, 7
      %s323 = smul.addr %s322, 8
      %s324 = scalar_lea.vmem %s7, %s323
      %s325 = smul.u32 2, %s18
      %v327 = vld [vmem:[%s2] sm:$0xff]
      %v328 = vld [vmem:[%s2 + $0x8] sm:$0xff]
      %v329 = vld [vmem:[%s2 + $0x10] sm:$0xff]
      %v330 = vld [vmem:[%s2 + $0x18] sm:$0xff]
      %v331 = vld [vmem:[%s2 + $0x20] sm:$0xff]
      %v332 = vld [vmem:[%s2 + $0x28] sm:$0xff]
      %v333 = vld [vmem:[%s2 + $0x30] sm:$0xff]
      %v334 = vld [vmem:[%s2 + $0x38] sm:$0xff]
      %v335 = vld [vmem:[%s2 + $0x40] sm:$0xff]
      %v336 = vld [vmem:[%s2 + $0x48] sm:$0xff]
      %v337 = vld [vmem:[%s2 + $0x50] sm:$0xff]
      %v338 = vld [vmem:[%s2 + $0x58] sm:$0xff]
      %v339 = vld [vmem:[%s2 + $0x60] sm:$0xff]
      %v340 = vld [vmem:[%s2 + $0x68] sm:$0xff]
      %v341 = vld [vmem:[%s2 + $0x70] sm:$0xff]
      %v342 = vld [vmem:[%s2 + $0x78] sm:$0xff]
      %v343 = vld [vmem:[%s2 + $0x80] sm:$0xff]
      %v344 = vld [vmem:[%s2 + $0x88] sm:$0xff]
      %v345 = vld [vmem:[%s2 + $0x90] sm:$0xff]
      %v346 = vld [vmem:[%s2 + $0x98] sm:$0xff]
      %v347 = vld [vmem:[%s2 + $0xa0] sm:$0xff]
      %v348 = vld [vmem:[%s2 + $0xa8] sm:$0xff]
      %v349 = vld [vmem:[%s2 + $0xb0] sm:$0xff]
      %v350 = vld [vmem:[%s2 + $0xb8] sm:$0xff]
      %v351 = vld [vmem:[%s2 + $0xc0] sm:$0xff]
      %v352 = vld [vmem:[%s2 + $0xc8] sm:$0xff]
      %v353 = vld [vmem:[%s2 + $0xd0] sm:$0xff]
      %v354 = vld [vmem:[%s2 + $0xd8] sm:$0xff]
      %v355 = vld [vmem:[%s2 + $0xe0] sm:$0x1]
      %v356 = vpack.c.bf16 %v328, %v327
      %v357 = vpack.c.bf16 %v330, %v329
      %v358 = vpack.c.bf16 %v332, %v331
      %v359 = vpack.c.bf16 %v334, %v333
      %v360 = vpack.c.bf16 %v336, %v335
      %v361 = vpack.c.bf16 %v338, %v337
      %v362 = vpack.c.bf16 %v340, %v339
      %v363 = vpack.c.bf16 %v342, %v341
      %v364 = vpack.c.bf16 %v344, %v343
      %v365 = vpack.c.bf16 %v346, %v345
      %v366 = vpack.c.bf16 %v348, %v347
      %v367 = vpack.c.bf16 %v350, %v349
      %v368 = vpack.c.bf16 %v352, %v351
      %v369 = vpack.c.bf16 %v354, %v353
      %v370 = vpack.c.bf16 %v355, %v355
      %v371 = vld [vmem:[%s1] sm:$0xff]
      %v372 = vpack.c.bf16 %v371, %v371
      %vm373 = vcmask 261120
      %v375 = vsel %vm373, %v372, 0
      %v378 = vsel %vm373, %v356, 0
      %v381 = vsel %vm373, %v357, 0
      %v384 = vsel %vm373, %v358, 0
      %v387 = vsel %vm373, %v359, 0
      %v390 = vsel %vm373, %v360, 0
      %v393 = vsel %vm373, %v361, 0
      %v396 = vsel %vm373, %v362, 0
      %v399 = vsel %vm373, %v363, 0
      %v402 = vsel %vm373, %v364, 0
      %v405 = vsel %vm373, %v365, 0
      %v408 = vsel %vm373, %v366, 0
      %v411 = vsel %vm373, %v367, 0
      %v414 = vsel %vm373, %v368, 0
      %v417 = vsel %vm373, %v369, 0
      %v420 = vsel %vm373, %v370, 0
      %422 = vmatprep.subr.bf16.mxu0 0
      %423 = vmatpush1.bf16.xpose.msra.mxu0 %v399
      %424 = vmatprep.subr.bf16.mxu0 0
      %425 = vmatpush1.bf16.xpose.msra.mxu0 %v396
      %426 = vmatprep.subr.bf16.mxu0 0
      %427 = vmatpush1.bf16.xpose.msra.mxu0 %v393
      %428 = vmatprep.subr.bf16.mxu0 0
      %429 = vmatpush1.bf16.xpose.msra.mxu0 %v390
      %430 = vmatprep.subr.bf16.mxu0 0
      %431 = vmatpush1.bf16.xpose.msra.mxu0 %v387
      %432 = vmatprep.subr.bf16.mxu0 0
      %433 = vmatpush1.bf16.xpose.msra.mxu0 %v384
      %434 = vmatprep.subr.bf16.mxu0 0
      %435 = vmatpush1.bf16.xpose.msra.mxu0 %v381
      %436 = vmatprep.subr.bf16.mxu0 0
      %437 = vmatpush1.bf16.xpose.msra.mxu0 %v378
      %438 = vmatprep.subr.bf16.mxu0 0
      %439 = vmatpush2.bf16.xpose.msra.mxu0 0
      %440 = vmatprep.subr.bf16.mxu0 0
      %441 = vmatpush2.bf16.xpose.msra.mxu0 %v420
      %442 = vmatprep.subr.bf16.mxu0 0
      %443 = vmatpush2.bf16.xpose.msra.mxu0 %v417
      %444 = vmatprep.subr.bf16.mxu0 0
      %445 = vmatpush2.bf16.xpose.msra.mxu0 %v414
      %446 = vmatprep.subr.bf16.mxu0 0
      %447 = vmatpush2.bf16.xpose.msra.mxu0 %v411
      %448 = vmatprep.subr.bf16.mxu0 0
      %449 = vmatpush2.bf16.xpose.msra.mxu0 %v408
      %450 = vmatprep.subr.bf16.mxu0 0
      %451 = vmatpush2.bf16.xpose.msra.mxu0 %v405
      %452 = vmatprep.subr.bf16.mxu0 0
      %453 = vmatpush2.bf16.xpose.msra.mxu0 %v402
      %454 = vmatprep.mubr.bf16.mxu0 0
      %455 = vmatmul.mubr.bf16.gmra.mxu0 %v375
      %v456 = vpop.f32.mrf.mxu0
      %v457 = vadd.f32 0.0, %v456
      %v458 = vpop.f32.mrf.mxu0
      %v459 = vadd.f32 0.0, %v458
      %v460 = vpop.f32.mrf.mxu0
      %v461 = vpop.f32.mrf.mxu0
      %462 = vdwg.mxu0
      %v463 = vld [vmem:[%s306] sm:$0xff]
      %v464 = vld [vmem:[%s306 + $0x8] sm:$0xff]
      %v465 = vlaneseq
      %v466 = vand.u32 %v465, 127
      %v467 = vadd.s32 %v466, 128
      %468 = vset.pattern.permute.xlu0 0
      %469 = vperm.xlu0 %468, %v463
      %v470 = vpop.permute.xlu0 %469
      %471 = vset.pattern.permute.xlu0 0
      %472 = vperm.xlu0 %471, %v464
      %v473 = vpop.permute.xlu0 %472
      %vm474 = vcmp.ge.s32.totalorder %v466, %v470
      %vm475 = vcmp.ge.s32.totalorder %v467, %v470
      %vm476 = vcmp.ge.s32.totalorder %v466, %v473
      %vm477 = vcmp.ge.s32.totalorder %v467, %v473
      %478 = vset.pattern.permute.xlu0 1
      %479 = vperm.xlu0 %478, %v463
      %v480 = vpop.permute.xlu0 %479
      %481 = vset.pattern.permute.xlu0 1
      %482 = vperm.xlu0 %481, %v464
      %v483 = vpop.permute.xlu0 %482
      %vm484 = vcmp.lt.s32.totalorder %v466, %v480
      %vm485 = vcmp.lt.s32.totalorder %v467, %v480
      %vm486 = vcmp.lt.s32.totalorder %v466, %v483
      %vm487 = vcmp.lt.s32.totalorder %v467, %v483
      %vm488 = vmand %vm474, %vm484
      %vm489 = vmand %vm475, %vm485
      %vm490 = vmand %vm476, %vm486
      %vm491 = vmand %vm477, %vm487
      %492 = vset.pattern.permute.xlu0 2
      %493 = vperm.xlu0 %492, %v463
      %v494 = vpop.permute.xlu0 %493
      %495 = vset.pattern.permute.xlu0 2
      %496 = vperm.xlu0 %495, %v464
      %v497 = vpop.permute.xlu0 %496
      %vm498 = vcmp.ge.s32.totalorder %v466, %v494
      %vm499 = vcmp.ge.s32.totalorder %v467, %v494
      %vm500 = vcmp.ge.s32.totalorder %v466, %v497
      %vm501 = vcmp.ge.s32.totalorder %v467, %v497
      %502 = vset.pattern.permute.xlu0 3
      %503 = vperm.xlu0 %502, %v463
      %v504 = vpop.permute.xlu0 %503
      %505 = vset.pattern.permute.xlu0 3
      %506 = vperm.xlu0 %505, %v464
      %v507 = vpop.permute.xlu0 %506
      %vm508 = vcmp.lt.s32.totalorder %v466, %v504
      %vm509 = vcmp.lt.s32.totalorder %v467, %v504
      %vm510 = vcmp.lt.s32.totalorder %v466, %v507
      %vm511 = vcmp.lt.s32.totalorder %v467, %v507
      %vm512 = vmand %vm498, %vm508
      %vm513 = vmand %vm499, %vm509
      %vm514 = vmand %vm500, %vm510
      %vm515 = vmand %vm501, %vm511
      %vm516 = vmor %vm488, %vm512
      %vm517 = vmor %vm489, %vm513
      %vm518 = vmor %vm490, %vm514
      %vm519 = vmor %vm491, %vm515
      %v520 = vsel %vm516, 1, 0
      %v521 = vsel %vm517, 1, 0
      %v522 = vsel %vm518, 1, 0
      %v523 = vsel %vm519, 1, 0
      %v524 = vcombine.low %v520, %v521
      %v525 = vcombine.high %v520, %v521
      %v527 = vunpack.c.l.s4 1966171168
      %v528 = vunpack.c.0.s8 %v527
      %v529 = vlaneseq
      %v530 = vshrl.u32 %v529, 7
      %v531 = vsub.s32 %v528, %v530
      %v532 = vrot.slane %v524, %v531
      %v534 = vunpack.c.l.s4 1966171168
      %v535 = vunpack.c.0.s8 %v534
      %v536 = vlaneseq
      %v537 = vshrl.u32 %v536, 7
      %v538 = vsub.s32 %v535, %v537
      %v539 = vrot.slane %v525, %v538
      %v540 = vcombine.high %v532, %v532
      %v541 = vcombine.high %v539, %v539
      %v543 = vunpack.c.l.s4 1966171168
      %v544 = vunpack.c.0.s8 %v543
      %v545 = vlaneseq
      %v546 = vshrl.u32 %v545, 7
      %v547 = vsub.s32 %v544, %v546
      %v548 = vrot.slane %v532, %v547
      %v550 = vunpack.c.l.s4 1966171168
      %v551 = vunpack.c.0.s8 %v550
      %v552 = vlaneseq
      %v553 = vshrl.u32 %v552, 7
      %v554 = vsub.s32 %v551, %v553
      %v555 = vrot.slane %v539, %v554
      %v557 = vunpack.c.l.s4 1966171168
      %v558 = vunpack.c.0.s8 %v557
      %v559 = vlaneseq
      %v560 = vshrl.u32 %v559, 7
      %v561 = vsub.s32 %v558, %v560
      %v562 = vrot.slane %v540, %v561
      %v564 = vunpack.c.l.s4 1966171168
      %v565 = vunpack.c.0.s8 %v564
      %v566 = vlaneseq
      %v567 = vshrl.u32 %v566, 7
      %v568 = vsub.s32 %v565, %v567
      %v569 = vrot.slane %v541, %v568
      %v570 = vcombine.high %v548, %v548
      %v571 = vcombine.high %v555, %v555
      %v572 = vcombine.high %v562, %v562
      %v573 = vcombine.high %v569, %v569
      %v574 = vcombine.low %v522, %v523
      %v575 = vcombine.high %v522, %v523
      %v577 = vunpack.c.l.s4 1966171168
      %v578 = vunpack.c.0.s8 %v577
      %v579 = vlaneseq
      %v580 = vshrl.u32 %v579, 7
      %v581 = vsub.s32 %v578, %v580
      %v582 = vrot.slane %v574, %v581
      %v584 = vunpack.c.l.s4 1966171168
      %v585 = vunpack.c.0.s8 %v584
      %v586 = vlaneseq
      %v587 = vshrl.u32 %v586, 7
      %v588 = vsub.s32 %v585, %v587
      %v589 = vrot.slane %v575, %v588
      %v590 = vcombine.high %v582, %v582
      %v591 = vcombine.high %v589, %v589
      %v593 = vunpack.c.l.s4 1966171168
      %v594 = vunpack.c.0.s8 %v593
      %v595 = vlaneseq
      %v596 = vshrl.u32 %v595, 7
      %v597 = vsub.s32 %v594, %v596
      %v598 = vrot.slane %v582, %v597
      %v600 = vunpack.c.l.s4 1966171168
      %v601 = vunpack.c.0.s8 %v600
      %v602 = vlaneseq
      %v603 = vshrl.u32 %v602, 7
      %v604 = vsub.s32 %v601, %v603
      %v605 = vrot.slane %v589, %v604
      %v607 = vunpack.c.l.s4 1966171168
      %v608 = vunpack.c.0.s8 %v607
      %v609 = vlaneseq
      %v610 = vshrl.u32 %v609, 7
      %v611 = vsub.s32 %v608, %v610
      %v612 = vrot.slane %v590, %v611
      %v614 = vunpack.c.l.s4 1966171168
      %v615 = vunpack.c.0.s8 %v614
      %v616 = vlaneseq
      %v617 = vshrl.u32 %v616, 7
      %v618 = vsub.s32 %v615, %v617
      %v619 = vrot.slane %v591, %v618
      %v620 = vcombine.high %v598, %v598
      %v621 = vcombine.high %v605, %v605
      %v622 = vcombine.high %v612, %v612
      %v623 = vcombine.high %v619, %v619
      %vm624 = vcmp.ne.s32.totalorder %v548, 0
      %vm625 = vcmp.ne.s32.totalorder %v562, 0
      %vm626 = vcmp.ne.s32.totalorder %v570, 0
      %vm627 = vcmp.ne.s32.totalorder %v572, 0
      %vm628 = vcmp.ne.s32.totalorder %v555, 0
      %vm629 = vcmp.ne.s32.totalorder %v569, 0
      %vm630 = vcmp.ne.s32.totalorder %v571, 0
      %vm631 = vcmp.ne.s32.totalorder %v573, 0
      %vm632 = vcmp.ne.s32.totalorder %v598, 0
      %vm633 = vcmp.ne.s32.totalorder %v612, 0
      %vm634 = vcmp.ne.s32.totalorder %v620, 0
      %vm635 = vcmp.ne.s32.totalorder %v622, 0
      %vm636 = vcmp.ne.s32.totalorder %v605, 0
      %vm637 = vcmp.ne.s32.totalorder %v619, 0
      %vm638 = vcmp.ne.s32.totalorder %v621, 0
      %vm639 = vcmp.ne.s32.totalorder %v623, 0
      %v640 = vsel %vm624, 1, 0
      %v641 = vsel %vm625, 1, 0
      %v642 = vsel %vm626, 1, 0
      %v643 = vsel %vm627, 1, 0
      %v644 = vsel %vm628, 1, 0
      %v645 = vsel %vm629, 1, 0
      %v646 = vsel %vm630, 1, 0
      %v647 = vsel %vm631, 1, 0
      %v648 = vsel %vm632, 1, 0
      %v649 = vsel %vm633, 1, 0
      %v650 = vsel %vm634, 1, 0
      %v651 = vsel %vm635, 1, 0
      %v652 = vsel %vm636, 1, 0
      %v653 = vsel %vm637, 1, 0
      %v654 = vsel %vm638, 1, 0
      %v655 = vsel %vm639, 1, 0
      %v656 = vlaneseq
      %v657 = vshrl.u32 %v656, 7
      %v658 = vsub.s32 0, %v657
      %v659 = vrot.slane %v640, %v658
      %v660 = vlaneseq
      %v661 = vshrl.u32 %v660, 7
      %v662 = vsub.s32 1, %v661
      %v663 = vrot.slane %v640, %v662
      %v664 = vlaneseq
      %v665 = vshrl.u32 %v664, 7
      %v666 = vsub.s32 0, %v665
      %v667 = vrot.slane %v641, %v666
      %v668 = vlaneseq
      %v669 = vshrl.u32 %v668, 7
      %v670 = vsub.s32 1, %v669
      %v671 = vrot.slane %v641, %v670
      %v672 = vlaneseq
      %v673 = vshrl.u32 %v672, 7
      %v674 = vsub.s32 0, %v673
      %v675 = vrot.slane %v642, %v674
      %v676 = vlaneseq
      %v677 = vshrl.u32 %v676, 7
      %v678 = vsub.s32 1, %v677
      %v679 = vrot.slane %v642, %v678
      %v680 = vlaneseq
      %v681 = vshrl.u32 %v680, 7
      %v682 = vsub.s32 0, %v681
      %v683 = vrot.slane %v643, %v682
      %v684 = vlaneseq
      %v685 = vshrl.u32 %v684, 7
      %v686 = vsub.s32 1, %v685
      %v687 = vrot.slane %v643, %v686
      %v688 = vlaneseq
      %v689 = vshrl.u32 %v688, 7
      %v690 = vsub.s32 0, %v689
      %v691 = vrot.slane %v644, %v690
      %v692 = vlaneseq
      %v693 = vshrl.u32 %v692, 7
      %v694 = vsub.s32 1, %v693
      %v695 = vrot.slane %v644, %v694
      %v696 = vlaneseq
      %v697 = vshrl.u32 %v696, 7
      %v698 = vsub.s32 0, %v697
      %v699 = vrot.slane %v645, %v698
      %v700 = vlaneseq
      %v701 = vshrl.u32 %v700, 7
      %v702 = vsub.s32 1, %v701
      %v703 = vrot.slane %v645, %v702
      %v704 = vlaneseq
      %v705 = vshrl.u32 %v704, 7
      %v706 = vsub.s32 0, %v705
      %v707 = vrot.slane %v646, %v706
      %v708 = vlaneseq
      %v709 = vshrl.u32 %v708, 7
      %v710 = vsub.s32 1, %v709
      %v711 = vrot.slane %v646, %v710
      %v712 = vlaneseq
      %v713 = vshrl.u32 %v712, 7
      %v714 = vsub.s32 0, %v713
      %v715 = vrot.slane %v647, %v714
      %v716 = vlaneseq
      %v717 = vshrl.u32 %v716, 7
      %v718 = vsub.s32 1, %v717
      %v719 = vrot.slane %v647, %v718
      %v720 = vlaneseq
      %v721 = vshrl.u32 %v720, 7
      %v722 = vsub.s32 0, %v721
      %v723 = vrot.slane %v648, %v722
      %v724 = vlaneseq
      %v725 = vshrl.u32 %v724, 7
      %v726 = vsub.s32 1, %v725
      %v727 = vrot.slane %v648, %v726
      %v728 = vlaneseq
      %v729 = vshrl.u32 %v728, 7
      %v730 = vsub.s32 0, %v729
      %v731 = vrot.slane %v649, %v730
      %v732 = vlaneseq
      %v733 = vshrl.u32 %v732, 7
      %v734 = vsub.s32 1, %v733
      %v735 = vrot.slane %v649, %v734
      %v736 = vlaneseq
      %v737 = vshrl.u32 %v736, 7
      %v738 = vsub.s32 0, %v737
      %v739 = vrot.slane %v650, %v738
      %v740 = vlaneseq
      %v741 = vshrl.u32 %v740, 7
      %v742 = vsub.s32 1, %v741
      %v743 = vrot.slane %v650, %v742
      %v744 = vlaneseq
      %v745 = vshrl.u32 %v744, 7
      %v746 = vsub.s32 0, %v745
      %v747 = vrot.slane %v651, %v746
      %v748 = vlaneseq
      %v749 = vshrl.u32 %v748, 7
      %v750 = vsub.s32 1, %v749
      %v751 = vrot.slane %v651, %v750
      %v752 = vlaneseq
      %v753 = vshrl.u32 %v752, 7
      %v754 = vsub.s32 0, %v753
      %v755 = vrot.slane %v652, %v754
      %v756 = vlaneseq
      %v757 = vshrl.u32 %v756, 7
      %v758 = vsub.s32 1, %v757
      %v759 = vrot.slane %v652, %v758
      %v760 = vlaneseq
      %v761 = vshrl.u32 %v760, 7
      %v762 = vsub.s32 0, %v761
      %v763 = vrot.slane %v653, %v762
      %v764 = vlaneseq
      %v765 = vshrl.u32 %v764, 7
      %v766 = vsub.s32 1, %v765
      %v767 = vrot.slane %v653, %v766
      %v768 = vlaneseq
      %v769 = vshrl.u32 %v768, 7
      %v770 = vsub.s32 0, %v769
      %v771 = vrot.slane %v654, %v770
      %v772 = vlaneseq
      %v773 = vshrl.u32 %v772, 7
      %v774 = vsub.s32 1, %v773
      %v775 = vrot.slane %v654, %v774
      %v776 = vlaneseq
      %v777 = vshrl.u32 %v776, 7
      %v778 = vsub.s32 0, %v777
      %v779 = vrot.slane %v655, %v778
      %v780 = vlaneseq
      %v781 = vshrl.u32 %v780, 7
      %v782 = vsub.s32 1, %v781
      %v783 = vrot.slane %v655, %v782
      %vm784 = vcmp.eq.s32.totalorder %v659, 1
      %vm785 = vcmp.eq.s32.totalorder %v663, 1
      %vm786 = vcmp.eq.s32.totalorder %v667, 1
      %vm787 = vcmp.eq.s32.totalorder %v671, 1
      %vm788 = vcmp.eq.s32.totalorder %v675, 1
      %vm789 = vcmp.eq.s32.totalorder %v679, 1
      %vm790 = vcmp.eq.s32.totalorder %v683, 1
      %vm791 = vcmp.eq.s32.totalorder %v687, 1
      %vm792 = vcmp.eq.s32.totalorder %v691, 1
      %vm793 = vcmp.eq.s32.totalorder %v695, 1
      %vm794 = vcmp.eq.s32.totalorder %v699, 1
      %vm795 = vcmp.eq.s32.totalorder %v703, 1
      %vm796 = vcmp.eq.s32.totalorder %v707, 1
      %vm797 = vcmp.eq.s32.totalorder %v711, 1
      %vm798 = vcmp.eq.s32.totalorder %v715, 1
      %vm799 = vcmp.eq.s32.totalorder %v719, 1
      %vm800 = vcmp.eq.s32.totalorder %v723, 1
      %vm801 = vcmp.eq.s32.totalorder %v727, 1
      %vm802 = vcmp.eq.s32.totalorder %v731, 1
      %vm803 = vcmp.eq.s32.totalorder %v735, 1
      %vm804 = vcmp.eq.s32.totalorder %v739, 1
      %vm805 = vcmp.eq.s32.totalorder %v743, 1
      %vm806 = vcmp.eq.s32.totalorder %v747, 1
      %vm807 = vcmp.eq.s32.totalorder %v751, 1
      %vm808 = vcmp.eq.s32.totalorder %v755, 1
      %vm809 = vcmp.eq.s32.totalorder %v759, 1
      %vm810 = vcmp.eq.s32.totalorder %v763, 1
      %vm811 = vcmp.eq.s32.totalorder %v767, 1
      %vm812 = vcmp.eq.s32.totalorder %v771, 1
      %vm813 = vcmp.eq.s32.totalorder %v775, 1
      %vm814 = vcmp.eq.s32.totalorder %v779, 1
      %vm815 = vcmp.eq.s32.totalorder %v783, 1
      %v816 = vsel %vm784, %v457, -1e+30
      %v817 = vsel %vm785, %v459, -1e+30
      %v818 = vsel %vm786, %v457, -1e+30
      %v819 = vsel %vm787, %v459, -1e+30
      %v820 = vsel %vm788, %v457, -1e+30
      %v821 = vsel %vm789, %v459, -1e+30
      %v822 = vsel %vm790, %v457, -1e+30
      %v823 = vsel %vm791, %v459, -1e+30
      %v824 = vsel %vm792, %v457, -1e+30
      %v825 = vsel %vm793, %v459, -1e+30
      %v826 = vsel %vm794, %v457, -1e+30
      %v827 = vsel %vm795, %v459, -1e+30
      %v828 = vsel %vm796, %v457, -1e+30
      %v829 = vsel %vm797, %v459, -1e+30
      %v830 = vsel %vm798, %v457, -1e+30
      %v831 = vsel %vm799, %v459, -1e+30
      %v832 = vsel %vm800, %v457, -1e+30
      %v833 = vsel %vm801, %v459, -1e+30
      %v834 = vsel %vm802, %v457, -1e+30
      %v835 = vsel %vm803, %v459, -1e+30
      %v836 = vsel %vm804, %v457, -1e+30
      %v837 = vsel %vm805, %v459, -1e+30
      %v838 = vsel %vm806, %v457, -1e+30
      %v839 = vsel %vm807, %v459, -1e+30
      %v840 = vsel %vm808, %v457, -1e+30
      %v841 = vsel %vm809, %v459, -1e+30
      %v842 = vsel %vm810, %v457, -1e+30
      %v843 = vsel %vm811, %v459, -1e+30
      %v844 = vsel %vm812, %v457, -1e+30
      %v845 = vsel %vm813, %v459, -1e+30
      %v846 = vsel %vm814, %v457, -1e+30
      %v847 = vsel %vm815, %v459, -1e+30
      %vm848 = vcmask 793600
      %v849 = vsel %vm848, %v817, -inf
      %v850 = vmax.f32 %v816, %v849
      %851 = vmax.xlane.f32.xlu0 %v850
      %v852 = vpop.xlane.xlu0 %851
      %v853 = vsel %vm848, %v819, -inf
      %v854 = vmax.f32 %v818, %v853
      %855 = vmax.xlane.f32.xlu0 %v854
      %v856 = vpop.xlane.xlu0 %855
      %v857 = vsel %vm848, %v821, -inf
      %v858 = vmax.f32 %v820, %v857
      %859 = vmax.xlane.f32.xlu0 %v858
      %v860 = vpop.xlane.xlu0 %859
      %v861 = vsel %vm848, %v823, -inf
      %v862 = vmax.f32 %v822, %v861
      %863 = vmax.xlane.f32.xlu0 %v862
      %v864 = vpop.xlane.xlu0 %863
      %v865 = vsel %vm848, %v825, -inf
      %v866 = vmax.f32 %v824, %v865
      %867 = vmax.xlane.f32.xlu0 %v866
      %v868 = vpop.xlane.xlu0 %867
      %v869 = vsel %vm848, %v827, -inf
      %v870 = vmax.f32 %v826, %v869
      %871 = vmax.xlane.f32.xlu0 %v870
      %v872 = vpop.xlane.xlu0 %871
      %v873 = vsel %vm848, %v829, -inf
      %v874 = vmax.f32 %v828, %v873
      %875 = vmax.xlane.f32.xlu0 %v874
      %v876 = vpop.xlane.xlu0 %875
      %v877 = vsel %vm848, %v831, -inf
      %v878 = vmax.f32 %v830, %v877
      %879 = vmax.xlane.f32.xlu0 %v878
      %v880 = vpop.xlane.xlu0 %879
      %v881 = vsel %vm848, %v833, -inf
      %v882 = vmax.f32 %v832, %v881
      %883 = vmax.xlane.f32.xlu0 %v882
      %v884 = vpop.xlane.xlu0 %883
      %v885 = vsel %vm848, %v835, -inf
      %v886 = vmax.f32 %v834, %v885
      %887 = vmax.xlane.f32.xlu0 %v886
      %v888 = vpop.xlane.xlu0 %887
      %v889 = vsel %vm848, %v837, -inf
      %v890 = vmax.f32 %v836, %v889
      %891 = vmax.xlane.f32.xlu0 %v890
      %v892 = vpop.xlane.xlu0 %891
      %v893 = vsel %vm848, %v839, -inf
      %v894 = vmax.f32 %v838, %v893
      %895 = vmax.xlane.f32.xlu0 %v894
      %v896 = vpop.xlane.xlu0 %895
      %v897 = vsel %vm848, %v841, -inf
      %v898 = vmax.f32 %v840, %v897
      %899 = vmax.xlane.f32.xlu0 %v898
      %v900 = vpop.xlane.xlu0 %899
      %v901 = vsel %vm848, %v843, -inf
      %v902 = vmax.f32 %v842, %v901
      %903 = vmax.xlane.f32.xlu0 %v902
      %v904 = vpop.xlane.xlu0 %903
      %v905 = vsel %vm848, %v845, -inf
      %v906 = vmax.f32 %v844, %v905
      %907 = vmax.xlane.f32.xlu0 %v906
      %v908 = vpop.xlane.xlu0 %907
      %v909 = vsel %vm848, %v847, -inf
      %v910 = vmax.f32 %v846, %v909
      %911 = vmax.xlane.f32.xlu0 %v910
      %v912 = vpop.xlane.xlu0 %911
      %v913 = vsub.f32 %v816, %v852
      %v914 = vsub.f32 %v817, %v852
      %v915 = vsub.f32 %v818, %v856
      %v916 = vsub.f32 %v819, %v856
      %v917 = vsub.f32 %v820, %v860
      %v918 = vsub.f32 %v821, %v860
      %v919 = vsub.f32 %v822, %v864
      %v920 = vsub.f32 %v823, %v864
      %v921 = vsub.f32 %v824, %v868
      %v922 = vsub.f32 %v825, %v868
      %v923 = vsub.f32 %v826, %v872
      %v924 = vsub.f32 %v827, %v872
      %v925 = vsub.f32 %v828, %v876
      %v926 = vsub.f32 %v829, %v876
      %v927 = vsub.f32 %v830, %v880
      %v928 = vsub.f32 %v831, %v880
      %v929 = vsub.f32 %v832, %v884
      %v930 = vsub.f32 %v833, %v884
      %v931 = vsub.f32 %v834, %v888
      %v932 = vsub.f32 %v835, %v888
      %v933 = vsub.f32 %v836, %v892
      %v934 = vsub.f32 %v837, %v892
      %v935 = vsub.f32 %v838, %v896
      %v936 = vsub.f32 %v839, %v896
      %v937 = vsub.f32 %v840, %v900
      %v938 = vsub.f32 %v841, %v900
      %v939 = vsub.f32 %v842, %v904
      %v940 = vsub.f32 %v843, %v904
      %v941 = vsub.f32 %v844, %v908
      %v942 = vsub.f32 %v845, %v908
      %v943 = vsub.f32 %v846, %v912
      %v944 = vsub.f32 %v847, %v912
      %v945 = vmul.f32 %v913, 1.442695
      %v946 = vpow.pop %v945
      %v947 = vmul.f32 %v914, 1.442695
      %v948 = vpow.pop %v947
      %v949 = vmul.f32 %v915, 1.442695
      %v950 = vpow.pop %v949
      %v951 = vmul.f32 %v916, 1.442695
      %v952 = vpow.pop %v951
      %v953 = vmul.f32 %v917, 1.442695
      %v954 = vpow.pop %v953
      %v955 = vmul.f32 %v918, 1.442695
      %v956 = vpow.pop %v955
      %v957 = vmul.f32 %v919, 1.442695
      %v958 = vpow.pop %v957
      %v959 = vmul.f32 %v920, 1.442695
      %v960 = vpow.pop %v959
      %v961 = vmul.f32 %v921, 1.442695
      %v962 = vpow.pop %v961
      %v963 = vmul.f32 %v922, 1.442695
      %v964 = vpow.pop %v963
      %v965 = vmul.f32 %v923, 1.442695
      %v966 = vpow.pop %v965
      %v967 = vmul.f32 %v924, 1.442695
      %v968 = vpow.pop %v967
      %v969 = vmul.f32 %v925, 1.442695
      %v970 = vpow.pop %v969
      %v971 = vmul.f32 %v926, 1.442695
      %v972 = vpow.pop %v971
      %v973 = vmul.f32 %v927, 1.442695
      %v974 = vpow.pop %v973
      %v975 = vmul.f32 %v928, 1.442695
      %v976 = vpow.pop %v975
      %v977 = vmul.f32 %v929, 1.442695
      %v978 = vpow.pop %v977
      %v979 = vmul.f32 %v930, 1.442695
      %v980 = vpow.pop %v979
      %v981 = vmul.f32 %v931, 1.442695
      %v982 = vpow.pop %v981
      %v983 = vmul.f32 %v932, 1.442695
      %v984 = vpow.pop %v983
      %v985 = vmul.f32 %v933, 1.442695
      %v986 = vpow.pop %v985
      %v987 = vmul.f32 %v934, 1.442695
      %v988 = vpow.pop %v987
      %v989 = vmul.f32 %v935, 1.442695
      %v990 = vpow.pop %v989
      %v991 = vmul.f32 %v936, 1.442695
      %v992 = vpow.pop %v991
      %v993 = vmul.f32 %v937, 1.442695
      %v994 = vpow.pop %v993
      %v995 = vmul.f32 %v938, 1.442695
      %v996 = vpow.pop %v995
      %v997 = vmul.f32 %v939, 1.442695
      %v998 = vpow.pop %v997
      %v999 = vmul.f32 %v940, 1.442695
      %v1000 = vpow.pop %v999
      %v1001 = vmul.f32 %v941, 1.442695
      %v1002 = vpow.pop %v1001
      %v1003 = vmul.f32 %v942, 1.442695
      %v1004 = vpow.pop %v1003
      %v1005 = vmul.f32 %v943, 1.442695
      %v1006 = vpow.pop %v1005
      %v1007 = vmul.f32 %v944, 1.442695
      %v1008 = vpow.pop %v1007
      %v1009 = vsel %vm848, %v948, 0.0
      %v1010 = vadd.f32 %v946, %v1009
      %1011 = vadd.xlane.f32.xlu0 %v1010
      %v1012 = vpop.xlane.xlu0 %1011
      %v1013 = vsel %vm848, %v952, 0.0
      %v1014 = vadd.f32 %v950, %v1013
      %1015 = vadd.xlane.f32.xlu0 %v1014
      %v1016 = vpop.xlane.xlu0 %1015
      %v1017 = vsel %vm848, %v956, 0.0
      %v1018 = vadd.f32 %v954, %v1017
      %1019 = vadd.xlane.f32.xlu0 %v1018
      %v1020 = vpop.xlane.xlu0 %1019
      %v1021 = vsel %vm848, %v960, 0.0
      %v1022 = vadd.f32 %v958, %v1021
      %1023 = vadd.xlane.f32.xlu0 %v1022
      %v1024 = vpop.xlane.xlu0 %1023
      %v1025 = vsel %vm848, %v964, 0.0
      %v1026 = vadd.f32 %v962, %v1025
      %1027 = vadd.xlane.f32.xlu0 %v1026
      %v1028 = vpop.xlane.xlu0 %1027
      %v1029 = vsel %vm848, %v968, 0.0
      %v1030 = vadd.f32 %v966, %v1029
      %1031 = vadd.xlane.f32.xlu0 %v1030
      %v1032 = vpop.xlane.xlu0 %1031
      %v1033 = vsel %vm848, %v972, 0.0
      %v1034 = vadd.f32 %v970, %v1033
      %1035 = vadd.xlane.f32.xlu0 %v1034
      %v1036 = vpop.xlane.xlu0 %1035
      %v1037 = vsel %vm848, %v976, 0.0
      %v1038 = vadd.f32 %v974, %v1037
      %1039 = vadd.xlane.f32.xlu0 %v1038
      %v1040 = vpop.xlane.xlu0 %1039
      %v1041 = vsel %vm848, %v980, 0.0
      %v1042 = vadd.f32 %v978, %v1041
      %1043 = vadd.xlane.f32.xlu0 %v1042
      %v1044 = vpop.xlane.xlu0 %1043
      %v1045 = vsel %vm848, %v984, 0.0
      %v1046 = vadd.f32 %v982, %v1045
      %1047 = vadd.xlane.f32.xlu0 %v1046
      %v1048 = vpop.xlane.xlu0 %1047
      %v1049 = vsel %vm848, %v988, 0.0
      %v1050 = vadd.f32 %v986, %v1049
      %1051 = vadd.xlane.f32.xlu0 %v1050
      %v1052 = vpop.xlane.xlu0 %1051
      %v1053 = vsel %vm848, %v992, 0.0
      %v1054 = vadd.f32 %v990, %v1053
      %1055 = vadd.xlane.f32.xlu0 %v1054
      %v1056 = vpop.xlane.xlu0 %1055
      %v1057 = vsel %vm848, %v996, 0.0
      %v1058 = vadd.f32 %v994, %v1057
      %1059 = vadd.xlane.f32.xlu0 %v1058
      %v1060 = vpop.xlane.xlu0 %1059
      %v1061 = vsel %vm848, %v1000, 0.0
      %v1062 = vadd.f32 %v998, %v1061
      %1063 = vadd.xlane.f32.xlu0 %v1062
      %v1064 = vpop.xlane.xlu0 %1063
      %v1065 = vsel %vm848, %v1004, 0.0
      %v1066 = vadd.f32 %v1002, %v1065
      %1067 = vadd.xlane.f32.xlu0 %v1066
      %v1068 = vpop.xlane.xlu0 %1067
      %v1069 = vsel %vm848, %v1008, 0.0
      %v1070 = vadd.f32 %v1006, %v1069
      %1071 = vadd.xlane.f32.xlu0 %v1070
      %v1072 = vpop.xlane.xlu0 %1071
      %vm1073 = vcmp.gt.f32.partialorder %v852, -1e+29
      %vm1074 = vcmp.gt.f32.partialorder %v856, -1e+29
      %vm1075 = vcmp.gt.f32.partialorder %v860, -1e+29
      %vm1076 = vcmp.gt.f32.partialorder %v864, -1e+29
      %vm1077 = vcmp.gt.f32.partialorder %v868, -1e+29
      %vm1078 = vcmp.gt.f32.partialorder %v872, -1e+29
      %vm1079 = vcmp.gt.f32.partialorder %v876, -1e+29
      %vm1080 = vcmp.gt.f32.partialorder %v880, -1e+29
      %vm1081 = vcmp.gt.f32.partialorder %v884, -1e+29
      %vm1082 = vcmp.gt.f32.partialorder %v888, -1e+29
      %vm1083 = vcmp.gt.f32.partialorder %v892, -1e+29
      %vm1084 = vcmp.gt.f32.partialorder %v896, -1e+29
      %vm1085 = vcmp.gt.f32.partialorder %v900, -1e+29
      %vm1086 = vcmp.gt.f32.partialorder %v904, -1e+29
      %vm1087 = vcmp.gt.f32.partialorder %v908, -1e+29
      %vm1088 = vcmp.gt.f32.partialorder %v912, -1e+29
      %v1089 = vmax.f32 %v1012, 1e-30
      %v1090 = vmax.f32 %v1016, 1e-30
      %v1091 = vmax.f32 %v1020, 1e-30
      %v1092 = vmax.f32 %v1024, 1e-30
      %v1093 = vmax.f32 %v1028, 1e-30
      %v1094 = vmax.f32 %v1032, 1e-30
      %v1095 = vmax.f32 %v1036, 1e-30
      %v1096 = vmax.f32 %v1040, 1e-30
      %v1097 = vmax.f32 %v1044, 1e-30
      %v1098 = vmax.f32 %v1048, 1e-30
      %v1099 = vmax.f32 %v1052, 1e-30
      %v1100 = vmax.f32 %v1056, 1e-30
      %v1101 = vmax.f32 %v1060, 1e-30
      %v1102 = vmax.f32 %v1064, 1e-30
      %v1103 = vmax.f32 %v1068, 1e-30
      %v1104 = vmax.f32 %v1072, 1e-30
      %v1105 = vrcp.pop %v1089
      %v1106 = vrcp.pop %v1090
      %v1107 = vrcp.pop %v1091
      %v1108 = vrcp.pop %v1092
      %v1109 = vrcp.pop %v1093
      %v1110 = vrcp.pop %v1094
      %v1111 = vrcp.pop %v1095
      %v1112 = vrcp.pop %v1096
      %v1113 = vrcp.pop %v1097
      %v1114 = vrcp.pop %v1098
      %v1115 = vrcp.pop %v1099
      %v1116 = vrcp.pop %v1100
      %v1117 = vrcp.pop %v1101
      %v1118 = vrcp.pop %v1102
      %v1119 = vrcp.pop %v1103
      %v1120 = vrcp.pop %v1104
      %v1121 = vsel %vm1073, %v1105, 0.0
      %v1122 = vsel %vm1074, %v1106, 0.0
      %v1123 = vsel %vm1075, %v1107, 0.0
      %v1124 = vsel %vm1076, %v1108, 0.0
      %v1125 = vsel %vm1077, %v1109, 0.0
      %v1126 = vsel %vm1078, %v1110, 0.0
      %v1127 = vsel %vm1079, %v1111, 0.0
      %v1128 = vsel %vm1080, %v1112, 0.0
      %v1129 = vsel %vm1081, %v1113, 0.0
      %v1130 = vsel %vm1082, %v1114, 0.0
      %v1131 = vsel %vm1083, %v1115, 0.0
      %v1132 = vsel %vm1084, %v1116, 0.0
      %v1133 = vsel %vm1085, %v1117, 0.0
      %v1134 = vsel %vm1086, %v1118, 0.0
      %v1135 = vsel %vm1087, %v1119, 0.0
      %v1136 = vsel %vm1088, %v1120, 0.0
      %v1137 = vpack.c.bf16 %v950, %v946
      %v1138 = vpack.c.bf16 %v952, %v948
      %v1139 = vpack.c.bf16 %v958, %v954
      %v1140 = vpack.c.bf16 %v960, %v956
      %v1141 = vpack.c.bf16 %v966, %v962
      %v1142 = vpack.c.bf16 %v968, %v964
      %v1143 = vpack.c.bf16 %v974, %v970
      %v1144 = vpack.c.bf16 %v976, %v972
      %v1145 = vpack.c.bf16 %v982, %v978
      %v1146 = vpack.c.bf16 %v984, %v980
      %v1147 = vpack.c.bf16 %v990, %v986
      %v1148 = vpack.c.bf16 %v992, %v988
      %v1149 = vpack.c.bf16 %v998, %v994
      %v1150 = vpack.c.bf16 %v1000, %v996
      %v1151 = vpack.c.bf16 %v1006, %v1002
      %v1152 = vpack.c.bf16 %v1008, %v1004
      %v1154 = vsel %vm848, %v1138, 0
      %v1157 = vsel %vm848, %v1140, 0
      %v1160 = vsel %vm848, %v1142, 0
      %v1163 = vsel %vm848, %v1144, 0
      %v1166 = vsel %vm848, %v1146, 0
      %v1169 = vsel %vm848, %v1148, 0
      %v1172 = vsel %vm848, %v1150, 0
      %v1175 = vsel %vm848, %v1152, 0
      %vm1177 = vcmask 1040384
      %v1178 = vsel 0, 4294967295, 65535
      %v1179 = vsel %vm1177, %v1178, 0
      %v1180 = vand.u32 %v370, %v1179
      %1182 = vmatprep.subr.bf16.mxu0 0
      %1183 = vmatpush1.bf16.msra.mxu0 %v363
      %1184 = vmatprep.subr.bf16.mxu0 0
      %1185 = vmatpush1.bf16.msra.mxu0 %v362
      %1186 = vmatprep.subr.bf16.mxu0 0
      %1187 = vmatpush1.bf16.msra.mxu0 %v361
      %1188 = vmatprep.subr.bf16.mxu0 0
      %1189 = vmatpush1.bf16.msra.mxu0 %v360
      %1190 = vmatprep.subr.bf16.mxu0 0
      %1191 = vmatpush1.bf16.msra.mxu0 %v359
      %1192 = vmatprep.subr.bf16.mxu0 0
      %1193 = vmatpush1.bf16.msra.mxu0 %v358
      %1194 = vmatprep.subr.bf16.mxu0 0
      %1195 = vmatpush1.bf16.msra.mxu0 %v357
      %1196 = vmatprep.subr.bf16.mxu0 0
      %1197 = vmatpush1.bf16.msra.mxu0 %v356
      %1198 = vmatprep.subr.bf16.mxu0 0
      %1199 = vmatpush2.bf16.msra.mxu0 0
      %1200 = vmatprep.subr.bf16.mxu0 0
      %1201 = vmatpush2.bf16.msra.mxu0 %v1180
      %1202 = vmatprep.subr.bf16.mxu0 0
      %1203 = vmatpush2.bf16.msra.mxu0 %v369
      %1204 = vmatprep.subr.bf16.mxu0 0
      %1205 = vmatpush2.bf16.msra.mxu0 %v368
      %1206 = vmatprep.subr.bf16.mxu0 0
      %1207 = vmatpush2.bf16.msra.mxu0 %v367
      %1208 = vmatprep.subr.bf16.mxu0 0
      %1209 = vmatpush2.bf16.msra.mxu0 %v366
      %1210 = vmatprep.subr.bf16.mxu0 0
      %1211 = vmatpush2.bf16.msra.mxu0 %v365
      %1212 = vmatprep.subr.bf16.mxu0 0
      %1213 = vmatpush2.bf16.msra.mxu0 %v364
      %1214 = vmatprep.mubr.bf16.mxu0 %v1154
      %1215 = vmatmul.mubr.bf16.gmra.mxu0 %v1137
      %v1216 = vpop.f32.mrf.mxu0
      %v1217 = vadd.f32 0.0, %v1216
      %v1218 = vpop.f32.mrf.mxu0
      %v1219 = vpop.f32.mrf.mxu0
      %v1220 = vadd.f32 0.0, %v1219
      %v1221 = vpop.f32.mrf.mxu0
      %1222 = vmatprep.mubr.bf16.mxu0 %v1157
      %1223 = vmatmul.mubr.bf16.gmra.mxu0 %v1139
      %v1224 = vpop.f32.mrf.mxu0
      %v1225 = vadd.f32 0.0, %v1224
      %v1226 = vpop.f32.mrf.mxu0
      %v1227 = vpop.f32.mrf.mxu0
      %v1228 = vadd.f32 0.0, %v1227
      %v1229 = vpop.f32.mrf.mxu0
      %1230 = vmatprep.mubr.bf16.mxu0 %v1160
      %1231 = vmatmul.mubr.bf16.gmra.mxu0 %v1141
      %v1232 = vpop.f32.mrf.mxu0
      %v1233 = vadd.f32 0.0, %v1232
      %v1234 = vpop.f32.mrf.mxu0
      %v1235 = vpop.f32.mrf.mxu0
      %v1236 = vadd.f32 0.0, %v1235
      %v1237 = vpop.f32.mrf.mxu0
      %1238 = vmatprep.mubr.bf16.mxu0 %v1163
      %1239 = vmatmul.mubr.bf16.gmra.mxu0 %v1143
      %v1240 = vpop.f32.mrf.mxu0
      %v1241 = vadd.f32 0.0, %v1240
      %v1242 = vpop.f32.mrf.mxu0
      %v1243 = vpop.f32.mrf.mxu0
      %v1244 = vadd.f32 0.0, %v1243
      %v1245 = vpop.f32.mrf.mxu0
      %1246 = vmatprep.mubr.bf16.mxu0 %v1166
      %1247 = vmatmul.mubr.bf16.gmra.mxu0 %v1145
      %v1248 = vpop.f32.mrf.mxu0
      %v1249 = vadd.f32 0.0, %v1248
      %v1250 = vpop.f32.mrf.mxu0
      %v1251 = vpop.f32.mrf.mxu0
      %v1252 = vadd.f32 0.0, %v1251
      %v1253 = vpop.f32.mrf.mxu0
      %1254 = vmatprep.mubr.bf16.mxu0 %v1169
      %1255 = vmatmul.mubr.bf16.gmra.mxu0 %v1147
      %v1256 = vpop.f32.mrf.mxu0
      %v1257 = vadd.f32 0.0, %v1256
      %v1258 = vpop.f32.mrf.mxu0
      %v1259 = vpop.f32.mrf.mxu0
      %v1260 = vadd.f32 0.0, %v1259
      %v1261 = vpop.f32.mrf.mxu0
      %1262 = vmatprep.mubr.bf16.mxu0 %v1172
      %1263 = vmatmul.mubr.bf16.gmra.mxu0 %v1149
      %v1264 = vpop.f32.mrf.mxu0
      %v1265 = vadd.f32 0.0, %v1264
      %v1266 = vpop.f32.mrf.mxu0
      %v1267 = vpop.f32.mrf.mxu0
      %v1268 = vadd.f32 0.0, %v1267
      %v1269 = vpop.f32.mrf.mxu0
      %1270 = vmatprep.mubr.bf16.mxu0 %v1175
      %1271 = vmatmul.mubr.bf16.gmra.mxu0 %v1151
      %v1272 = vpop.f32.mrf.mxu0
      %v1273 = vadd.f32 0.0, %v1272
      %v1274 = vpop.f32.mrf.mxu0
      %v1275 = vpop.f32.mrf.mxu0
      %v1276 = vadd.f32 0.0, %v1275
      %v1277 = vpop.f32.mrf.mxu0
      %1278 = vdwg.mxu0
      %v1279 = vmul.f32 %v1217, %v1121
      %v1280 = vmul.f32 %v1220, %v1122
      %v1281 = vmul.f32 %v1225, %v1123
      %v1282 = vmul.f32 %v1228, %v1124
      %v1283 = vmul.f32 %v1233, %v1125
      %v1284 = vmul.f32 %v1236, %v1126
      %v1285 = vmul.f32 %v1241, %v1127
      %v1286 = vmul.f32 %v1244, %v1128
      %v1287 = vmul.f32 %v1249, %v1129
      %v1288 = vmul.f32 %v1252, %v1130
      %v1289 = vmul.f32 %v1257, %v1131
      %v1290 = vmul.f32 %v1260, %v1132
      %v1291 = vmul.f32 %v1265, %v1133
      %v1292 = vmul.f32 %v1268, %v1134
      %v1293 = vmul.f32 %v1273, %v1135
      %v1294 = vmul.f32 %v1276, %v1136
      %v1295 = vld [vmem:[%s312] sm:$0xff]
      %v1296 = vld [vmem:[%s312 + $0x8] sm:$0xff]
      %v1297 = vld [vmem:[%s312 + $0x10] sm:$0xff]
      %v1298 = vld [vmem:[%s312 + $0x18] sm:$0xff]
      %v1299 = vld [vmem:[%s312 + $0x20] sm:$0xff]
      %v1300 = vld [vmem:[%s312 + $0x28] sm:$0xff]
      %v1301 = vld [vmem:[%s312 + $0x30] sm:$0xff]
      %v1302 = vld [vmem:[%s312 + $0x38] sm:$0xff]
      %v1303 = vld [vmem:[%s312 + $0x40] sm:$0xff]
      %v1304 = vld [vmem:[%s312 + $0x48] sm:$0xff]
      %v1305 = vld [vmem:[%s312 + $0x50] sm:$0xff]
      %v1306 = vld [vmem:[%s312 + $0x58] sm:$0xff]
      %v1307 = vld [vmem:[%s312 + $0x60] sm:$0xff]
      %v1308 = vld [vmem:[%s312 + $0x68] sm:$0xff]
      %v1309 = vld [vmem:[%s312 + $0x70] sm:$0xff]
      %v1310 = vld [vmem:[%s312 + $0x78] sm:$0xff]
      %v1311 = vpack.c.bf16 %v1280, %v1279
      %v1312 = vpack.c.bf16 %v1282, %v1281
      %v1313 = vpack.c.bf16 %v1284, %v1283
      %v1314 = vpack.c.bf16 %v1286, %v1285
      %v1315 = vpack.c.bf16 %v1288, %v1287
      %v1316 = vpack.c.bf16 %v1290, %v1289
      %v1317 = vpack.c.bf16 %v1292, %v1291
      %v1318 = vpack.c.bf16 %v1294, %v1293
      %v1319 = vld [vmem:[%s4] sm:$0xff]
      %v1320 = vld [vmem:[%s4 + $0x8] sm:$0xff]
      %v1321 = vld [vmem:[%s4 + $0x10] sm:$0xff]
      %v1322 = vld [vmem:[%s4 + $0x18] sm:$0xff]
      %v1323 = vpack.c.bf16 %v1320, %v1319
      %v1324 = vpack.c.bf16 %v1322, %v1321
      %v1325 = vld [vmem:[%s5] sm:$0x1]
      %v1327 = vlaneseq
      %v1328 = vshrl.u32 %v1327, 7
      %v1329 = vsub.s32 0, %v1328
      %v1330 = vrot.slane %v1325, %v1329
      %v1333 = vsel %vm373, %v1311, 0
      %v1336 = vsel %vm373, %v1312, 0
      %v1339 = vsel %vm373, %v1313, 0
      %v1342 = vsel %vm373, %v1314, 0
      %v1345 = vsel %vm373, %v1315, 0
      %v1348 = vsel %vm373, %v1316, 0
      %v1351 = vsel %vm373, %v1317, 0
      %v1354 = vsel %vm373, %v1318, 0
      %1356 = vmatprep.subr.bf16.mxu0 0
      %1357 = vmatpush1.bf16.msra.mxu0 0
      %1358 = vmatprep.subr.bf16.mxu0 0
      %1359 = vmatpush1.bf16.msra.mxu0 0
      %1360 = vmatprep.subr.bf16.mxu0 0
      %1361 = vmatpush1.bf16.msra.mxu0 0
      %1362 = vmatprep.subr.bf16.mxu0 0
      %1363 = vmatpush1.bf16.msra.mxu0 0
      %1364 = vmatprep.subr.bf16.mxu0 0
      %1365 = vmatpush1.bf16.msra.mxu0 0
      %1366 = vmatprep.subr.bf16.mxu0 0
      %1367 = vmatpush1.bf16.msra.mxu0 0
      %1368 = vmatprep.subr.bf16.mxu0 0
      %1369 = vmatpush1.bf16.msra.mxu0 %v1324
      %1370 = vmatprep.subr.bf16.mxu0 0
      %1371 = vmatpush1.bf16.msra.mxu0 %v1323
      %1372 = vmatprep.subr.bf16.mxu0 0
      %1373 = vmatpush2.bf16.msra.mxu0 0
      %1374 = vmatprep.subr.bf16.mxu0 0
      %1375 = vmatpush2.bf16.msra.mxu0 0
      %1376 = vmatprep.subr.bf16.mxu0 0
      %1377 = vmatpush2.bf16.msra.mxu0 0
      %1378 = vmatprep.subr.bf16.mxu0 0
      %1379 = vmatpush2.bf16.msra.mxu0 0
      %1380 = vmatprep.subr.bf16.mxu0 0
      %1381 = vmatpush2.bf16.msra.mxu0 0
      %1382 = vmatprep.subr.bf16.mxu0 0
      %1383 = vmatpush2.bf16.msra.mxu0 0
      %1384 = vmatprep.subr.bf16.mxu0 0
      %1385 = vmatpush2.bf16.msra.mxu0 0
      %1386 = vmatprep.subr.bf16.mxu0 0
      %1387 = vmatpush2.bf16.msra.mxu0 0
      %1388 = vmatprep.mubr.bf16.mxu0 0
      %1389 = vmatmul.mubr.bf16.gmra.mxu0 %v1333
      %v1390 = vpop.f32.mrf.mxu0
      %v1391 = vadd.f32 %v1330, %v1390
      %v1392 = vpop.f32.mrf.mxu0
      %v1393 = vpop.f32.mrf.mxu0
      %v1394 = vadd.f32 %v1330, %v1393
      %v1395 = vpop.f32.mrf.mxu0
      %1396 = vmatprep.mubr.bf16.mxu0 0
      %1397 = vmatmul.mubr.bf16.gmra.mxu0 %v1336
      %v1398 = vpop.f32.mrf.mxu0
      %v1399 = vadd.f32 %v1330, %v1398
      %v1400 = vpop.f32.mrf.mxu0
      %v1401 = vpop.f32.mrf.mxu0
      %v1402 = vadd.f32 %v1330, %v1401
      %v1403 = vpop.f32.mrf.mxu0
      %1404 = vmatprep.mubr.bf16.mxu0 0
      %1405 = vmatmul.mubr.bf16.gmra.mxu0 %v1339
      %v1406 = vpop.f32.mrf.mxu0
      %v1407 = vadd.f32 %v1330, %v1406
      %v1408 = vpop.f32.mrf.mxu0
      %v1409 = vpop.f32.mrf.mxu0
      %v1410 = vadd.f32 %v1330, %v1409
      %v1411 = vpop.f32.mrf.mxu0
      %1412 = vmatprep.mubr.bf16.mxu0 0
      %1413 = vmatmul.mubr.bf16.gmra.mxu0 %v1342
      %v1414 = vpop.f32.mrf.mxu0
      %v1415 = vadd.f32 %v1330, %v1414
      %v1416 = vpop.f32.mrf.mxu0
      %v1417 = vpop.f32.mrf.mxu0
      %v1418 = vadd.f32 %v1330, %v1417
      %v1419 = vpop.f32.mrf.mxu0
      %1420 = vmatprep.mubr.bf16.mxu0 0
      %1421 = vmatmul.mubr.bf16.gmra.mxu0 %v1345
      %v1422 = vpop.f32.mrf.mxu0
      %v1423 = vadd.f32 %v1330, %v1422
      %v1424 = vpop.f32.mrf.mxu0
      %v1425 = vpop.f32.mrf.mxu0
      %v1426 = vadd.f32 %v1330, %v1425
      %v1427 = vpop.f32.mrf.mxu0
      %1428 = vmatprep.mubr.bf16.mxu0 0
      %1429 = vmatmul.mubr.bf16.gmra.mxu0 %v1348
      %v1430 = vpop.f32.mrf.mxu0
      %v1431 = vadd.f32 %v1330, %v1430
      %v1432 = vpop.f32.mrf.mxu0
      %v1433 = vpop.f32.mrf.mxu0
      %v1434 = vadd.f32 %v1330, %v1433
      %v1435 = vpop.f32.mrf.mxu0
      %1436 = vmatprep.mubr.bf16.mxu0 0
      %1437 = vmatmul.mubr.bf16.gmra.mxu0 %v1351
      %v1438 = vpop.f32.mrf.mxu0
      %v1439 = vadd.f32 %v1330, %v1438
      %v1440 = vpop.f32.mrf.mxu0
      %v1441 = vpop.f32.mrf.mxu0
      %v1442 = vadd.f32 %v1330, %v1441
      %v1443 = vpop.f32.mrf.mxu0
      %1444 = vmatprep.mubr.bf16.mxu0 0
      %1445 = vmatmul.mubr.bf16.gmra.mxu0 %v1354
      %v1446 = vpop.f32.mrf.mxu0
      %v1447 = vadd.f32 %v1330, %v1446
      %v1448 = vpop.f32.mrf.mxu0
      %v1449 = vpop.f32.mrf.mxu0
      %v1450 = vadd.f32 %v1330, %v1449
      %v1451 = vpop.f32.mrf.mxu0
      %1452 = vdwg.mxu0
      %v1453 = vmul.f32 %v1295, %v1279
      %v1454 = vmul.f32 %v1296, %v1280
      %v1455 = vmul.f32 %v1297, %v1281
      %v1456 = vmul.f32 %v1298, %v1282
      %v1457 = vmul.f32 %v1299, %v1283
      %v1458 = vmul.f32 %v1300, %v1284
      %v1459 = vmul.f32 %v1301, %v1285
      %v1460 = vmul.f32 %v1302, %v1286
      %v1461 = vmul.f32 %v1303, %v1287
      %v1462 = vmul.f32 %v1304, %v1288
      %v1463 = vmul.f32 %v1305, %v1289
      %v1464 = vmul.f32 %v1306, %v1290
      %v1465 = vmul.f32 %v1307, %v1291
      %v1466 = vmul.f32 %v1308, %v1292
      %v1467 = vmul.f32 %v1309, %v1293
      %v1468 = vmul.f32 %v1310, %v1294
      %v1469 = vsel %vm373, %v1453, 0.0
      %1470 = vadd.xlane.f32.xlu0 %v1469
      %v1471 = vpop.xlane.xlu0 %1470
      %v1472 = vsel %vm373, %v1454, 0.0
      %1473 = vadd.xlane.f32.xlu0 %v1472
      %v1474 = vpop.xlane.xlu0 %1473
      %v1475 = vsel %vm373, %v1455, 0.0
      %1476 = vadd.xlane.f32.xlu0 %v1475
      %v1477 = vpop.xlane.xlu0 %1476
      %v1478 = vsel %vm373, %v1456, 0.0
      %1479 = vadd.xlane.f32.xlu0 %v1478
      %v1480 = vpop.xlane.xlu0 %1479
      %v1481 = vsel %vm373, %v1457, 0.0
      %1482 = vadd.xlane.f32.xlu0 %v1481
      %v1483 = vpop.xlane.xlu0 %1482
      %v1484 = vsel %vm373, %v1458, 0.0
      %1485 = vadd.xlane.f32.xlu0 %v1484
      %v1486 = vpop.xlane.xlu0 %1485
      %v1487 = vsel %vm373, %v1459, 0.0
      %1488 = vadd.xlane.f32.xlu0 %v1487
      %v1489 = vpop.xlane.xlu0 %1488
      %v1490 = vsel %vm373, %v1460, 0.0
      %1491 = vadd.xlane.f32.xlu0 %v1490
      %v1492 = vpop.xlane.xlu0 %1491
      %v1493 = vsel %vm373, %v1461, 0.0
      %1494 = vadd.xlane.f32.xlu0 %v1493
      %v1495 = vpop.xlane.xlu0 %1494
      %v1496 = vsel %vm373, %v1462, 0.0
      %1497 = vadd.xlane.f32.xlu0 %v1496
      %v1498 = vpop.xlane.xlu0 %1497
      %v1499 = vsel %vm373, %v1463, 0.0
      %1500 = vadd.xlane.f32.xlu0 %v1499
      %v1501 = vpop.xlane.xlu0 %1500
      %v1502 = vsel %vm373, %v1464, 0.0
      %1503 = vadd.xlane.f32.xlu0 %v1502
      %v1504 = vpop.xlane.xlu0 %1503
      %v1505 = vsel %vm373, %v1465, 0.0
      %1506 = vadd.xlane.f32.xlu0 %v1505
      %v1507 = vpop.xlane.xlu0 %1506
      %v1508 = vsel %vm373, %v1466, 0.0
      %1509 = vadd.xlane.f32.xlu0 %v1508
      %v1510 = vpop.xlane.xlu0 %1509
      %v1511 = vsel %vm373, %v1467, 0.0
      %1512 = vadd.xlane.f32.xlu0 %v1511
      %v1513 = vpop.xlane.xlu0 %1512
      %v1514 = vsel %vm373, %v1468, 0.0
      %1515 = vadd.xlane.f32.xlu0 %v1514
      %v1516 = vpop.xlane.xlu0 %1515
      %v1517 = vadd.f32 %v1391, %v1471
      %v1518 = vadd.f32 %v1394, %v1474
      %v1519 = vadd.f32 %v1399, %v1477
      %v1520 = vadd.f32 %v1402, %v1480
      %v1521 = vadd.f32 %v1407, %v1483
      %v1522 = vadd.f32 %v1410, %v1486
      %v1523 = vadd.f32 %v1415, %v1489
      %v1524 = vadd.f32 %v1418, %v1492
      %v1525 = vadd.f32 %v1423, %v1495
      %v1526 = vadd.f32 %v1426, %v1498
      %v1527 = vadd.f32 %v1431, %v1501
      %v1528 = vadd.f32 %v1434, %v1504
      %v1529 = vadd.f32 %v1439, %v1507
      %v1530 = vadd.f32 %v1442, %v1510
      %v1531 = vadd.f32 %v1447, %v1513
      %v1532 = vadd.f32 %v1450, %v1516
      %vm1533 = vcmask 64512
      %v1534 = vsel %vm1533, %v1517, -inf
      %1535 = vmax.xlane.f32.xlu0 %v1534
      %v1536 = vpop.xlane.xlu0 %1535
      %v1537 = vsel %vm1533, %v1518, -inf
      %1538 = vmax.xlane.f32.xlu0 %v1537
      %v1539 = vpop.xlane.xlu0 %1538
      %v1540 = vsel %vm1533, %v1519, -inf
      %1541 = vmax.xlane.f32.xlu0 %v1540
      %v1542 = vpop.xlane.xlu0 %1541
      %v1543 = vsel %vm1533, %v1520, -inf
      %1544 = vmax.xlane.f32.xlu0 %v1543
      %v1545 = vpop.xlane.xlu0 %1544
      %v1546 = vsel %vm1533, %v1521, -inf
      %1547 = vmax.xlane.f32.xlu0 %v1546
      %v1548 = vpop.xlane.xlu0 %1547
      %v1549 = vsel %vm1533, %v1522, -inf
      %1550 = vmax.xlane.f32.xlu0 %v1549
      %v1551 = vpop.xlane.xlu0 %1550
      %v1552 = vsel %vm1533, %v1523, -inf
      %1553 = vmax.xlane.f32.xlu0 %v1552
      %v1554 = vpop.xlane.xlu0 %1553
      %v1555 = vsel %vm1533, %v1524, -inf
      %1556 = vmax.xlane.f32.xlu0 %v1555
      %v1557 = vpop.xlane.xlu0 %1556
      %v1558 = vsel %vm1533, %v1525, -inf
      %1559 = vmax.xlane.f32.xlu0 %v1558
      %v1560 = vpop.xlane.xlu0 %1559
      %v1561 = vsel %vm1533, %v1526, -inf
      %1562 = vmax.xlane.f32.xlu0 %v1561
      %v1563 = vpop.xlane.xlu0 %1562
      %v1564 = vsel %vm1533, %v1527, -inf
      %1565 = vmax.xlane.f32.xlu0 %v1564
      %v1566 = vpop.xlane.xlu0 %1565
      %v1567 = vsel %vm1533, %v1528, -inf
      %1568 = vmax.xlane.f32.xlu0 %v1567
      %v1569 = vpop.xlane.xlu0 %1568
      %v1570 = vsel %vm1533, %v1529, -inf
      %1571 = vmax.xlane.f32.xlu0 %v1570
      %v1572 = vpop.xlane.xlu0 %1571
      %v1573 = vsel %vm1533, %v1530, -inf
      %1574 = vmax.xlane.f32.xlu0 %v1573
      %v1575 = vpop.xlane.xlu0 %1574
      %v1576 = vsel %vm1533, %v1531, -inf
      %1577 = vmax.xlane.f32.xlu0 %v1576
      %v1578 = vpop.xlane.xlu0 %1577
      %v1579 = vsel %vm1533, %v1532, -inf
      %1580 = vmax.xlane.f32.xlu0 %v1579
      %v1581 = vpop.xlane.xlu0 %1580
      %v1582 = vsub.f32 %v1517, %v1536
      %v1583 = vsub.f32 %v1518, %v1539
      %v1584 = vsub.f32 %v1519, %v1542
      %v1585 = vsub.f32 %v1520, %v1545
      %v1586 = vsub.f32 %v1521, %v1548
      %v1587 = vsub.f32 %v1522, %v1551
      %v1588 = vsub.f32 %v1523, %v1554
      %v1589 = vsub.f32 %v1524, %v1557
      %v1590 = vsub.f32 %v1525, %v1560
      %v1591 = vsub.f32 %v1526, %v1563
      %v1592 = vsub.f32 %v1527, %v1566
      %v1593 = vsub.f32 %v1528, %v1569
      %v1594 = vsub.f32 %v1529, %v1572
      %v1595 = vsub.f32 %v1530, %v1575
      %v1596 = vsub.f32 %v1531, %v1578
      %v1597 = vsub.f32 %v1532, %v1581
      %v1598 = vmul.f32 %v1582, 1.442695
      %v1599 = vpow.pop %v1598
      %v1600 = vmul.f32 %v1583, 1.442695
      %v1601 = vpow.pop %v1600
      %v1602 = vmul.f32 %v1584, 1.442695
      %v1603 = vpow.pop %v1602
      %v1604 = vmul.f32 %v1585, 1.442695
      %v1605 = vpow.pop %v1604
      %v1606 = vmul.f32 %v1586, 1.442695
      %v1607 = vpow.pop %v1606
      %v1608 = vmul.f32 %v1587, 1.442695
      %v1609 = vpow.pop %v1608
      %v1610 = vmul.f32 %v1588, 1.442695
      %v1611 = vpow.pop %v1610
      %v1612 = vmul.f32 %v1589, 1.442695
      %v1613 = vpow.pop %v1612
      %v1614 = vmul.f32 %v1590, 1.442695
      %v1615 = vpow.pop %v1614
      %v1616 = vmul.f32 %v1591, 1.442695
      %v1617 = vpow.pop %v1616
      %v1618 = vmul.f32 %v1592, 1.442695
      %v1619 = vpow.pop %v1618
      %v1620 = vmul.f32 %v1593, 1.442695
      %v1621 = vpow.pop %v1620
      %v1622 = vmul.f32 %v1594, 1.442695
      %v1623 = vpow.pop %v1622
      %v1624 = vmul.f32 %v1595, 1.442695
      %v1625 = vpow.pop %v1624
      %v1626 = vmul.f32 %v1596, 1.442695
      %v1627 = vpow.pop %v1626
      %v1628 = vmul.f32 %v1597, 1.442695
      %v1629 = vpow.pop %v1628
      %v1630 = vsel %vm1533, %v1599, 0.0
      %1631 = vadd.xlane.f32.xlu0 %v1630
      %v1632 = vpop.xlane.xlu0 %1631
      %v1633 = vsel %vm1533, %v1601, 0.0
      %1634 = vadd.xlane.f32.xlu0 %v1633
      %v1635 = vpop.xlane.xlu0 %1634
      %v1636 = vsel %vm1533, %v1603, 0.0
      %1637 = vadd.xlane.f32.xlu0 %v1636
      %v1638 = vpop.xlane.xlu0 %1637
      %v1639 = vsel %vm1533, %v1605, 0.0
      %1640 = vadd.xlane.f32.xlu0 %v1639
      %v1641 = vpop.xlane.xlu0 %1640
      %v1642 = vsel %vm1533, %v1607, 0.0
      %1643 = vadd.xlane.f32.xlu0 %v1642
      %v1644 = vpop.xlane.xlu0 %1643
      %v1645 = vsel %vm1533, %v1609, 0.0
      %1646 = vadd.xlane.f32.xlu0 %v1645
      %v1647 = vpop.xlane.xlu0 %1646
      %v1648 = vsel %vm1533, %v1611, 0.0
      %1649 = vadd.xlane.f32.xlu0 %v1648
      %v1650 = vpop.xlane.xlu0 %1649
      %v1651 = vsel %vm1533, %v1613, 0.0
      %1652 = vadd.xlane.f32.xlu0 %v1651
      %v1653 = vpop.xlane.xlu0 %1652
      %v1654 = vsel %vm1533, %v1615, 0.0
      %1655 = vadd.xlane.f32.xlu0 %v1654
      %v1656 = vpop.xlane.xlu0 %1655
      %v1657 = vsel %vm1533, %v1617, 0.0
      %1658 = vadd.xlane.f32.xlu0 %v1657
      %v1659 = vpop.xlane.xlu0 %1658
      %v1660 = vsel %vm1533, %v1619, 0.0
      %1661 = vadd.xlane.f32.xlu0 %v1660
      %v1662 = vpop.xlane.xlu0 %1661
      %v1663 = vsel %vm1533, %v1621, 0.0
      %1664 = vadd.xlane.f32.xlu0 %v1663
      %v1665 = vpop.xlane.xlu0 %1664
      %v1666 = vsel %vm1533, %v1623, 0.0
      %1667 = vadd.xlane.f32.xlu0 %v1666
      %v1668 = vpop.xlane.xlu0 %1667
      %v1669 = vsel %vm1533, %v1625, 0.0
      %1670 = vadd.xlane.f32.xlu0 %v1669
      %v1671 = vpop.xlane.xlu0 %1670
      %v1672 = vsel %vm1533, %v1627, 0.0
      %1673 = vadd.xlane.f32.xlu0 %v1672
      %v1674 = vpop.xlane.xlu0 %1673
      %v1675 = vsel %vm1533, %v1629, 0.0
      %1676 = vadd.xlane.f32.xlu0 %v1675
      %v1677 = vpop.xlane.xlu0 %1676
      %v1678 = vlog2.pop %v1632
      %v1679 = vmul.f32 %v1678, 0.6931472
      %v1680 = vlog2.pop %v1635
      %v1681 = vmul.f32 %v1680, 0.6931472
      %v1682 = vlog2.pop %v1638
      %v1683 = vmul.f32 %v1682, 0.6931472
      %v1684 = vlog2.pop %v1641
      %v1685 = vmul.f32 %v1684, 0.6931472
      %v1686 = vlog2.pop %v1644
      %v1687 = vmul.f32 %v1686, 0.6931472
      %v1688 = vlog2.pop %v1647
      %v1689 = vmul.f32 %v1688, 0.6931472
      %v1690 = vlog2.pop %v1650
      %v1691 = vmul.f32 %v1690, 0.6931472
      %v1692 = vlog2.pop %v1653
      %v1693 = vmul.f32 %v1692, 0.6931472
      %v1694 = vlog2.pop %v1656
      %v1695 = vmul.f32 %v1694, 0.6931472
      %v1696 = vlog2.pop %v1659
      %v1697 = vmul.f32 %v1696, 0.6931472
      %v1698 = vlog2.pop %v1662
      %v1699 = vmul.f32 %v1698, 0.6931472
      %v1700 = vlog2.pop %v1665
      %v1701 = vmul.f32 %v1700, 0.6931472
      %v1702 = vlog2.pop %v1668
      %v1703 = vmul.f32 %v1702, 0.6931472
      %v1704 = vlog2.pop %v1671
      %v1705 = vmul.f32 %v1704, 0.6931472
      %v1706 = vlog2.pop %v1674
      %v1707 = vmul.f32 %v1706, 0.6931472
      %v1708 = vlog2.pop %v1677
      %v1709 = vmul.f32 %v1708, 0.6931472
      %v1710 = vsub.f32 %v1582, %v1679
      %v1711 = vsub.f32 %v1583, %v1681
      %v1712 = vsub.f32 %v1584, %v1683
      %v1713 = vsub.f32 %v1585, %v1685
      %v1714 = vsub.f32 %v1586, %v1687
      %v1715 = vsub.f32 %v1587, %v1689
      %v1716 = vsub.f32 %v1588, %v1691
      %v1717 = vsub.f32 %v1589, %v1693
      %v1718 = vsub.f32 %v1590, %v1695
      %v1719 = vsub.f32 %v1591, %v1697
      %v1720 = vsub.f32 %v1592, %v1699
      %v1721 = vsub.f32 %v1593, %v1701
      %v1722 = vsub.f32 %v1594, %v1703
      %v1723 = vsub.f32 %v1595, %v1705
      %v1724 = vsub.f32 %v1596, %v1707
      %v1725 = vsub.f32 %v1597, %v1709
      %v1726 = vld [vmem:[%s318] sm:$0xff]
      %v1727 = vld [vmem:[%s318 + $0x8] sm:$0xff]
      %v1728 = vld [vmem:[%s318 + $0x10] sm:$0xff]
      %v1729 = vld [vmem:[%s318 + $0x18] sm:$0xff]
      %v1730 = vld [vmem:[%s318 + $0x20] sm:$0xff]
      %v1731 = vld [vmem:[%s318 + $0x28] sm:$0xff]
      %v1732 = vld [vmem:[%s318 + $0x30] sm:$0xff]
      %v1733 = vld [vmem:[%s318 + $0x38] sm:$0xff]
      %v1734 = vld [vmem:[%s318 + $0x40] sm:$0xff]
      %v1735 = vld [vmem:[%s318 + $0x48] sm:$0xff]
      %v1736 = vld [vmem:[%s318 + $0x50] sm:$0xff]
      %v1737 = vld [vmem:[%s318 + $0x58] sm:$0xff]
      %v1738 = vld [vmem:[%s318 + $0x60] sm:$0xff]
      %v1739 = vld [vmem:[%s318 + $0x68] sm:$0xff]
      %v1740 = vld [vmem:[%s318 + $0x70] sm:$0xff]
      %v1741 = vld [vmem:[%s318 + $0x78] sm:$0xff]
      %1742 = vset.pattern.permute.xlu0 0
      %1743 = vperm.xlu0 %1742, %v1726
      %v1744 = vpop.permute.xlu0 %1743
      %1745 = vset.pattern.permute.xlu0 0
      %1746 = vperm.xlu0 %1745, %v1727
      %v1747 = vpop.permute.xlu0 %1746
      %1748 = vset.pattern.permute.xlu0 0
      %1749 = vperm.xlu0 %1748, %v1728
      %v1750 = vpop.permute.xlu0 %1749
      %1751 = vset.pattern.permute.xlu0 0
      %1752 = vperm.xlu0 %1751, %v1729
      %v1753 = vpop.permute.xlu0 %1752
      %1754 = vset.pattern.permute.xlu0 0
      %1755 = vperm.xlu0 %1754, %v1730
      %v1756 = vpop.permute.xlu0 %1755
      %1757 = vset.pattern.permute.xlu0 0
      %1758 = vperm.xlu0 %1757, %v1731
      %v1759 = vpop.permute.xlu0 %1758
      %1760 = vset.pattern.permute.xlu0 0
      %1761 = vperm.xlu0 %1760, %v1732
      %v1762 = vpop.permute.xlu0 %1761
      %1763 = vset.pattern.permute.xlu0 0
      %1764 = vperm.xlu0 %1763, %v1733
      %v1765 = vpop.permute.xlu0 %1764
      %1766 = vset.pattern.permute.xlu0 0
      %1767 = vperm.xlu0 %1766, %v1734
      %v1768 = vpop.permute.xlu0 %1767
      %1769 = vset.pattern.permute.xlu0 0
      %1770 = vperm.xlu0 %1769, %v1735
      %v1771 = vpop.permute.xlu0 %1770
      %1772 = vset.pattern.permute.xlu0 0
      %1773 = vperm.xlu0 %1772, %v1736
      %v1774 = vpop.permute.xlu0 %1773
      %1775 = vset.pattern.permute.xlu0 0
      %1776 = vperm.xlu0 %1775, %v1737
      %v1777 = vpop.permute.xlu0 %1776
      %1778 = vset.pattern.permute.xlu0 0
      %1779 = vperm.xlu0 %1778, %v1738
      %v1780 = vpop.permute.xlu0 %1779
      %1781 = vset.pattern.permute.xlu0 0
      %1782 = vperm.xlu0 %1781, %v1739
      %v1783 = vpop.permute.xlu0 %1782
      %1784 = vset.pattern.permute.xlu0 0
      %1785 = vperm.xlu0 %1784, %v1740
      %v1786 = vpop.permute.xlu0 %1785
      %1787 = vset.pattern.permute.xlu0 0
      %1788 = vperm.xlu0 %1787, %v1741
      %v1789 = vpop.permute.xlu0 %1788
      %vm1790 = vcmp.eq.s32.totalorder %v466, %v1744
      %vm1791 = vcmp.eq.s32.totalorder %v466, %v1747
      %vm1792 = vcmp.eq.s32.totalorder %v466, %v1750
      %vm1793 = vcmp.eq.s32.totalorder %v466, %v1753
      %vm1794 = vcmp.eq.s32.totalorder %v466, %v1756
      %vm1795 = vcmp.eq.s32.totalorder %v466, %v1759
      %vm1796 = vcmp.eq.s32.totalorder %v466, %v1762
      %vm1797 = vcmp.eq.s32.totalorder %v466, %v1765
      %vm1798 = vcmp.eq.s32.totalorder %v466, %v1768
      %vm1799 = vcmp.eq.s32.totalorder %v466, %v1771
      %vm1800 = vcmp.eq.s32.totalorder %v466, %v1774
      %vm1801 = vcmp.eq.s32.totalorder %v466, %v1777
      %vm1802 = vcmp.eq.s32.totalorder %v466, %v1780
      %vm1803 = vcmp.eq.s32.totalorder %v466, %v1783
      %vm1804 = vcmp.eq.s32.totalorder %v466, %v1786
      %vm1805 = vcmp.eq.s32.totalorder %v466, %v1789
      %v1806 = vsel %vm1790, %v1710, 0.0
      %v1807 = vsel %vm1791, %v1711, 0.0
      %v1808 = vsel %vm1792, %v1712, 0.0
      %v1809 = vsel %vm1793, %v1713, 0.0
      %v1810 = vsel %vm1794, %v1714, 0.0
      %v1811 = vsel %vm1795, %v1715, 0.0
      %v1812 = vsel %vm1796, %v1716, 0.0
      %v1813 = vsel %vm1797, %v1717, 0.0
      %v1814 = vsel %vm1798, %v1718, 0.0
      %v1815 = vsel %vm1799, %v1719, 0.0
      %v1816 = vsel %vm1800, %v1720, 0.0
      %v1817 = vsel %vm1801, %v1721, 0.0
      %v1818 = vsel %vm1802, %v1722, 0.0
      %v1819 = vsel %vm1803, %v1723, 0.0
      %v1820 = vsel %vm1804, %v1724, 0.0
      %v1821 = vsel %vm1805, %v1725, 0.0
      %v1822 = vsel %vm1533, %v1806, 0.0
      %1823 = vadd.xlane.f32.xlu0 %v1822
      %v1824 = vpop.xlane.xlu0 %1823
      %v1825 = vsel %vm1533, %v1807, 0.0
      %1826 = vadd.xlane.f32.xlu0 %v1825
      %v1827 = vpop.xlane.xlu0 %1826
      %v1828 = vsel %vm1533, %v1808, 0.0
      %1829 = vadd.xlane.f32.xlu0 %v1828
      %v1830 = vpop.xlane.xlu0 %1829
      %v1831 = vsel %vm1533, %v1809, 0.0
      %1832 = vadd.xlane.f32.xlu0 %v1831
      %v1833 = vpop.xlane.xlu0 %1832
      %v1834 = vsel %vm1533, %v1810, 0.0
      %1835 = vadd.xlane.f32.xlu0 %v1834
      %v1836 = vpop.xlane.xlu0 %1835
      %v1837 = vsel %vm1533, %v1811, 0.0
      %1838 = vadd.xlane.f32.xlu0 %v1837
      %v1839 = vpop.xlane.xlu0 %1838
      %v1840 = vsel %vm1533, %v1812, 0.0
      %1841 = vadd.xlane.f32.xlu0 %v1840
      %v1842 = vpop.xlane.xlu0 %1841
      %v1843 = vsel %vm1533, %v1813, 0.0
      %1844 = vadd.xlane.f32.xlu0 %v1843
      %v1845 = vpop.xlane.xlu0 %1844
      %v1846 = vsel %vm1533, %v1814, 0.0
      %1847 = vadd.xlane.f32.xlu0 %v1846
      %v1848 = vpop.xlane.xlu0 %1847
      %v1849 = vsel %vm1533, %v1815, 0.0
      %1850 = vadd.xlane.f32.xlu0 %v1849
      %v1851 = vpop.xlane.xlu0 %1850
      %v1852 = vsel %vm1533, %v1816, 0.0
      %1853 = vadd.xlane.f32.xlu0 %v1852
      %v1854 = vpop.xlane.xlu0 %1853
      %v1855 = vsel %vm1533, %v1817, 0.0
      %1856 = vadd.xlane.f32.xlu0 %v1855
      %v1857 = vpop.xlane.xlu0 %1856
      %v1858 = vsel %vm1533, %v1818, 0.0
      %1859 = vadd.xlane.f32.xlu0 %v1858
      %v1860 = vpop.xlane.xlu0 %1859
      %v1861 = vsel %vm1533, %v1819, 0.0
      %1862 = vadd.xlane.f32.xlu0 %v1861
      %v1863 = vpop.xlane.xlu0 %1862
      %v1864 = vsel %vm1533, %v1820, 0.0
      %1865 = vadd.xlane.f32.xlu0 %v1864
      %v1866 = vpop.xlane.xlu0 %1865
      %v1867 = vsel %vm1533, %v1821, 0.0
      %1868 = vadd.xlane.f32.xlu0 %v1867
      %v1869 = vpop.xlane.xlu0 %1868
      %v1886 = vlaneseq
      %v1887 = vshrl.u32 %v1886, 7
      %v1888 = vsub.s32 %v466, %v1887
      %v1889 = vrot.slane %v1824, %v1888
      %v1890 = vlaneseq
      %v1891 = vshrl.u32 %v1890, 7
      %v1892 = vsub.s32 %v466, %v1891
      %v1893 = vrot.slane %v1827, %v1892
      %v1894 = vlaneseq
      %v1895 = vshrl.u32 %v1894, 7
      %v1896 = vsub.s32 %v466, %v1895
      %v1897 = vrot.slane %v1830, %v1896
      %v1898 = vlaneseq
      %v1899 = vshrl.u32 %v1898, 7
      %v1900 = vsub.s32 %v466, %v1899
      %v1901 = vrot.slane %v1833, %v1900
      %v1902 = vlaneseq
      %v1903 = vshrl.u32 %v1902, 7
      %v1904 = vsub.s32 %v466, %v1903
      %v1905 = vrot.slane %v1836, %v1904
      %v1906 = vlaneseq
      %v1907 = vshrl.u32 %v1906, 7
      %v1908 = vsub.s32 %v466, %v1907
      %v1909 = vrot.slane %v1839, %v1908
      %v1910 = vlaneseq
      %v1911 = vshrl.u32 %v1910, 7
      %v1912 = vsub.s32 %v466, %v1911
      %v1913 = vrot.slane %v1842, %v1912
      %v1914 = vlaneseq
      %v1915 = vshrl.u32 %v1914, 7
      %v1916 = vsub.s32 %v466, %v1915
      %v1917 = vrot.slane %v1845, %v1916
      %v1918 = vlaneseq
      %v1919 = vshrl.u32 %v1918, 7
      %v1920 = vsub.s32 %v466, %v1919
      %v1921 = vrot.slane %v1848, %v1920
      %v1922 = vlaneseq
      %v1923 = vshrl.u32 %v1922, 7
      %v1924 = vsub.s32 %v466, %v1923
      %v1925 = vrot.slane %v1851, %v1924
      %v1926 = vlaneseq
      %v1927 = vshrl.u32 %v1926, 7
      %v1928 = vsub.s32 %v466, %v1927
      %v1929 = vrot.slane %v1854, %v1928
      %v1930 = vlaneseq
      %v1931 = vshrl.u32 %v1930, 7
      %v1932 = vsub.s32 %v466, %v1931
      %v1933 = vrot.slane %v1857, %v1932
      %v1934 = vlaneseq
      %v1935 = vshrl.u32 %v1934, 7
      %v1936 = vsub.s32 %v466, %v1935
      %v1937 = vrot.slane %v1860, %v1936
      %v1938 = vlaneseq
      %v1939 = vshrl.u32 %v1938, 7
      %v1940 = vsub.s32 %v466, %v1939
      %v1941 = vrot.slane %v1863, %v1940
      %v1942 = vlaneseq
      %v1943 = vshrl.u32 %v1942, 7
      %v1944 = vsub.s32 %v466, %v1943
      %v1945 = vrot.slane %v1866, %v1944
      %v1946 = vlaneseq
      %v1947 = vshrl.u32 %v1946, 7
      %v1948 = vsub.s32 %v466, %v1947
      %v1949 = vrot.slane %v1869, %v1948
      %vm1950 = vcmask 1041409
      %v1951 = vsel %vm1950, %v1893, %v1889
      %vm1952 = vcmask 1042434
      %v1953 = vsel %vm1952, %v1897, %v1951
      %vm1954 = vcmask 1043459
      %v1955 = vsel %vm1954, %v1901, %v1953
      %vm1956 = vcmask 1044484
      %v1957 = vsel %vm1956, %v1905, %v1955
      %vm1958 = vcmask 1045509
      %v1959 = vsel %vm1958, %v1909, %v1957
      %vm1960 = vcmask 1046534
      %v1961 = vsel %vm1960, %v1913, %v1959
      %vm1962 = vcmask 1047559
      %v1963 = vsel %vm1962, %v1917, %v1961
      %v1964 = vsel %vm1950, %v1925, %v1921
      %v1965 = vsel %vm1952, %v1929, %v1964
      %v1966 = vsel %vm1954, %v1933, %v1965
      %v1967 = vsel %vm1956, %v1937, %v1966
      %v1968 = vsel %vm1958, %v1941, %v1967
      %v1969 = vsel %vm1960, %v1945, %v1968
      %v1970 = vsel %vm1962, %v1949, %v1969
      %1973 = vst.msk [vmem:[%s324] sm:$0xff] %vm1533, %v1963
      %1974 = vst.msk [vmem:[%s324 + $0x8] sm:$0xff] %vm1533, %v1970
      %s1975 = smul.u32 2, %s18
      %p1976 = scmp.lt.s32.totalorder %s1975, 7
      %s1977 = scalar_select %p1976, %s1975, 7
      %s1978 = smul.addr %s1977, 8
      %s1979 = scalar_lea.vmem %s7, %s1978
      // Predicated region
      $region49: #{multire_apply.1} parent=47 // pred_check
        %p1980 = pneg %p198
      $region50: #{multire_apply.1} parent=47 // pred_check_branch
        %1982 = sbr.rel (%p1980) target = $region52
      $region51: #{multire_apply.1} parent=47 // pred_region
        %s1983 = smul.u32 2, %s18
      $region52: #{multire_apply.1} parent=47 // pred_fallthru
        _
    $region48: #{multire_apply.1} parent=5 // pred_fallthru
      _
    %p1984 = scmp.le.s32.totalorder 2, %s13
    // Predicated region
    $region53: #{multire_apply.1} parent=5 // pred_check
      %p1985 = pneg %p1984
    $region54: #{multire_apply.1} parent=5 // pred_check_branch
      %1987 = sbr.rel (%p1985) target = $region56
    $region55: #{multire_apply.1} parent=5 // pred_region
      %s1988 = ssub.s32 %s13, 2
      // Predicated region
      $region57: #{multire_apply.1} parent=55 // pred_check
        %p1989 = pneg %p204
      $region58: #{multire_apply.1} parent=55 // pred_check_branch
        %1991 = sbr.rel (%p1989) target = $region60
      $region59: #{multire_apply.1} parent=55 // pred_region
        %s1992 = smul.u32 2, %s19
        %p1993 = scmp.lt.s32.totalorder %s1992, 7
        %s1994 = scalar_select %p1993, %s1992, 7
        %s1995 = smul.addr %s1994, 8
        %s1996 = scalar_lea.vmem %s7, %s1995
      $region60: #{multire_apply.1} parent=55 // pred_fallthru
        _
    $region56: #{multire_apply.1} parent=5 // pred_fallthru
      _
  $region6: #{multire_apply.1} parent=0 // loop_footer
    %s17 = sadd.s32 1, %s13
  $region7: #{multire_apply.1} parent=0 // loop_footer_branch
    %12 = sbr.rel target = $region3
  $region8: #{multire_apply.1} parent=0 // loop_exit
    _

</llo_original>
